<compile_context>
chip_gen: v7x
topology: tpu7x:2x2x1
jax: 0.10.0
libtpu: 0.0.40
codegen_flags: <defaults>
</compile_context>

<pallas_src>
import functools

import jax
import jax.numpy as jnp
from jax.experimental import pallas as pl
from jax.experimental.pallas import tpu as pltpu

INITRANGE = 0.04

# ---- model hyper-parameters (ninp == nhid == nhidlast, as asserted by the module) ----
NTOKEN = 64
NHID = 64
H = NHID
STEPS = 4
# arch[2*i] = predecessor state index, arch[2*i+1] = activation id
# activations: 0 = tanh, 1 = relu, 2 = sigmoid, 3 = identity
ARCH = (0, 0,
        0, 1,
        1, 2,
        2, 3)

T = 8              # sequence length
B = 8              # batch size
N = T * B


def _activation(op_id, x):
    if op_id == 0:
        return jnp.tanh(x)
    elif op_id == 1:
        return jax.nn.relu(x)
    elif op_id == 2:
        return jax.nn.sigmoid(x)
    elif op_id == 3:
        return x
    raise NotImplementedError


# -------------------------------------------------------------------------------------
# Static step-grouping plan: group ARCH steps that consume the SAME predecessor state
# so their (H, 2H) weights can be packed column-wise into one wide MXU push.
# For ARCH above: groups = ((0, 1), (2,), (3,)).
# -------------------------------------------------------------------------------------
def _build_groups(arch, steps):
    preds = tuple(arch[2 * i] for i in range(steps))
    groups = []
    used = [False] * steps
    for i in range(steps):
        if used[i]:
            continue
        grp = [i]
        used[i] = True
        for j in range(i + 1, steps):
            if not used[j] and preds[j] == preds[i]:
                grp.append(j)
                used[j] = True
        groups.append(tuple(grp))
    # Legality: when a group runs, its predecessor state must already exist.
    computed = {0}
    for grp in groups:
        assert preds[grp[0]] in computed, "illegal step grouping for this ARCH"
        computed.update(i + 1 for i in grp)
    return tuple(groups), preds


GROUPS, PREDS = _build_groups(ARCH, STEPS)
_offs, _o = [], 0
for _g in GROUPS:
    _offs.append(_o)
    _o += 2 * H * len(_g)          # each group slab is 2H*len columns (multiple of 128)
GROUP_OFFS = tuple(_offs)
WS_PACKED_COLS = _o


def pack_step_weights(ws):
    """ws: (STEPS, H, 2H) -> (H, sum 2H*len(g)) slab; per group, columns ordered
    [c_{i1} | c_{i2} | ... | h_{i1} | h_{i2} | ...] matching GROUPS."""
    slabs = []
    for grp in GROUPS:
        cols = [ws[i, :, :H] for i in grp] + [ws[i, :, H:] for i in grp]
        slabs.append(jnp.concatenate(cols, axis=1))
    return jnp.concatenate(slabs, axis=1)


# =====================================================================================
# Single fused kernel: gather + recurrence + per-timestep decoder + log_softmax.
# No grid: everything (~200 KB of weights + activations) is resident in VMEM/vregs.
# =====================================================================================
def fused_rnn_kernel(tok_ref, h0_ref, enc_ref, encT_ref, w0_ref, ws_ref,
                     bias_ref, logp_ref, newh_ref):
    # --- 1. embedding lookup fused in-kernel as a one-hot bf16 MXU matmul ---
    tok = tok_ref[...]                                                   # (N, 1) int32
    vocab_iota = jax.lax.broadcasted_iota(jnp.int32, (N, NTOKEN), 1)
    onehot = jnp.where(vocab_iota == tok, 1.0, 0.0).astype(jnp.bfloat16)  # (N, V)
    emb = jnp.dot(onehot, enc_ref[...],
                  preferred_element_type=jnp.float32)                    # (N, H) f32

    bias = bias_ref[...]                                                 # (1, V) f32

    # --- 2. NAOCell recurrence, fully unrolled over T, decoder fused per timestep ---
    h = h0_ref[...].astype(jnp.float32)                                  # (B, H)
    for t in range(T):                                                   # static unroll
        x = emb[t * B:(t + 1) * B, :]                                    # (B, H) static slice
        xh = jnp.concatenate([x, h], axis=-1).astype(jnp.bfloat16)       # (B, 2H) lane-concat
        # _compute_init_state: ONE full-width MXU push, split result at lane 64.
        ch0 = jnp.dot(xh, w0_ref[...], preferred_element_type=jnp.float32)   # (B, 2H)
        c0 = jax.nn.sigmoid(ch0[:, :H])
        h0s = jnp.tanh(ch0[:, H:])
        s0 = h + c0 * (h0s - h)

        states = [None] * (STEPS + 1)
        states[0] = s0
        for grp, off in zip(GROUPS, GROUP_OFFS):
            n = len(grp)
            sp = states[PREDS[grp[0]]]
            w = ws_ref[:, off:off + 2 * H * n]                           # lane-aligned slice
            ch = jnp.dot(sp.astype(jnp.bfloat16), w,
                         preferred_element_type=jnp.float32)             # (B, 2H*n), 1 push
            c_all = jax.nn.sigmoid(ch[:, :H * n])                        # all c gates at once
            for j, si in enumerate(grp):
                c = c_all[:, j * H:(j + 1) * H]
                hh = _activation(ARCH[2 * si + 1],
                                 ch[:, (n + j) * H:(n + j + 1) * H])
                states[si + 1] = sp + c * (hh - sp)

        out = states[1]
        for i in range(2, STEPS + 1):
            out = out + states[i]
        out = out * (1.0 / STEPS)                                        # mean(states[1..STEPS])
        h = out

        # --- 3. tied decoder + log_softmax for this timestep (hides under recurrence) ---
        logits = jnp.dot(out.astype(jnp.bfloat16), encT_ref[...],
                         preferred_element_type=jnp.float32) + bias      # (B, V)
        m = jnp.max(logits, axis=-1, keepdims=True)
        z = logits - m
        lse = jnp.log(jnp.sum(jnp.exp(z), axis=-1, keepdims=True))
        logp_ref[t * B:(t + 1) * B, :] = (z - lse).astype(logp_ref.dtype)

    newh_ref[...] = h.astype(newh_ref.dtype)


_VMEM = functools.partial(pl.BlockSpec, memory_space=pltpu.MemorySpace.VMEM)


@jax.jit
def rnn_model_forward(tokens, h0, enc_bf16, encT_bf16, w0_bf16, ws_packed_bf16, dec_bias2):
    # tokens: (T, B) int32; h0: (1, B, NHID) f32
    Tn, Bn = tokens.shape
    tok_flat = tokens.reshape(Tn * Bn, 1).astype(jnp.int32)
    log_prob, new_h = pl.pallas_call(
        fused_rnn_kernel,
        out_shape=(jax.ShapeDtypeStruct((Tn * Bn, NTOKEN), jnp.float32),   # log-probs
                   jax.ShapeDtypeStruct((Bn, NHID), jnp.float32)),         # final hidden
        in_specs=[_VMEM() for _ in range(7)],
        out_specs=(_VMEM(), _VMEM()),
    )(tok_flat, h0.reshape(Bn, NHID), enc_bf16, encT_bf16, w0_bf16,
      ws_packed_bf16, dec_bias2)
    model_output = log_prob.reshape(Tn, Bn, NTOKEN)
    return model_output, new_h[None]


# =====================================================================================
# Parameter init (matches module init_weights) + pure-JAX f32 reference for validation.
# =====================================================================================
def init_params(key):
    k_enc, k_w0, k_ws = jax.random.split(key, 3)
    enc_weight = jax.random.uniform(k_enc, (NTOKEN, NHID), jnp.float32,
                                    minval=-INITRANGE, maxval=INITRANGE)
    w0 = jax.random.uniform(k_w0, (2 * NHID, 2 * NHID), jnp.float32,
                            minval=-INITRANGE, maxval=INITRANGE)
    ws = jax.random.uniform(k_ws, (STEPS, NHID, 2 * NHID), jnp.float32,
                            minval=-INITRANGE, maxval=INITRANGE)
    dec_bias = jnp.zeros((NTOKEN,), jnp.float32)
    return enc_weight, w0, ws, dec_bias


def reference_forward(tokens, h0, enc_weight, w0, ws, dec_bias):
    emb = jnp.take(enc_weight, tokens, axis=0)                   # (T, B, H)
    h = h0[0]
    hids = []
    for t in range(tokens.shape[0]):
        x = emb[t]
        ch = jnp.concatenate([x, h], axis=-1) @ w0
        c0 = jax.nn.sigmoid(ch[:, :NHID])
        hh0 = jnp.tanh(ch[:, NHID:])
        s0 = h + c0 * (hh0 - h)
        states = [s0]
        for i in range(STEPS):
            pred, act = ARCH[2 * i], ARCH[2 * i + 1]
            sp = states[pred]
            ch = sp @ ws[i]
            c = jax.nn.sigmoid(ch[:, :NHID])
            hh = _activation(act, ch[:, NHID:])
            states.append(sp + c * (hh - sp))
        out = sum(states[1:]) / STEPS
        h = out
        hids.append(out)
    hid = jnp.stack(hids)                                        # (T, B, H)
    logits = hid.reshape(-1, NHID) @ enc_weight.T + dec_bias
    logp = jax.nn.log_softmax(logits, axis=-1)
    return logp.reshape(tokens.shape[0], tokens.shape[1], NTOKEN), h[None]


if __name__ == "__main__":
    key = jax.random.PRNGKey(0)
    k_params, k_tok = jax.random.split(key)
    enc_weight, w0, ws, dec_bias = init_params(k_params)

    # Weight prep once, outside jit:
    #  * full W0 and column-packed same-LHS step weights (one MXU push per gate pair)
    #  * matmul operands cast to bf16 (accumulation stays f32 inside the kernel)
    #  * enc as (V,H) for the one-hot gather and pre-transposed (H,V) for the decoder.
    enc_bf16 = enc_weight.astype(jnp.bfloat16)
    encT_bf16 = enc_weight.T.astype(jnp.bfloat16)
    w0_bf16 = w0.astype(jnp.bfloat16)
    ws_packed_bf16 = pack_step_weights(ws).astype(jnp.bfloat16)
    assert ws_packed_bf16.shape == (H, WS_PACKED_COLS)
    dec_bias2 = dec_bias.reshape(1, NTOKEN)

    tokens = jax.random.randint(k_tok, (T, B), 0, NTOKEN, dtype=jnp.int32)
    h0 = jnp.zeros((1, B, NHID), jnp.float32)    # init_hidden(bsz)

    model_output, new_hidden = rnn_model_forward(
        tokens, h0, enc_bf16, encT_bf16, w0_bf16, ws_packed_bf16, dec_bias2)
    jax.block_until_ready((model_output, new_hidden))

    assert model_output.shape == (T, B, NTOKEN)
    assert new_hidden.shape == (1, B, NHID)
    # log_softmax sanity: rows sum to 1 in prob space
    s = jnp.exp(model_output).sum(-1)
    assert jnp.allclose(s, 1.0, atol=1e-4)

    # Pure-JAX f32 reference check (tolerances absorb the bf16 MXU operand rounding).
    ref_out, ref_h = reference_forward(tokens, h0, enc_weight, w0, ws, dec_bias)
    assert jnp.allclose(model_output, ref_out, atol=2e-2), \
        float(jnp.max(jnp.abs(model_output - ref_out)))
    assert jnp.allclose(new_hidden, ref_h, atol=1e-2), \
        float(jnp.max(jnp.abs(new_hidden - ref_h)))

    print("KERNEL_OK")
</pallas_src>

<mosaic_0001>
module attributes {stable_mosaic.version = 11 : i64} {
  func.func @fused_rnn_kernel(%arg0: memref<64x1xi32, #tpu.memory_space<vmem>>, %arg1: memref<8x64xf32, #tpu.memory_space<vmem>>, %arg2: memref<64x64xbf16, #tpu.memory_space<vmem>>, %arg3: memref<64x64xbf16, #tpu.memory_space<vmem>>, %arg4: memref<128x128xbf16, #tpu.memory_space<vmem>>, %arg5: memref<64x512xbf16, #tpu.memory_space<vmem>>, %arg6: memref<1x64xf32, #tpu.memory_space<vmem>>, %arg7: memref<64x64xf32, #tpu.memory_space<vmem>>, %arg8: memref<8x64xf32, #tpu.memory_space<vmem>>) attributes {dimension_semantics = [], scalar_prefetch = 0 : i64, scratch_operands = 0 : i64, tpu.core_type = #tpu.core_type<tc>} {
    %c0 = arith.constant 0 : index
    %c0_0 = arith.constant 0 : index
    %0 = vector.load %arg0[%c0, %c0_0] : memref<64x1xi32, #tpu.memory_space<vmem>>, vector<64x1xi32>
    %1 = tpu.iota {dimensions = array<i32: 1>} : vector<64x64xi32>
    %2 = vector.broadcast %0 : vector<64x1xi32> to vector<64x64xi32>
    %3 = arith.cmpi eq, %1, %2 : vector<64x64xi32>
    %cst = arith.constant 1.000000e+00 : f32
    %cst_1 = arith.constant 0.000000e+00 : f32
    %4 = vector.broadcast %cst : f32 to vector<64x64xf32>
    %5 = vector.broadcast %cst_1 : f32 to vector<64x64xf32>
    %6 = arith.select %3, %4, %5 : vector<64x64xi1>, vector<64x64xf32>
    %7 = arith.truncf %6 : vector<64x64xf32> to vector<64x64xbf16>
    %c0_2 = arith.constant 0 : index
    %c0_3 = arith.constant 0 : index
    %8 = vector.load %arg2[%c0_2, %c0_3] : memref<64x64xbf16, #tpu.memory_space<vmem>>, vector<64x64xbf16>
    %cst_4 = arith.constant dense<0.000000e+00> : vector<64x64xf32>
    %9 = tpu.matmul %7, %8, %cst_4 {dimension_numbers = #tpu.dot_dimension_numbers<[1], [0], [0], [1], [0, 0, 1, 1], [], []>} : vector<64x64xbf16>, vector<64x64xbf16>, vector<64x64xf32> -> vector<64x64xf32>
    %c0_5 = arith.constant 0 : index
    %c0_6 = arith.constant 0 : index
    %10 = vector.load %arg6[%c0_5, %c0_6] : memref<1x64xf32, #tpu.memory_space<vmem>>, vector<1x64xf32>
    %c0_7 = arith.constant 0 : index
    %c0_8 = arith.constant 0 : index
    %11 = vector.load %arg1[%c0_7, %c0_8] : memref<8x64xf32, #tpu.memory_space<vmem>>, vector<8x64xf32>
    %12 = vector.extract_strided_slice %9 {offsets = [0, 0], sizes = [8, 64], strides = [1, 1]} : vector<64x64xf32> to vector<8x64xf32>
    %13 = tpu.concatenate %12, %11 in 1 : vector<8x64xf32>, vector<8x64xf32> -> vector<8x128xf32>
    %14 = arith.truncf %13 : vector<8x128xf32> to vector<8x128xbf16>
    %c0_9 = arith.constant 0 : index
    %c0_10 = arith.constant 0 : index
    %15 = vector.load %arg4[%c0_9, %c0_10] : memref<128x128xbf16, #tpu.memory_space<vmem>>, vector<128x128xbf16>
    %cst_11 = arith.constant dense<0.000000e+00> : vector<8x128xf32>
    %16 = tpu.matmul %14, %15, %cst_11 {dimension_numbers = #tpu.dot_dimension_numbers<[1], [0], [0], [1], [0, 0, 1, 1], [], []>} : vector<8x128xbf16>, vector<128x128xbf16>, vector<8x128xf32> -> vector<8x128xf32>
    %17 = vector.extract_strided_slice %16 {offsets = [0, 0], sizes = [8, 64], strides = [1, 1]} : vector<8x128xf32> to vector<8x64xf32>
    %18 = arith.negf %17 : vector<8x64xf32>
    %19 = math.exp %18 : vector<8x64xf32>
    %cst_12 = arith.constant 1.000000e+00 : f32
    %20 = vector.broadcast %cst_12 : f32 to vector<8x64xf32>
    %21 = arith.addf %20, %19 : vector<8x64xf32>
    %22 = arith.divf %20, %21 : vector<8x64xf32>
    %23 = vector.extract_strided_slice %16 {offsets = [0, 64], sizes = [8, 64], strides = [1, 1]} : vector<8x128xf32> to vector<8x64xf32>
    %24 = math.tanh %23 : vector<8x64xf32>
    %25 = arith.subf %24, %11 : vector<8x64xf32>
    %26 = arith.mulf %22, %25 : vector<8x64xf32>
    %27 = arith.addf %11, %26 : vector<8x64xf32>
    %c0_13 = arith.constant 0 : index
    %c0_14 = arith.constant 0 : index
    %28 = vector.load %arg5[%c0_13, %c0_14] : memref<64x512xbf16, #tpu.memory_space<vmem>>, vector<64x256xbf16>
    %29 = arith.truncf %27 : vector<8x64xf32> to vector<8x64xbf16>
    %cst_15 = arith.constant dense<0.000000e+00> : vector<8x256xf32>
    %30 = tpu.matmul %29, %28, %cst_15 {dimension_numbers = #tpu.dot_dimension_numbers<[1], [0], [0], [1], [0, 0, 1, 1], [], []>} : vector<8x64xbf16>, vector<64x256xbf16>, vector<8x256xf32> -> vector<8x256xf32>
    %31 = vector.extract_strided_slice %30 {offsets = [0, 0], sizes = [8, 128], strides = [1, 1]} : vector<8x256xf32> to vector<8x128xf32>
    %32 = arith.negf %31 : vector<8x128xf32>
    %33 = math.exp %32 : vector<8x128xf32>
    %cst_16 = arith.constant 1.000000e+00 : f32
    %34 = vector.broadcast %cst_16 : f32 to vector<8x128xf32>
    %35 = arith.addf %34, %33 : vector<8x128xf32>
    %36 = arith.divf %34, %35 : vector<8x128xf32>
    %37 = vector.extract_strided_slice %36 {offsets = [0, 0], sizes = [8, 64], strides = [1, 1]} : vector<8x128xf32> to vector<8x64xf32>
    %38 = vector.extract_strided_slice %30 {offsets = [0, 128], sizes = [8, 64], strides = [1, 1]} : vector<8x256xf32> to vector<8x64xf32>
    %39 = math.tanh %38 : vector<8x64xf32>
    %40 = arith.subf %39, %27 : vector<8x64xf32>
    %41 = arith.mulf %37, %40 : vector<8x64xf32>
    %42 = arith.addf %27, %41 : vector<8x64xf32>
    %43 = vector.extract_strided_slice %36 {offsets = [0, 64], sizes = [8, 64], strides = [1, 1]} : vector<8x128xf32> to vector<8x64xf32>
    %44 = vector.extract_strided_slice %30 {offsets = [0, 192], sizes = [8, 64], strides = [1, 1]} : vector<8x256xf32> to vector<8x64xf32>
    %cst_17 = arith.constant 0.000000e+00 : f32
    %45 = vector.broadcast %cst_17 : f32 to vector<8x64xf32>
    %46 = arith.maximumf %44, %45 : vector<8x64xf32>
    %47 = arith.subf %46, %27 : vector<8x64xf32>
    %48 = arith.mulf %43, %47 : vector<8x64xf32>
    %49 = arith.addf %27, %48 : vector<8x64xf32>
    %c0_18 = arith.constant 0 : index
    %c256 = arith.constant 256 : index
    %50 = vector.load %arg5[%c0_18, %c256] : memref<64x512xbf16, #tpu.memory_space<vmem>>, vector<64x128xbf16>
    %51 = arith.truncf %42 : vector<8x64xf32> to vector<8x64xbf16>
    %cst_19 = arith.constant dense<0.000000e+00> : vector<8x128xf32>
    %52 = tpu.matmul %51, %50, %cst_19 {dimension_numbers = #tpu.dot_dimension_numbers<[1], [0], [0], [1], [0, 0, 1, 1], [], []>} : vector<8x64xbf16>, vector<64x128xbf16>, vector<8x128xf32> -> vector<8x128xf32>
    %53 = vector.extract_strided_slice %52 {offsets = [0, 0], sizes = [8, 64], strides = [1, 1]} : vector<8x128xf32> to vector<8x64xf32>
    %54 = arith.negf %53 : vector<8x64xf32>
    %55 = math.exp %54 : vector<8x64xf32>
    %cst_20 = arith.constant 1.000000e+00 : f32
    %56 = vector.broadcast %cst_20 : f32 to vector<8x64xf32>
    %57 = arith.addf %56, %55 : vector<8x64xf32>
    %58 = arith.divf %56, %57 : vector<8x64xf32>
    %59 = vector.extract_strided_slice %52 {offsets = [0, 64], sizes = [8, 64], strides = [1, 1]} : vector<8x128xf32> to vector<8x64xf32>
    %60 = arith.negf %59 : vector<8x64xf32>
    %61 = math.exp %60 : vector<8x64xf32>
    %cst_21 = arith.constant 1.000000e+00 : f32
    %62 = vector.broadcast %cst_21 : f32 to vector<8x64xf32>
    %63 = arith.addf %62, %61 : vector<8x64xf32>
    %64 = arith.divf %62, %63 : vector<8x64xf32>
    %65 = arith.subf %64, %42 : vector<8x64xf32>
    %66 = arith.mulf %58, %65 : vector<8x64xf32>
    %67 = arith.addf %42, %66 : vector<8x64xf32>
    %c0_22 = arith.constant 0 : index
    %c384 = arith.constant 384 : index
    %68 = vector.load %arg5[%c0_22, %c384] : memref<64x512xbf16, #tpu.memory_space<vmem>>, vector<64x128xbf16>
    %69 = arith.truncf %49 : vector<8x64xf32> to vector<8x64xbf16>
    %cst_23 = arith.constant dense<0.000000e+00> : vector<8x128xf32>
    %70 = tpu.matmul %69, %68, %cst_23 {dimension_numbers = #tpu.dot_dimension_numbers<[1], [0], [0], [1], [0, 0, 1, 1], [], []>} : vector<8x64xbf16>, vector<64x128xbf16>, vector<8x128xf32> -> vector<8x128xf32>
    %71 = vector.extract_strided_slice %70 {offsets = [0, 0], sizes = [8, 64], strides = [1, 1]} : vector<8x128xf32> to vector<8x64xf32>
    %72 = arith.negf %71 : vector<8x64xf32>
    %73 = math.exp %72 : vector<8x64xf32>
    %cst_24 = arith.constant 1.000000e+00 : f32
    %74 = vector.broadcast %cst_24 : f32 to vector<8x64xf32>
    %75 = arith.addf %74, %73 : vector<8x64xf32>
    %76 = arith.divf %74, %75 : vector<8x64xf32>
    %77 = vector.extract_strided_slice %70 {offsets = [0, 64], sizes = [8, 64], strides = [1, 1]} : vector<8x128xf32> to vector<8x64xf32>
    %78 = arith.subf %77, %49 : vector<8x64xf32>
    %79 = arith.mulf %76, %78 : vector<8x64xf32>
    %80 = arith.addf %49, %79 : vector<8x64xf32>
    %81 = arith.addf %42, %49 : vector<8x64xf32>
    %82 = arith.addf %81, %67 : vector<8x64xf32>
    %83 = arith.addf %82, %80 : vector<8x64xf32>
    %cst_25 = arith.constant 2.500000e-01 : f32
    %84 = vector.broadcast %cst_25 : f32 to vector<8x64xf32>
    %85 = arith.mulf %83, %84 : vector<8x64xf32>
    %86 = arith.truncf %85 : vector<8x64xf32> to vector<8x64xbf16>
    %c0_26 = arith.constant 0 : index
    %c0_27 = arith.constant 0 : index
    %87 = vector.load %arg3[%c0_26, %c0_27] : memref<64x64xbf16, #tpu.memory_space<vmem>>, vector<64x64xbf16>
    %cst_28 = arith.constant dense<0.000000e+00> : vector<8x64xf32>
    %88 = tpu.matmul %86, %87, %cst_28 {dimension_numbers = #tpu.dot_dimension_numbers<[1], [0], [0], [1], [0, 0, 1, 1], [], []>} : vector<8x64xbf16>, vector<64x64xbf16>, vector<8x64xf32> -> vector<8x64xf32>
    %89 = vector.broadcast %10 : vector<1x64xf32> to vector<8x64xf32>
    %90 = arith.addf %88, %89 : vector<8x64xf32>
    %cst_29 = arith.constant dense<0xFF800000> : vector<8xf32>
    %91 = vector.multi_reduction <maximumf>, %90, %cst_29 [1] : vector<8x64xf32> to vector<8xf32>
    %92 = vector.shape_cast %91 : vector<8xf32> to vector<8x1xf32>
    %93 = vector.broadcast %92 : vector<8x1xf32> to vector<8x64xf32>
    %94 = arith.subf %90, %93 : vector<8x64xf32>
    %95 = math.exp %94 : vector<8x64xf32>
    %cst_30 = arith.constant dense<0.000000e+00> : vector<8xf32>
    %96 = vector.multi_reduction <add>, %95, %cst_30 [1] : vector<8x64xf32> to vector<8xf32>
    %97 = vector.shape_cast %96 : vector<8xf32> to vector<8x1xf32>
    %98 = math.log %97 : vector<8x1xf32>
    %99 = vector.broadcast %98 : vector<8x1xf32> to vector<8x64xf32>
    %100 = arith.subf %94, %99 : vector<8x64xf32>
    %c0_31 = arith.constant 0 : index
    %c0_32 = arith.constant 0 : index
    %101 = vector.load %arg7[%c0_31, %c0_32] : memref<64x64xf32, #tpu.memory_space<vmem>>, vector<8x64xf32>
    tpu.vector_store %arg7[%c0_31, %c0_32], %100 {strides = array<i32>} : memref<64x64xf32, #tpu.memory_space<vmem>>, vector<8x64xf32>,
    %102 = vector.extract_strided_slice %9 {offsets = [8, 0], sizes = [8, 64], strides = [1, 1]} : vector<64x64xf32> to vector<8x64xf32>
    %103 = tpu.concatenate %102, %85 in 1 : vector<8x64xf32>, vector<8x64xf32> -> vector<8x128xf32>
    %104 = arith.truncf %103 : vector<8x128xf32> to vector<8x128xbf16>
    %c0_33 = arith.constant 0 : index
    %c0_34 = arith.constant 0 : index
    %105 = vector.load %arg4[%c0_33, %c0_34] : memref<128x128xbf16, #tpu.memory_space<vmem>>, vector<128x128xbf16>
    %cst_35 = arith.constant dense<0.000000e+00> : vector<8x128xf32>
    %106 = tpu.matmul %104, %105, %cst_35 {dimension_numbers = #tpu.dot_dimension_numbers<[1], [0], [0], [1], [0, 0, 1, 1], [], []>} : vector<8x128xbf16>, vector<128x128xbf16>, vector<8x128xf32> -> vector<8x128xf32>
    %107 = vector.extract_strided_slice %106 {offsets = [0, 0], sizes = [8, 64], strides = [1, 1]} : vector<8x128xf32> to vector<8x64xf32>
    %108 = arith.negf %107 : vector<8x64xf32>
    %109 = math.exp %108 : vector<8x64xf32>
    %cst_36 = arith.constant 1.000000e+00 : f32
    %110 = vector.broadcast %cst_36 : f32 to vector<8x64xf32>
    %111 = arith.addf %110, %109 : vector<8x64xf32>
    %112 = arith.divf %110, %111 : vector<8x64xf32>
    %113 = vector.extract_strided_slice %106 {offsets = [0, 64], sizes = [8, 64], strides = [1, 1]} : vector<8x128xf32> to vector<8x64xf32>
    %114 = math.tanh %113 : vector<8x64xf32>
    %115 = arith.subf %114, %85 : vector<8x64xf32>
    %116 = arith.mulf %112, %115 : vector<8x64xf32>
    %117 = arith.addf %85, %116 : vector<8x64xf32>
    %c0_37 = arith.constant 0 : index
    %c0_38 = arith.constant 0 : index
    %118 = vector.load %arg5[%c0_37, %c0_38] : memref<64x512xbf16, #tpu.memory_space<vmem>>, vector<64x256xbf16>
    %119 = arith.truncf %117 : vector<8x64xf32> to vector<8x64xbf16>
    %cst_39 = arith.constant dense<0.000000e+00> : vector<8x256xf32>
    %120 = tpu.matmul %119, %118, %cst_39 {dimension_numbers = #tpu.dot_dimension_numbers<[1], [0], [0], [1], [0, 0, 1, 1], [], []>} : vector<8x64xbf16>, vector<64x256xbf16>, vector<8x256xf32> -> vector<8x256xf32>
    %121 = vector.extract_strided_slice %120 {offsets = [0, 0], sizes = [8, 128], strides = [1, 1]} : vector<8x256xf32> to vector<8x128xf32>
    %122 = arith.negf %121 : vector<8x128xf32>
    %123 = math.exp %122 : vector<8x128xf32>
    %cst_40 = arith.constant 1.000000e+00 : f32
    %124 = vector.broadcast %cst_40 : f32 to vector<8x128xf32>
    %125 = arith.addf %124, %123 : vector<8x128xf32>
    %126 = arith.divf %124, %125 : vector<8x128xf32>
    %127 = vector.extract_strided_slice %126 {offsets = [0, 0], sizes = [8, 64], strides = [1, 1]} : vector<8x128xf32> to vector<8x64xf32>
    %128 = vector.extract_strided_slice %120 {offsets = [0, 128], sizes = [8, 64], strides = [1, 1]} : vector<8x256xf32> to vector<8x64xf32>
    %129 = math.tanh %128 : vector<8x64xf32>
    %130 = arith.subf %129, %117 : vector<8x64xf32>
    %131 = arith.mulf %127, %130 : vector<8x64xf32>
    %132 = arith.addf %117, %131 : vector<8x64xf32>
    %133 = vector.extract_strided_slice %126 {offsets = [0, 64], sizes = [8, 64], strides = [1, 1]} : vector<8x128xf32> to vector<8x64xf32>
    %134 = vector.extract_strided_slice %120 {offsets = [0, 192], sizes = [8, 64], strides = [1, 1]} : vector<8x256xf32> to vector<8x64xf32>
    %cst_41 = arith.constant 0.000000e+00 : f32
    %135 = vector.broadcast %cst_41 : f32 to vector<8x64xf32>
    %136 = arith.maximumf %134, %135 : vector<8x64xf32>
    %137 = arith.subf %136, %117 : vector<8x64xf32>
    %138 = arith.mulf %133, %137 : vector<8x64xf32>
    %139 = arith.addf %117, %138 : vector<8x64xf32>
    %c0_42 = arith.constant 0 : index
    %c256_43 = arith.constant 256 : index
    %140 = vector.load %arg5[%c0_42, %c256_43] : memref<64x512xbf16, #tpu.memory_space<vmem>>, vector<64x128xbf16>
    %141 = arith.truncf %132 : vector<8x64xf32> to vector<8x64xbf16>
    %cst_44 = arith.constant dense<0.000000e+00> : vector<8x128xf32>
    %142 = tpu.matmul %141, %140, %cst_44 {dimension_numbers = #tpu.dot_dimension_numbers<[1], [0], [0], [1], [0, 0, 1, 1], [], []>} : vector<8x64xbf16>, vector<64x128xbf16>, vector<8x128xf32> -> vector<8x128xf32>
    %143 = vector.extract_strided_slice %142 {offsets = [0, 0], sizes = [8, 64], strides = [1, 1]} : vector<8x128xf32> to vector<8x64xf32>
    %144 = arith.negf %143 : vector<8x64xf32>
    %145 = math.exp %144 : vector<8x64xf32>
    %cst_45 = arith.constant 1.000000e+00 : f32
    %146 = vector.broadcast %cst_45 : f32 to vector<8x64xf32>
    %147 = arith.addf %146, %145 : vector<8x64xf32>
    %148 = arith.divf %146, %147 : vector<8x64xf32>
    %149 = vector.extract_strided_slice %142 {offsets = [0, 64], sizes = [8, 64], strides = [1, 1]} : vector<8x128xf32> to vector<8x64xf32>
    %150 = arith.negf %149 : vector<8x64xf32>
    %151 = math.exp %150 : vector<8x64xf32>
    %cst_46 = arith.constant 1.000000e+00 : f32
    %152 = vector.broadcast %cst_46 : f32 to vector<8x64xf32>
    %153 = arith.addf %152, %151 : vector<8x64xf32>
    %154 = arith.divf %152, %153 : vector<8x64xf32>
    %155 = arith.subf %154, %132 : vector<8x64xf32>
    %156 = arith.mulf %148, %155 : vector<8x64xf32>
    %157 = arith.addf %132, %156 : vector<8x64xf32>
    %c0_47 = arith.constant 0 : index
    %c384_48 = arith.constant 384 : index
    %158 = vector.load %arg5[%c0_47, %c384_48] : memref<64x512xbf16, #tpu.memory_space<vmem>>, vector<64x128xbf16>
    %159 = arith.truncf %139 : vector<8x64xf32> to vector<8x64xbf16>
    %cst_49 = arith.constant dense<0.000000e+00> : vector<8x128xf32>
    %160 = tpu.matmul %159, %158, %cst_49 {dimension_numbers = #tpu.dot_dimension_numbers<[1], [0], [0], [1], [0, 0, 1, 1], [], []>} : vector<8x64xbf16>, vector<64x128xbf16>, vector<8x128xf32> -> vector<8x128xf32>
    %161 = vector.extract_strided_slice %160 {offsets = [0, 0], sizes = [8, 64], strides = [1, 1]} : vector<8x128xf32> to vector<8x64xf32>
    %162 = arith.negf %161 : vector<8x64xf32>
    %163 = math.exp %162 : vector<8x64xf32>
    %cst_50 = arith.constant 1.000000e+00 : f32
    %164 = vector.broadcast %cst_50 : f32 to vector<8x64xf32>
    %165 = arith.addf %164, %163 : vector<8x64xf32>
    %166 = arith.divf %164, %165 : vector<8x64xf32>
    %167 = vector.extract_strided_slice %160 {offsets = [0, 64], sizes = [8, 64], strides = [1, 1]} : vector<8x128xf32> to vector<8x64xf32>
    %168 = arith.subf %167, %139 : vector<8x64xf32>
    %169 = arith.mulf %166, %168 : vector<8x64xf32>
    %170 = arith.addf %139, %169 : vector<8x64xf32>
    %171 = arith.addf %132, %139 : vector<8x64xf32>
    %172 = arith.addf %171, %157 : vector<8x64xf32>
    %173 = arith.addf %172, %170 : vector<8x64xf32>
    %cst_51 = arith.constant 2.500000e-01 : f32
    %174 = vector.broadcast %cst_51 : f32 to vector<8x64xf32>
    %175 = arith.mulf %173, %174 : vector<8x64xf32>
    %176 = arith.truncf %175 : vector<8x64xf32> to vector<8x64xbf16>
    %c0_52 = arith.constant 0 : index
    %c0_53 = arith.constant 0 : index
    %177 = vector.load %arg3[%c0_52, %c0_53] : memref<64x64xbf16, #tpu.memory_space<vmem>>, vector<64x64xbf16>
    %cst_54 = arith.constant dense<0.000000e+00> : vector<8x64xf32>
    %178 = tpu.matmul %176, %177, %cst_54 {dimension_numbers = #tpu.dot_dimension_numbers<[1], [0], [0], [1], [0, 0, 1, 1], [], []>} : vector<8x64xbf16>, vector<64x64xbf16>, vector<8x64xf32> -> vector<8x64xf32>
    %179 = vector.broadcast %10 : vector<1x64xf32> to vector<8x64xf32>
    %180 = arith.addf %178, %179 : vector<8x64xf32>
    %cst_55 = arith.constant dense<0xFF800000> : vector<8xf32>
    %181 = vector.multi_reduction <maximumf>, %180, %cst_55 [1] : vector<8x64xf32> to vector<8xf32>
    %182 = vector.shape_cast %181 : vector<8xf32> to vector<8x1xf32>
    %183 = vector.broadcast %182 : vector<8x1xf32> to vector<8x64xf32>
    %184 = arith.subf %180, %183 : vector<8x64xf32>
    %185 = math.exp %184 : vector<8x64xf32>
    %cst_56 = arith.constant dense<0.000000e+00> : vector<8xf32>
    %186 = vector.multi_reduction <add>, %185, %cst_56 [1] : vector<8x64xf32> to vector<8xf32>
    %187 = vector.shape_cast %186 : vector<8xf32> to vector<8x1xf32>
    %188 = math.log %187 : vector<8x1xf32>
    %189 = vector.broadcast %188 : vector<8x1xf32> to vector<8x64xf32>
    %190 = arith.subf %184, %189 : vector<8x64xf32>
    %c8 = arith.constant 8 : index
    %c0_57 = arith.constant 0 : index
    %191 = vector.load %arg7[%c8, %c0_57] : memref<64x64xf32, #tpu.memory_space<vmem>>, vector<8x64xf32>
    tpu.vector_store %arg7[%c8, %c0_57], %190 {strides = array<i32>} : memref<64x64xf32, #tpu.memory_space<vmem>>, vector<8x64xf32>,
    %192 = vector.extract_strided_slice %9 {offsets = [16, 0], sizes = [8, 64], strides = [1, 1]} : vector<64x64xf32> to vector<8x64xf32>
    %193 = tpu.concatenate %192, %175 in 1 : vector<8x64xf32>, vector<8x64xf32> -> vector<8x128xf32>
    %194 = arith.truncf %193 : vector<8x128xf32> to vector<8x128xbf16>
    %c0_58 = arith.constant 0 : index
    %c0_59 = arith.constant 0 : index
    %195 = vector.load %arg4[%c0_58, %c0_59] : memref<128x128xbf16, #tpu.memory_space<vmem>>, vector<128x128xbf16>
    %cst_60 = arith.constant dense<0.000000e+00> : vector<8x128xf32>
    %196 = tpu.matmul %194, %195, %cst_60 {dimension_numbers = #tpu.dot_dimension_numbers<[1], [0], [0], [1], [0, 0, 1, 1], [], []>} : vector<8x128xbf16>, vector<128x128xbf16>, vector<8x128xf32> -> vector<8x128xf32>
    %197 = vector.extract_strided_slice %196 {offsets = [0, 0], sizes = [8, 64], strides = [1, 1]} : vector<8x128xf32> to vector<8x64xf32>
    %198 = arith.negf %197 : vector<8x64xf32>
    %199 = math.exp %198 : vector<8x64xf32>
    %cst_61 = arith.constant 1.000000e+00 : f32
    %200 = vector.broadcast %cst_61 : f32 to vector<8x64xf32>
    %201 = arith.addf %200, %199 : vector<8x64xf32>
    %202 = arith.divf %200, %201 : vector<8x64xf32>
    %203 = vector.extract_strided_slice %196 {offsets = [0, 64], sizes = [8, 64], strides = [1, 1]} : vector<8x128xf32> to vector<8x64xf32>
    %204 = math.tanh %203 : vector<8x64xf32>
    %205 = arith.subf %204, %175 : vector<8x64xf32>
    %206 = arith.mulf %202, %205 : vector<8x64xf32>
    %207 = arith.addf %175, %206 : vector<8x64xf32>
    %c0_62 = arith.constant 0 : index
    %c0_63 = arith.constant 0 : index
    %208 = vector.load %arg5[%c0_62, %c0_63] : memref<64x512xbf16, #tpu.memory_space<vmem>>, vector<64x256xbf16>
    %209 = arith.truncf %207 : vector<8x64xf32> to vector<8x64xbf16>
    %cst_64 = arith.constant dense<0.000000e+00> : vector<8x256xf32>
    %210 = tpu.matmul %209, %208, %cst_64 {dimension_numbers = #tpu.dot_dimension_numbers<[1], [0], [0], [1], [0, 0, 1, 1], [], []>} : vector<8x64xbf16>, vector<64x256xbf16>, vector<8x256xf32> -> vector<8x256xf32>
    %211 = vector.extract_strided_slice %210 {offsets = [0, 0], sizes = [8, 128], strides = [1, 1]} : vector<8x256xf32> to vector<8x128xf32>
    %212 = arith.negf %211 : vector<8x128xf32>
    %213 = math.exp %212 : vector<8x128xf32>
    %cst_65 = arith.constant 1.000000e+00 : f32
    %214 = vector.broadcast %cst_65 : f32 to vector<8x128xf32>
    %215 = arith.addf %214, %213 : vector<8x128xf32>
    %216 = arith.divf %214, %215 : vector<8x128xf32>
    %217 = vector.extract_strided_slice %216 {offsets = [0, 0], sizes = [8, 64], strides = [1, 1]} : vector<8x128xf32> to vector<8x64xf32>
    %218 = vector.extract_strided_slice %210 {offsets = [0, 128], sizes = [8, 64], strides = [1, 1]} : vector<8x256xf32> to vector<8x64xf32>
    %219 = math.tanh %218 : vector<8x64xf32>
    %220 = arith.subf %219, %207 : vector<8x64xf32>
    %221 = arith.mulf %217, %220 : vector<8x64xf32>
    %222 = arith.addf %207, %221 : vector<8x64xf32>
    %223 = vector.extract_strided_slice %216 {offsets = [0, 64], sizes = [8, 64], strides = [1, 1]} : vector<8x128xf32> to vector<8x64xf32>
    %224 = vector.extract_strided_slice %210 {offsets = [0, 192], sizes = [8, 64], strides = [1, 1]} : vector<8x256xf32> to vector<8x64xf32>
    %cst_66 = arith.constant 0.000000e+00 : f32
    %225 = vector.broadcast %cst_66 : f32 to vector<8x64xf32>
    %226 = arith.maximumf %224, %225 : vector<8x64xf32>
    %227 = arith.subf %226, %207 : vector<8x64xf32>
    %228 = arith.mulf %223, %227 : vector<8x64xf32>
    %229 = arith.addf %207, %228 : vector<8x64xf32>
    %c0_67 = arith.constant 0 : index
    %c256_68 = arith.constant 256 : index
    %230 = vector.load %arg5[%c0_67, %c256_68] : memref<64x512xbf16, #tpu.memory_space<vmem>>, vector<64x128xbf16>
    %231 = arith.truncf %222 : vector<8x64xf32> to vector<8x64xbf16>
    %cst_69 = arith.constant dense<0.000000e+00> : vector<8x128xf32>
    %232 = tpu.matmul %231, %230, %cst_69 {dimension_numbers = #tpu.dot_dimension_numbers<[1], [0], [0], [1], [0, 0, 1, 1], [], []>} : vector<8x64xbf16>, vector<64x128xbf16>, vector<8x128xf32> -> vector<8x128xf32>
    %233 = vector.extract_strided_slice %232 {offsets = [0, 0], sizes = [8, 64], strides = [1, 1]} : vector<8x128xf32> to vector<8x64xf32>
    %234 = arith.negf %233 : vector<8x64xf32>
    %235 = math.exp %234 : vector<8x64xf32>
    %cst_70 = arith.constant 1.000000e+00 : f32
    %236 = vector.broadcast %cst_70 : f32 to vector<8x64xf32>
    %237 = arith.addf %236, %235 : vector<8x64xf32>
    %238 = arith.divf %236, %237 : vector<8x64xf32>
    %239 = vector.extract_strided_slice %232 {offsets = [0, 64], sizes = [8, 64], strides = [1, 1]} : vector<8x128xf32> to vector<8x64xf32>
    %240 = arith.negf %239 : vector<8x64xf32>
    %241 = math.exp %240 : vector<8x64xf32>
    %cst_71 = arith.constant 1.000000e+00 : f32
    %242 = vector.broadcast %cst_71 : f32 to vector<8x64xf32>
    %243 = arith.addf %242, %241 : vector<8x64xf32>
    %244 = arith.divf %242, %243 : vector<8x64xf32>
    %245 = arith.subf %244, %222 : vector<8x64xf32>
    %246 = arith.mulf %238, %245 : vector<8x64xf32>
    %247 = arith.addf %222, %246 : vector<8x64xf32>
    %c0_72 = arith.constant 0 : index
    %c384_73 = arith.constant 384 : index
    %248 = vector.load %arg5[%c0_72, %c384_73] : memref<64x512xbf16, #tpu.memory_space<vmem>>, vector<64x128xbf16>
    %249 = arith.truncf %229 : vector<8x64xf32> to vector<8x64xbf16>
    %cst_74 = arith.constant dense<0.000000e+00> : vector<8x128xf32>
    %250 = tpu.matmul %249, %248, %cst_74 {dimension_numbers = #tpu.dot_dimension_numbers<[1], [0], [0], [1], [0, 0, 1, 1], [], []>} : vector<8x64xbf16>, vector<64x128xbf16>, vector<8x128xf32> -> vector<8x128xf32>
    %251 = vector.extract_strided_slice %250 {offsets = [0, 0], sizes = [8, 64], strides = [1, 1]} : vector<8x128xf32> to vector<8x64xf32>
    %252 = arith.negf %251 : vector<8x64xf32>
    %253 = math.exp %252 : vector<8x64xf32>
    %cst_75 = arith.constant 1.000000e+00 : f32
    %254 = vector.broadcast %cst_75 : f32 to vector<8x64xf32>
    %255 = arith.addf %254, %253 : vector<8x64xf32>
    %256 = arith.divf %254, %255 : vector<8x64xf32>
    %257 = vector.extract_strided_slice %250 {offsets = [0, 64], sizes = [8, 64], strides = [1, 1]} : vector<8x128xf32> to vector<8x64xf32>
    %258 = arith.subf %257, %229 : vector<8x64xf32>
    %259 = arith.mulf %256, %258 : vector<8x64xf32>
    %260 = arith.addf %229, %259 : vector<8x64xf32>
    %261 = arith.addf %222, %229 : vector<8x64xf32>
    %262 = arith.addf %261, %247 : vector<8x64xf32>
    %263 = arith.addf %262, %260 : vector<8x64xf32>
    %cst_76 = arith.constant 2.500000e-01 : f32
    %264 = vector.broadcast %cst_76 : f32 to vector<8x64xf32>
    %265 = arith.mulf %263, %264 : vector<8x64xf32>
    %266 = arith.truncf %265 : vector<8x64xf32> to vector<8x64xbf16>
    %c0_77 = arith.constant 0 : index
    %c0_78 = arith.constant 0 : index
    %267 = vector.load %arg3[%c0_77, %c0_78] : memref<64x64xbf16, #tpu.memory_space<vmem>>, vector<64x64xbf16>
    %cst_79 = arith.constant dense<0.000000e+00> : vector<8x64xf32>
    %268 = tpu.matmul %266, %267, %cst_79 {dimension_numbers = #tpu.dot_dimension_numbers<[1], [0], [0], [1], [0, 0, 1, 1], [], []>} : vector<8x64xbf16>, vector<64x64xbf16>, vector<8x64xf32> -> vector<8x64xf32>
    %269 = vector.broadcast %10 : vector<1x64xf32> to vector<8x64xf32>
    %270 = arith.addf %268, %269 : vector<8x64xf32>
    %cst_80 = arith.constant dense<0xFF800000> : vector<8xf32>
    %271 = vector.multi_reduction <maximumf>, %270, %cst_80 [1] : vector<8x64xf32> to vector<8xf32>
    %272 = vector.shape_cast %271 : vector<8xf32> to vector<8x1xf32>
    %273 = vector.broadcast %272 : vector<8x1xf32> to vector<8x64xf32>
    %274 = arith.subf %270, %273 : vector<8x64xf32>
    %275 = math.exp %274 : vector<8x64xf32>
    %cst_81 = arith.constant dense<0.000000e+00> : vector<8xf32>
    %276 = vector.multi_reduction <add>, %275, %cst_81 [1] : vector<8x64xf32> to vector<8xf32>
    %277 = vector.shape_cast %276 : vector<8xf32> to vector<8x1xf32>
    %278 = math.log %277 : vector<8x1xf32>
    %279 = vector.broadcast %278 : vector<8x1xf32> to vector<8x64xf32>
    %280 = arith.subf %274, %279 : vector<8x64xf32>
    %c16 = arith.constant 16 : index
    %c0_82 = arith.constant 0 : index
    %281 = vector.load %arg7[%c16, %c0_82] : memref<64x64xf32, #tpu.memory_space<vmem>>, vector<8x64xf32>
    tpu.vector_store %arg7[%c16, %c0_82], %280 {strides = array<i32>} : memref<64x64xf32, #tpu.memory_space<vmem>>, vector<8x64xf32>,
    %282 = vector.extract_strided_slice %9 {offsets = [24, 0], sizes = [8, 64], strides = [1, 1]} : vector<64x64xf32> to vector<8x64xf32>
    %283 = tpu.concatenate %282, %265 in 1 : vector<8x64xf32>, vector<8x64xf32> -> vector<8x128xf32>
    %284 = arith.truncf %283 : vector<8x128xf32> to vector<8x128xbf16>
    %c0_83 = arith.constant 0 : index
    %c0_84 = arith.constant 0 : index
    %285 = vector.load %arg4[%c0_83, %c0_84] : memref<128x128xbf16, #tpu.memory_space<vmem>>, vector<128x128xbf16>
    %cst_85 = arith.constant dense<0.000000e+00> : vector<8x128xf32>
    %286 = tpu.matmul %284, %285, %cst_85 {dimension_numbers = #tpu.dot_dimension_numbers<[1], [0], [0], [1], [0, 0, 1, 1], [], []>} : vector<8x128xbf16>, vector<128x128xbf16>, vector<8x128xf32> -> vector<8x128xf32>
    %287 = vector.extract_strided_slice %286 {offsets = [0, 0], sizes = [8, 64], strides = [1, 1]} : vector<8x128xf32> to vector<8x64xf32>
    %288 = arith.negf %287 : vector<8x64xf32>
    %289 = math.exp %288 : vector<8x64xf32>
    %cst_86 = arith.constant 1.000000e+00 : f32
    %290 = vector.broadcast %cst_86 : f32 to vector<8x64xf32>
    %291 = arith.addf %290, %289 : vector<8x64xf32>
    %292 = arith.divf %290, %291 : vector<8x64xf32>
    %293 = vector.extract_strided_slice %286 {offsets = [0, 64], sizes = [8, 64], strides = [1, 1]} : vector<8x128xf32> to vector<8x64xf32>
    %294 = math.tanh %293 : vector<8x64xf32>
    %295 = arith.subf %294, %265 : vector<8x64xf32>
    %296 = arith.mulf %292, %295 : vector<8x64xf32>
    %297 = arith.addf %265, %296 : vector<8x64xf32>
    %c0_87 = arith.constant 0 : index
    %c0_88 = arith.constant 0 : index
    %298 = vector.load %arg5[%c0_87, %c0_88] : memref<64x512xbf16, #tpu.memory_space<vmem>>, vector<64x256xbf16>
    %299 = arith.truncf %297 : vector<8x64xf32> to vector<8x64xbf16>
    %cst_89 = arith.constant dense<0.000000e+00> : vector<8x256xf32>
    %300 = tpu.matmul %299, %298, %cst_89 {dimension_numbers = #tpu.dot_dimension_numbers<[1], [0], [0], [1], [0, 0, 1, 1], [], []>} : vector<8x64xbf16>, vector<64x256xbf16>, vector<8x256xf32> -> vector<8x256xf32>
    %301 = vector.extract_strided_slice %300 {offsets = [0, 0], sizes = [8, 128], strides = [1, 1]} : vector<8x256xf32> to vector<8x128xf32>
    %302 = arith.negf %301 : vector<8x128xf32>
    %303 = math.exp %302 : vector<8x128xf32>
    %cst_90 = arith.constant 1.000000e+00 : f32
    %304 = vector.broadcast %cst_90 : f32 to vector<8x128xf32>
    %305 = arith.addf %304, %303 : vector<8x128xf32>
    %306 = arith.divf %304, %305 : vector<8x128xf32>
    %307 = vector.extract_strided_slice %306 {offsets = [0, 0], sizes = [8, 64], strides = [1, 1]} : vector<8x128xf32> to vector<8x64xf32>
    %308 = vector.extract_strided_slice %300 {offsets = [0, 128], sizes = [8, 64], strides = [1, 1]} : vector<8x256xf32> to vector<8x64xf32>
    %309 = math.tanh %308 : vector<8x64xf32>
    %310 = arith.subf %309, %297 : vector<8x64xf32>
    %311 = arith.mulf %307, %310 : vector<8x64xf32>
    %312 = arith.addf %297, %311 : vector<8x64xf32>
    %313 = vector.extract_strided_slice %306 {offsets = [0, 64], sizes = [8, 64], strides = [1, 1]} : vector<8x128xf32> to vector<8x64xf32>
    %314 = vector.extract_strided_slice %300 {offsets = [0, 192], sizes = [8, 64], strides = [1, 1]} : vector<8x256xf32> to vector<8x64xf32>
    %cst_91 = arith.constant 0.000000e+00 : f32
    %315 = vector.broadcast %cst_91 : f32 to vector<8x64xf32>
    %316 = arith.maximumf %314, %315 : vector<8x64xf32>
    %317 = arith.subf %316, %297 : vector<8x64xf32>
    %318 = arith.mulf %313, %317 : vector<8x64xf32>
    %319 = arith.addf %297, %318 : vector<8x64xf32>
    %c0_92 = arith.constant 0 : index
    %c256_93 = arith.constant 256 : index
    %320 = vector.load %arg5[%c0_92, %c256_93] : memref<64x512xbf16, #tpu.memory_space<vmem>>, vector<64x128xbf16>
    %321 = arith.truncf %312 : vector<8x64xf32> to vector<8x64xbf16>
    %cst_94 = arith.constant dense<0.000000e+00> : vector<8x128xf32>
    %322 = tpu.matmul %321, %320, %cst_94 {dimension_numbers = #tpu.dot_dimension_numbers<[1], [0], [0], [1], [0, 0, 1, 1], [], []>} : vector<8x64xbf16>, vector<64x128xbf16>, vector<8x128xf32> -> vector<8x128xf32>
    %323 = vector.extract_strided_slice %322 {offsets = [0, 0], sizes = [8, 64], strides = [1, 1]} : vector<8x128xf32> to vector<8x64xf32>
    %324 = arith.negf %323 : vector<8x64xf32>
    %325 = math.exp %324 : vector<8x64xf32>
    %cst_95 = arith.constant 1.000000e+00 : f32
    %326 = vector.broadcast %cst_95 : f32 to vector<8x64xf32>
    %327 = arith.addf %326, %325 : vector<8x64xf32>
    %328 = arith.divf %326, %327 : vector<8x64xf32>
    %329 = vector.extract_strided_slice %322 {offsets = [0, 64], sizes = [8, 64], strides = [1, 1]} : vector<8x128xf32> to vector<8x64xf32>
    %330 = arith.negf %329 : vector<8x64xf32>
    %331 = math.exp %330 : vector<8x64xf32>
    %cst_96 = arith.constant 1.000000e+00 : f32
    %332 = vector.broadcast %cst_96 : f32 to vector<8x64xf32>
    %333 = arith.addf %332, %331 : vector<8x64xf32>
    %334 = arith.divf %332, %333 : vector<8x64xf32>
    %335 = arith.subf %334, %312 : vector<8x64xf32>
    %336 = arith.mulf %328, %335 : vector<8x64xf32>
    %337 = arith.addf %312, %336 : vector<8x64xf32>
    %c0_97 = arith.constant 0 : index
    %c384_98 = arith.constant 384 : index
    %338 = vector.load %arg5[%c0_97, %c384_98] : memref<64x512xbf16, #tpu.memory_space<vmem>>, vector<64x128xbf16>
    %339 = arith.truncf %319 : vector<8x64xf32> to vector<8x64xbf16>
    %cst_99 = arith.constant dense<0.000000e+00> : vector<8x128xf32>
    %340 = tpu.matmul %339, %338, %cst_99 {dimension_numbers = #tpu.dot_dimension_numbers<[1], [0], [0], [1], [0, 0, 1, 1], [], []>} : vector<8x64xbf16>, vector<64x128xbf16>, vector<8x128xf32> -> vector<8x128xf32>
    %341 = vector.extract_strided_slice %340 {offsets = [0, 0], sizes = [8, 64], strides = [1, 1]} : vector<8x128xf32> to vector<8x64xf32>
    %342 = arith.negf %341 : vector<8x64xf32>
    %343 = math.exp %342 : vector<8x64xf32>
    %cst_100 = arith.constant 1.000000e+00 : f32
    %344 = vector.broadcast %cst_100 : f32 to vector<8x64xf32>
    %345 = arith.addf %344, %343 : vector<8x64xf32>
    %346 = arith.divf %344, %345 : vector<8x64xf32>
    %347 = vector.extract_strided_slice %340 {offsets = [0, 64], sizes = [8, 64], strides = [1, 1]} : vector<8x128xf32> to vector<8x64xf32>
    %348 = arith.subf %347, %319 : vector<8x64xf32>
    %349 = arith.mulf %346, %348 : vector<8x64xf32>
    %350 = arith.addf %319, %349 : vector<8x64xf32>
    %351 = arith.addf %312, %319 : vector<8x64xf32>
    %352 = arith.addf %351, %337 : vector<8x64xf32>
    %353 = arith.addf %352, %350 : vector<8x64xf32>
    %cst_101 = arith.constant 2.500000e-01 : f32
    %354 = vector.broadcast %cst_101 : f32 to vector<8x64xf32>
    %355 = arith.mulf %353, %354 : vector<8x64xf32>
    %356 = arith.truncf %355 : vector<8x64xf32> to vector<8x64xbf16>
    %c0_102 = arith.constant 0 : index
    %c0_103 = arith.constant 0 : index
    %357 = vector.load %arg3[%c0_102, %c0_103] : memref<64x64xbf16, #tpu.memory_space<vmem>>, vector<64x64xbf16>
    %cst_104 = arith.constant dense<0.000000e+00> : vector<8x64xf32>
    %358 = tpu.matmul %356, %357, %cst_104 {dimension_numbers = #tpu.dot_dimension_numbers<[1], [0], [0], [1], [0, 0, 1, 1], [], []>} : vector<8x64xbf16>, vector<64x64xbf16>, vector<8x64xf32> -> vector<8x64xf32>
    %359 = vector.broadcast %10 : vector<1x64xf32> to vector<8x64xf32>
    %360 = arith.addf %358, %359 : vector<8x64xf32>
    %cst_105 = arith.constant dense<0xFF800000> : vector<8xf32>
    %361 = vector.multi_reduction <maximumf>, %360, %cst_105 [1] : vector<8x64xf32> to vector<8xf32>
    %362 = vector.shape_cast %361 : vector<8xf32> to vector<8x1xf32>
    %363 = vector.broadcast %362 : vector<8x1xf32> to vector<8x64xf32>
    %364 = arith.subf %360, %363 : vector<8x64xf32>
    %365 = math.exp %364 : vector<8x64xf32>
    %cst_106 = arith.constant dense<0.000000e+00> : vector<8xf32>
    %366 = vector.multi_reduction <add>, %365, %cst_106 [1] : vector<8x64xf32> to vector<8xf32>
    %367 = vector.shape_cast %366 : vector<8xf32> to vector<8x1xf32>
    %368 = math.log %367 : vector<8x1xf32>
    %369 = vector.broadcast %368 : vector<8x1xf32> to vector<8x64xf32>
    %370 = arith.subf %364, %369 : vector<8x64xf32>
    %c24 = arith.constant 24 : index
    %c0_107 = arith.constant 0 : index
    %371 = vector.load %arg7[%c24, %c0_107] : memref<64x64xf32, #tpu.memory_space<vmem>>, vector<8x64xf32>
    tpu.vector_store %arg7[%c24, %c0_107], %370 {strides = array<i32>} : memref<64x64xf32, #tpu.memory_space<vmem>>, vector<8x64xf32>,
    %372 = vector.extract_strided_slice %9 {offsets = [32, 0], sizes = [8, 64], strides = [1, 1]} : vector<64x64xf32> to vector<8x64xf32>
    %373 = tpu.concatenate %372, %355 in 1 : vector<8x64xf32>, vector<8x64xf32> -> vector<8x128xf32>
    %374 = arith.truncf %373 : vector<8x128xf32> to vector<8x128xbf16>
    %c0_108 = arith.constant 0 : index
    %c0_109 = arith.constant 0 : index
    %375 = vector.load %arg4[%c0_108, %c0_109] : memref<128x128xbf16, #tpu.memory_space<vmem>>, vector<128x128xbf16>
    %cst_110 = arith.constant dense<0.000000e+00> : vector<8x128xf32>
    %376 = tpu.matmul %374, %375, %cst_110 {dimension_numbers = #tpu.dot_dimension_numbers<[1], [0], [0], [1], [0, 0, 1, 1], [], []>} : vector<8x128xbf16>, vector<128x128xbf16>, vector<8x128xf32> -> vector<8x128xf32>
    %377 = vector.extract_strided_slice %376 {offsets = [0, 0], sizes = [8, 64], strides = [1, 1]} : vector<8x128xf32> to vector<8x64xf32>
    %378 = arith.negf %377 : vector<8x64xf32>
    %379 = math.exp %378 : vector<8x64xf32>
    %cst_111 = arith.constant 1.000000e+00 : f32
    %380 = vector.broadcast %cst_111 : f32 to vector<8x64xf32>
    %381 = arith.addf %380, %379 : vector<8x64xf32>
    %382 = arith.divf %380, %381 : vector<8x64xf32>
    %383 = vector.extract_strided_slice %376 {offsets = [0, 64], sizes = [8, 64], strides = [1, 1]} : vector<8x128xf32> to vector<8x64xf32>
    %384 = math.tanh %383 : vector<8x64xf32>
    %385 = arith.subf %384, %355 : vector<8x64xf32>
    %386 = arith.mulf %382, %385 : vector<8x64xf32>
    %387 = arith.addf %355, %386 : vector<8x64xf32>
    %c0_112 = arith.constant 0 : index
    %c0_113 = arith.constant 0 : index
    %388 = vector.load %arg5[%c0_112, %c0_113] : memref<64x512xbf16, #tpu.memory_space<vmem>>, vector<64x256xbf16>
    %389 = arith.truncf %387 : vector<8x64xf32> to vector<8x64xbf16>
    %cst_114 = arith.constant dense<0.000000e+00> : vector<8x256xf32>
    %390 = tpu.matmul %389, %388, %cst_114 {dimension_numbers = #tpu.dot_dimension_numbers<[1], [0], [0], [1], [0, 0, 1, 1], [], []>} : vector<8x64xbf16>, vector<64x256xbf16>, vector<8x256xf32> -> vector<8x256xf32>
    %391 = vector.extract_strided_slice %390 {offsets = [0, 0], sizes = [8, 128], strides = [1, 1]} : vector<8x256xf32> to vector<8x128xf32>
    %392 = arith.negf %391 : vector<8x128xf32>
    %393 = math.exp %392 : vector<8x128xf32>
    %cst_115 = arith.constant 1.000000e+00 : f32
    %394 = vector.broadcast %cst_115 : f32 to vector<8x128xf32>
    %395 = arith.addf %394, %393 : vector<8x128xf32>
    %396 = arith.divf %394, %395 : vector<8x128xf32>
    %397 = vector.extract_strided_slice %396 {offsets = [0, 0], sizes = [8, 64], strides = [1, 1]} : vector<8x128xf32> to vector<8x64xf32>
    %398 = vector.extract_strided_slice %390 {offsets = [0, 128], sizes = [8, 64], strides = [1, 1]} : vector<8x256xf32> to vector<8x64xf32>
    %399 = math.tanh %398 : vector<8x64xf32>
    %400 = arith.subf %399, %387 : vector<8x64xf32>
    %401 = arith.mulf %397, %400 : vector<8x64xf32>
    %402 = arith.addf %387, %401 : vector<8x64xf32>
    %403 = vector.extract_strided_slice %396 {offsets = [0, 64], sizes = [8, 64], strides = [1, 1]} : vector<8x128xf32> to vector<8x64xf32>
    %404 = vector.extract_strided_slice %390 {offsets = [0, 192], sizes = [8, 64], strides = [1, 1]} : vector<8x256xf32> to vector<8x64xf32>
    %cst_116 = arith.constant 0.000000e+00 : f32
    %405 = vector.broadcast %cst_116 : f32 to vector<8x64xf32>
    %406 = arith.maximumf %404, %405 : vector<8x64xf32>
    %407 = arith.subf %406, %387 : vector<8x64xf32>
    %408 = arith.mulf %403, %407 : vector<8x64xf32>
    %409 = arith.addf %387, %408 : vector<8x64xf32>
    %c0_117 = arith.constant 0 : index
    %c256_118 = arith.constant 256 : index
    %410 = vector.load %arg5[%c0_117, %c256_118] : memref<64x512xbf16, #tpu.memory_space<vmem>>, vector<64x128xbf16>
    %411 = arith.truncf %402 : vector<8x64xf32> to vector<8x64xbf16>
    %cst_119 = arith.constant dense<0.000000e+00> : vector<8x128xf32>
    %412 = tpu.matmul %411, %410, %cst_119 {dimension_numbers = #tpu.dot_dimension_numbers<[1], [0], [0], [1], [0, 0, 1, 1], [], []>} : vector<8x64xbf16>, vector<64x128xbf16>, vector<8x128xf32> -> vector<8x128xf32>
    %413 = vector.extract_strided_slice %412 {offsets = [0, 0], sizes = [8, 64], strides = [1, 1]} : vector<8x128xf32> to vector<8x64xf32>
    %414 = arith.negf %413 : vector<8x64xf32>
    %415 = math.exp %414 : vector<8x64xf32>
    %cst_120 = arith.constant 1.000000e+00 : f32
    %416 = vector.broadcast %cst_120 : f32 to vector<8x64xf32>
    %417 = arith.addf %416, %415 : vector<8x64xf32>
    %418 = arith.divf %416, %417 : vector<8x64xf32>
    %419 = vector.extract_strided_slice %412 {offsets = [0, 64], sizes = [8, 64], strides = [1, 1]} : vector<8x128xf32> to vector<8x64xf32>
    %420 = arith.negf %419 : vector<8x64xf32>
    %421 = math.exp %420 : vector<8x64xf32>
    %cst_121 = arith.constant 1.000000e+00 : f32
    %422 = vector.broadcast %cst_121 : f32 to vector<8x64xf32>
    %423 = arith.addf %422, %421 : vector<8x64xf32>
    %424 = arith.divf %422, %423 : vector<8x64xf32>
    %425 = arith.subf %424, %402 : vector<8x64xf32>
    %426 = arith.mulf %418, %425 : vector<8x64xf32>
    %427 = arith.addf %402, %426 : vector<8x64xf32>
    %c0_122 = arith.constant 0 : index
    %c384_123 = arith.constant 384 : index
    %428 = vector.load %arg5[%c0_122, %c384_123] : memref<64x512xbf16, #tpu.memory_space<vmem>>, vector<64x128xbf16>
    %429 = arith.truncf %409 : vector<8x64xf32> to vector<8x64xbf16>
    %cst_124 = arith.constant dense<0.000000e+00> : vector<8x128xf32>
    %430 = tpu.matmul %429, %428, %cst_124 {dimension_numbers = #tpu.dot_dimension_numbers<[1], [0], [0], [1], [0, 0, 1, 1], [], []>} : vector<8x64xbf16>, vector<64x128xbf16>, vector<8x128xf32> -> vector<8x128xf32>
    %431 = vector.extract_strided_slice %430 {offsets = [0, 0], sizes = [8, 64], strides = [1, 1]} : vector<8x128xf32> to vector<8x64xf32>
    %432 = arith.negf %431 : vector<8x64xf32>
    %433 = math.exp %432 : vector<8x64xf32>
    %cst_125 = arith.constant 1.000000e+00 : f32
    %434 = vector.broadcast %cst_125 : f32 to vector<8x64xf32>
    %435 = arith.addf %434, %433 : vector<8x64xf32>
    %436 = arith.divf %434, %435 : vector<8x64xf32>
    %437 = vector.extract_strided_slice %430 {offsets = [0, 64], sizes = [8, 64], strides = [1, 1]} : vector<8x128xf32> to vector<8x64xf32>
    %438 = arith.subf %437, %409 : vector<8x64xf32>
    %439 = arith.mulf %436, %438 : vector<8x64xf32>
    %440 = arith.addf %409, %439 : vector<8x64xf32>
    %441 = arith.addf %402, %409 : vector<8x64xf32>
    %442 = arith.addf %441, %427 : vector<8x64xf32>
    %443 = arith.addf %442, %440 : vector<8x64xf32>
    %cst_126 = arith.constant 2.500000e-01 : f32
    %444 = vector.broadcast %cst_126 : f32 to vector<8x64xf32>
    %445 = arith.mulf %443, %444 : vector<8x64xf32>
    %446 = arith.truncf %445 : vector<8x64xf32> to vector<8x64xbf16>
    %c0_127 = arith.constant 0 : index
    %c0_128 = arith.constant 0 : index
    %447 = vector.load %arg3[%c0_127, %c0_128] : memref<64x64xbf16, #tpu.memory_space<vmem>>, vector<64x64xbf16>
    %cst_129 = arith.constant dense<0.000000e+00> : vector<8x64xf32>
    %448 = tpu.matmul %446, %447, %cst_129 {dimension_numbers = #tpu.dot_dimension_numbers<[1], [0], [0], [1], [0, 0, 1, 1], [], []>} : vector<8x64xbf16>, vector<64x64xbf16>, vector<8x64xf32> -> vector<8x64xf32>
    %449 = vector.broadcast %10 : vector<1x64xf32> to vector<8x64xf32>
    %450 = arith.addf %448, %449 : vector<8x64xf32>
    %cst_130 = arith.constant dense<0xFF800000> : vector<8xf32>
    %451 = vector.multi_reduction <maximumf>, %450, %cst_130 [1] : vector<8x64xf32> to vector<8xf32>
    %452 = vector.shape_cast %451 : vector<8xf32> to vector<8x1xf32>
    %453 = vector.broadcast %452 : vector<8x1xf32> to vector<8x64xf32>
    %454 = arith.subf %450, %453 : vector<8x64xf32>
    %455 = math.exp %454 : vector<8x64xf32>
    %cst_131 = arith.constant dense<0.000000e+00> : vector<8xf32>
    %456 = vector.multi_reduction <add>, %455, %cst_131 [1] : vector<8x64xf32> to vector<8xf32>
    %457 = vector.shape_cast %456 : vector<8xf32> to vector<8x1xf32>
    %458 = math.log %457 : vector<8x1xf32>
    %459 = vector.broadcast %458 : vector<8x1xf32> to vector<8x64xf32>
    %460 = arith.subf %454, %459 : vector<8x64xf32>
    %c32 = arith.constant 32 : index
    %c0_132 = arith.constant 0 : index
    %461 = vector.load %arg7[%c32, %c0_132] : memref<64x64xf32, #tpu.memory_space<vmem>>, vector<8x64xf32>
    tpu.vector_store %arg7[%c32, %c0_132], %460 {strides = array<i32>} : memref<64x64xf32, #tpu.memory_space<vmem>>, vector<8x64xf32>,
    %462 = vector.extract_strided_slice %9 {offsets = [40, 0], sizes = [8, 64], strides = [1, 1]} : vector<64x64xf32> to vector<8x64xf32>
    %463 = tpu.concatenate %462, %445 in 1 : vector<8x64xf32>, vector<8x64xf32> -> vector<8x128xf32>
    %464 = arith.truncf %463 : vector<8x128xf32> to vector<8x128xbf16>
    %c0_133 = arith.constant 0 : index
    %c0_134 = arith.constant 0 : index
    %465 = vector.load %arg4[%c0_133, %c0_134] : memref<128x128xbf16, #tpu.memory_space<vmem>>, vector<128x128xbf16>
    %cst_135 = arith.constant dense<0.000000e+00> : vector<8x128xf32>
    %466 = tpu.matmul %464, %465, %cst_135 {dimension_numbers = #tpu.dot_dimension_numbers<[1], [0], [0], [1], [0, 0, 1, 1], [], []>} : vector<8x128xbf16>, vector<128x128xbf16>, vector<8x128xf32> -> vector<8x128xf32>
    %467 = vector.extract_strided_slice %466 {offsets = [0, 0], sizes = [8, 64], strides = [1, 1]} : vector<8x128xf32> to vector<8x64xf32>
    %468 = arith.negf %467 : vector<8x64xf32>
    %469 = math.exp %468 : vector<8x64xf32>
    %cst_136 = arith.constant 1.000000e+00 : f32
    %470 = vector.broadcast %cst_136 : f32 to vector<8x64xf32>
    %471 = arith.addf %470, %469 : vector<8x64xf32>
    %472 = arith.divf %470, %471 : vector<8x64xf32>
    %473 = vector.extract_strided_slice %466 {offsets = [0, 64], sizes = [8, 64], strides = [1, 1]} : vector<8x128xf32> to vector<8x64xf32>
    %474 = math.tanh %473 : vector<8x64xf32>
    %475 = arith.subf %474, %445 : vector<8x64xf32>
    %476 = arith.mulf %472, %475 : vector<8x64xf32>
    %477 = arith.addf %445, %476 : vector<8x64xf32>
    %c0_137 = arith.constant 0 : index
    %c0_138 = arith.constant 0 : index
    %478 = vector.load %arg5[%c0_137, %c0_138] : memref<64x512xbf16, #tpu.memory_space<vmem>>, vector<64x256xbf16>
    %479 = arith.truncf %477 : vector<8x64xf32> to vector<8x64xbf16>
    %cst_139 = arith.constant dense<0.000000e+00> : vector<8x256xf32>
    %480 = tpu.matmul %479, %478, %cst_139 {dimension_numbers = #tpu.dot_dimension_numbers<[1], [0], [0], [1], [0, 0, 1, 1], [], []>} : vector<8x64xbf16>, vector<64x256xbf16>, vector<8x256xf32> -> vector<8x256xf32>
    %481 = vector.extract_strided_slice %480 {offsets = [0, 0], sizes = [8, 128], strides = [1, 1]} : vector<8x256xf32> to vector<8x128xf32>
    %482 = arith.negf %481 : vector<8x128xf32>
    %483 = math.exp %482 : vector<8x128xf32>
    %cst_140 = arith.constant 1.000000e+00 : f32
    %484 = vector.broadcast %cst_140 : f32 to vector<8x128xf32>
    %485 = arith.addf %484, %483 : vector<8x128xf32>
    %486 = arith.divf %484, %485 : vector<8x128xf32>
    %487 = vector.extract_strided_slice %486 {offsets = [0, 0], sizes = [8, 64], strides = [1, 1]} : vector<8x128xf32> to vector<8x64xf32>
    %488 = vector.extract_strided_slice %480 {offsets = [0, 128], sizes = [8, 64], strides = [1, 1]} : vector<8x256xf32> to vector<8x64xf32>
    %489 = math.tanh %488 : vector<8x64xf32>
    %490 = arith.subf %489, %477 : vector<8x64xf32>
    %491 = arith.mulf %487, %490 : vector<8x64xf32>
    %492 = arith.addf %477, %491 : vector<8x64xf32>
    %493 = vector.extract_strided_slice %486 {offsets = [0, 64], sizes = [8, 64], strides = [1, 1]} : vector<8x128xf32> to vector<8x64xf32>
    %494 = vector.extract_strided_slice %480 {offsets = [0, 192], sizes = [8, 64], strides = [1, 1]} : vector<8x256xf32> to vector<8x64xf32>
    %cst_141 = arith.constant 0.000000e+00 : f32
    %495 = vector.broadcast %cst_141 : f32 to vector<8x64xf32>
    %496 = arith.maximumf %494, %495 : vector<8x64xf32>
    %497 = arith.subf %496, %477 : vector<8x64xf32>
    %498 = arith.mulf %493, %497 : vector<8x64xf32>
    %499 = arith.addf %477, %498 : vector<8x64xf32>
    %c0_142 = arith.constant 0 : index
    %c256_143 = arith.constant 256 : index
    %500 = vector.load %arg5[%c0_142, %c256_143] : memref<64x512xbf16, #tpu.memory_space<vmem>>, vector<64x128xbf16>
    %501 = arith.truncf %492 : vector<8x64xf32> to vector<8x64xbf16>
    %cst_144 = arith.constant dense<0.000000e+00> : vector<8x128xf32>
    %502 = tpu.matmul %501, %500, %cst_144 {dimension_numbers = #tpu.dot_dimension_numbers<[1], [0], [0], [1], [0, 0, 1, 1], [], []>} : vector<8x64xbf16>, vector<64x128xbf16>, vector<8x128xf32> -> vector<8x128xf32>
    %503 = vector.extract_strided_slice %502 {offsets = [0, 0], sizes = [8, 64], strides = [1, 1]} : vector<8x128xf32> to vector<8x64xf32>
    %504 = arith.negf %503 : vector<8x64xf32>
    %505 = math.exp %504 : vector<8x64xf32>
    %cst_145 = arith.constant 1.000000e+00 : f32
    %506 = vector.broadcast %cst_145 : f32 to vector<8x64xf32>
    %507 = arith.addf %506, %505 : vector<8x64xf32>
    %508 = arith.divf %506, %507 : vector<8x64xf32>
    %509 = vector.extract_strided_slice %502 {offsets = [0, 64], sizes = [8, 64], strides = [1, 1]} : vector<8x128xf32> to vector<8x64xf32>
    %510 = arith.negf %509 : vector<8x64xf32>
    %511 = math.exp %510 : vector<8x64xf32>
    %cst_146 = arith.constant 1.000000e+00 : f32
    %512 = vector.broadcast %cst_146 : f32 to vector<8x64xf32>
    %513 = arith.addf %512, %511 : vector<8x64xf32>
    %514 = arith.divf %512, %513 : vector<8x64xf32>
    %515 = arith.subf %514, %492 : vector<8x64xf32>
    %516 = arith.mulf %508, %515 : vector<8x64xf32>
    %517 = arith.addf %492, %516 : vector<8x64xf32>
    %c0_147 = arith.constant 0 : index
    %c384_148 = arith.constant 384 : index
    %518 = vector.load %arg5[%c0_147, %c384_148] : memref<64x512xbf16, #tpu.memory_space<vmem>>, vector<64x128xbf16>
    %519 = arith.truncf %499 : vector<8x64xf32> to vector<8x64xbf16>
    %cst_149 = arith.constant dense<0.000000e+00> : vector<8x128xf32>
    %520 = tpu.matmul %519, %518, %cst_149 {dimension_numbers = #tpu.dot_dimension_numbers<[1], [0], [0], [1], [0, 0, 1, 1], [], []>} : vector<8x64xbf16>, vector<64x128xbf16>, vector<8x128xf32> -> vector<8x128xf32>
    %521 = vector.extract_strided_slice %520 {offsets = [0, 0], sizes = [8, 64], strides = [1, 1]} : vector<8x128xf32> to vector<8x64xf32>
    %522 = arith.negf %521 : vector<8x64xf32>
    %523 = math.exp %522 : vector<8x64xf32>
    %cst_150 = arith.constant 1.000000e+00 : f32
    %524 = vector.broadcast %cst_150 : f32 to vector<8x64xf32>
    %525 = arith.addf %524, %523 : vector<8x64xf32>
    %526 = arith.divf %524, %525 : vector<8x64xf32>
    %527 = vector.extract_strided_slice %520 {offsets = [0, 64], sizes = [8, 64], strides = [1, 1]} : vector<8x128xf32> to vector<8x64xf32>
    %528 = arith.subf %527, %499 : vector<8x64xf32>
    %529 = arith.mulf %526, %528 : vector<8x64xf32>
    %530 = arith.addf %499, %529 : vector<8x64xf32>
    %531 = arith.addf %492, %499 : vector<8x64xf32>
    %532 = arith.addf %531, %517 : vector<8x64xf32>
    %533 = arith.addf %532, %530 : vector<8x64xf32>
    %cst_151 = arith.constant 2.500000e-01 : f32
    %534 = vector.broadcast %cst_151 : f32 to vector<8x64xf32>
    %535 = arith.mulf %533, %534 : vector<8x64xf32>
    %536 = arith.truncf %535 : vector<8x64xf32> to vector<8x64xbf16>
    %c0_152 = arith.constant 0 : index
    %c0_153 = arith.constant 0 : index
    %537 = vector.load %arg3[%c0_152, %c0_153] : memref<64x64xbf16, #tpu.memory_space<vmem>>, vector<64x64xbf16>
    %cst_154 = arith.constant dense<0.000000e+00> : vector<8x64xf32>
    %538 = tpu.matmul %536, %537, %cst_154 {dimension_numbers = #tpu.dot_dimension_numbers<[1], [0], [0], [1], [0, 0, 1, 1], [], []>} : vector<8x64xbf16>, vector<64x64xbf16>, vector<8x64xf32> -> vector<8x64xf32>
    %539 = vector.broadcast %10 : vector<1x64xf32> to vector<8x64xf32>
    %540 = arith.addf %538, %539 : vector<8x64xf32>
    %cst_155 = arith.constant dense<0xFF800000> : vector<8xf32>
    %541 = vector.multi_reduction <maximumf>, %540, %cst_155 [1] : vector<8x64xf32> to vector<8xf32>
    %542 = vector.shape_cast %541 : vector<8xf32> to vector<8x1xf32>
    %543 = vector.broadcast %542 : vector<8x1xf32> to vector<8x64xf32>
    %544 = arith.subf %540, %543 : vector<8x64xf32>
    %545 = math.exp %544 : vector<8x64xf32>
    %cst_156 = arith.constant dense<0.000000e+00> : vector<8xf32>
    %546 = vector.multi_reduction <add>, %545, %cst_156 [1] : vector<8x64xf32> to vector<8xf32>
    %547 = vector.shape_cast %546 : vector<8xf32> to vector<8x1xf32>
    %548 = math.log %547 : vector<8x1xf32>
    %549 = vector.broadcast %548 : vector<8x1xf32> to vector<8x64xf32>
    %550 = arith.subf %544, %549 : vector<8x64xf32>
    %c40 = arith.constant 40 : index
    %c0_157 = arith.constant 0 : index
    %551 = vector.load %arg7[%c40, %c0_157] : memref<64x64xf32, #tpu.memory_space<vmem>>, vector<8x64xf32>
    tpu.vector_store %arg7[%c40, %c0_157], %550 {strides = array<i32>} : memref<64x64xf32, #tpu.memory_space<vmem>>, vector<8x64xf32>,
    %552 = vector.extract_strided_slice %9 {offsets = [48, 0], sizes = [8, 64], strides = [1, 1]} : vector<64x64xf32> to vector<8x64xf32>
    %553 = tpu.concatenate %552, %535 in 1 : vector<8x64xf32>, vector<8x64xf32> -> vector<8x128xf32>
    %554 = arith.truncf %553 : vector<8x128xf32> to vector<8x128xbf16>
    %c0_158 = arith.constant 0 : index
    %c0_159 = arith.constant 0 : index
    %555 = vector.load %arg4[%c0_158, %c0_159] : memref<128x128xbf16, #tpu.memory_space<vmem>>, vector<128x128xbf16>
    %cst_160 = arith.constant dense<0.000000e+00> : vector<8x128xf32>
    %556 = tpu.matmul %554, %555, %cst_160 {dimension_numbers = #tpu.dot_dimension_numbers<[1], [0], [0], [1], [0, 0, 1, 1], [], []>} : vector<8x128xbf16>, vector<128x128xbf16>, vector<8x128xf32> -> vector<8x128xf32>
    %557 = vector.extract_strided_slice %556 {offsets = [0, 0], sizes = [8, 64], strides = [1, 1]} : vector<8x128xf32> to vector<8x64xf32>
    %558 = arith.negf %557 : vector<8x64xf32>
    %559 = math.exp %558 : vector<8x64xf32>
    %cst_161 = arith.constant 1.000000e+00 : f32
    %560 = vector.broadcast %cst_161 : f32 to vector<8x64xf32>
    %561 = arith.addf %560, %559 : vector<8x64xf32>
    %562 = arith.divf %560, %561 : vector<8x64xf32>
    %563 = vector.extract_strided_slice %556 {offsets = [0, 64], sizes = [8, 64], strides = [1, 1]} : vector<8x128xf32> to vector<8x64xf32>
    %564 = math.tanh %563 : vector<8x64xf32>
    %565 = arith.subf %564, %535 : vector<8x64xf32>
    %566 = arith.mulf %562, %565 : vector<8x64xf32>
    %567 = arith.addf %535, %566 : vector<8x64xf32>
    %c0_162 = arith.constant 0 : index
    %c0_163 = arith.constant 0 : index
    %568 = vector.load %arg5[%c0_162, %c0_163] : memref<64x512xbf16, #tpu.memory_space<vmem>>, vector<64x256xbf16>
    %569 = arith.truncf %567 : vector<8x64xf32> to vector<8x64xbf16>
    %cst_164 = arith.constant dense<0.000000e+00> : vector<8x256xf32>
    %570 = tpu.matmul %569, %568, %cst_164 {dimension_numbers = #tpu.dot_dimension_numbers<[1], [0], [0], [1], [0, 0, 1, 1], [], []>} : vector<8x64xbf16>, vector<64x256xbf16>, vector<8x256xf32> -> vector<8x256xf32>
    %571 = vector.extract_strided_slice %570 {offsets = [0, 0], sizes = [8, 128], strides = [1, 1]} : vector<8x256xf32> to vector<8x128xf32>
    %572 = arith.negf %571 : vector<8x128xf32>
    %573 = math.exp %572 : vector<8x128xf32>
    %cst_165 = arith.constant 1.000000e+00 : f32
    %574 = vector.broadcast %cst_165 : f32 to vector<8x128xf32>
    %575 = arith.addf %574, %573 : vector<8x128xf32>
    %576 = arith.divf %574, %575 : vector<8x128xf32>
    %577 = vector.extract_strided_slice %576 {offsets = [0, 0], sizes = [8, 64], strides = [1, 1]} : vector<8x128xf32> to vector<8x64xf32>
    %578 = vector.extract_strided_slice %570 {offsets = [0, 128], sizes = [8, 64], strides = [1, 1]} : vector<8x256xf32> to vector<8x64xf32>
    %579 = math.tanh %578 : vector<8x64xf32>
    %580 = arith.subf %579, %567 : vector<8x64xf32>
    %581 = arith.mulf %577, %580 : vector<8x64xf32>
    %582 = arith.addf %567, %581 : vector<8x64xf32>
    %583 = vector.extract_strided_slice %576 {offsets = [0, 64], sizes = [8, 64], strides = [1, 1]} : vector<8x128xf32> to vector<8x64xf32>
    %584 = vector.extract_strided_slice %570 {offsets = [0, 192], sizes = [8, 64], strides = [1, 1]} : vector<8x256xf32> to vector<8x64xf32>
    %cst_166 = arith.constant 0.000000e+00 : f32
    %585 = vector.broadcast %cst_166 : f32 to vector<8x64xf32>
    %586 = arith.maximumf %584, %585 : vector<8x64xf32>
    %587 = arith.subf %586, %567 : vector<8x64xf32>
    %588 = arith.mulf %583, %587 : vector<8x64xf32>
    %589 = arith.addf %567, %588 : vector<8x64xf32>
    %c0_167 = arith.constant 0 : index
    %c256_168 = arith.constant 256 : index
    %590 = vector.load %arg5[%c0_167, %c256_168] : memref<64x512xbf16, #tpu.memory_space<vmem>>, vector<64x128xbf16>
    %591 = arith.truncf %582 : vector<8x64xf32> to vector<8x64xbf16>
    %cst_169 = arith.constant dense<0.000000e+00> : vector<8x128xf32>
    %592 = tpu.matmul %591, %590, %cst_169 {dimension_numbers = #tpu.dot_dimension_numbers<[1], [0], [0], [1], [0, 0, 1, 1], [], []>} : vector<8x64xbf16>, vector<64x128xbf16>, vector<8x128xf32> -> vector<8x128xf32>
    %593 = vector.extract_strided_slice %592 {offsets = [0, 0], sizes = [8, 64], strides = [1, 1]} : vector<8x128xf32> to vector<8x64xf32>
    %594 = arith.negf %593 : vector<8x64xf32>
    %595 = math.exp %594 : vector<8x64xf32>
    %cst_170 = arith.constant 1.000000e+00 : f32
    %596 = vector.broadcast %cst_170 : f32 to vector<8x64xf32>
    %597 = arith.addf %596, %595 : vector<8x64xf32>
    %598 = arith.divf %596, %597 : vector<8x64xf32>
    %599 = vector.extract_strided_slice %592 {offsets = [0, 64], sizes = [8, 64], strides = [1, 1]} : vector<8x128xf32> to vector<8x64xf32>
    %600 = arith.negf %599 : vector<8x64xf32>
    %601 = math.exp %600 : vector<8x64xf32>
    %cst_171 = arith.constant 1.000000e+00 : f32
    %602 = vector.broadcast %cst_171 : f32 to vector<8x64xf32>
    %603 = arith.addf %602, %601 : vector<8x64xf32>
    %604 = arith.divf %602, %603 : vector<8x64xf32>
    %605 = arith.subf %604, %582 : vector<8x64xf32>
    %606 = arith.mulf %598, %605 : vector<8x64xf32>
    %607 = arith.addf %582, %606 : vector<8x64xf32>
    %c0_172 = arith.constant 0 : index
    %c384_173 = arith.constant 384 : index
    %608 = vector.load %arg5[%c0_172, %c384_173] : memref<64x512xbf16, #tpu.memory_space<vmem>>, vector<64x128xbf16>
    %609 = arith.truncf %589 : vector<8x64xf32> to vector<8x64xbf16>
    %cst_174 = arith.constant dense<0.000000e+00> : vector<8x128xf32>
    %610 = tpu.matmul %609, %608, %cst_174 {dimension_numbers = #tpu.dot_dimension_numbers<[1], [0], [0], [1], [0, 0, 1, 1], [], []>} : vector<8x64xbf16>, vector<64x128xbf16>, vector<8x128xf32> -> vector<8x128xf32>
    %611 = vector.extract_strided_slice %610 {offsets = [0, 0], sizes = [8, 64], strides = [1, 1]} : vector<8x128xf32> to vector<8x64xf32>
    %612 = arith.negf %611 : vector<8x64xf32>
    %613 = math.exp %612 : vector<8x64xf32>
    %cst_175 = arith.constant 1.000000e+00 : f32
    %614 = vector.broadcast %cst_175 : f32 to vector<8x64xf32>
    %615 = arith.addf %614, %613 : vector<8x64xf32>
    %616 = arith.divf %614, %615 : vector<8x64xf32>
    %617 = vector.extract_strided_slice %610 {offsets = [0, 64], sizes = [8, 64], strides = [1, 1]} : vector<8x128xf32> to vector<8x64xf32>
    %618 = arith.subf %617, %589 : vector<8x64xf32>
    %619 = arith.mulf %616, %618 : vector<8x64xf32>
    %620 = arith.addf %589, %619 : vector<8x64xf32>
    %621 = arith.addf %582, %589 : vector<8x64xf32>
    %622 = arith.addf %621, %607 : vector<8x64xf32>
    %623 = arith.addf %622, %620 : vector<8x64xf32>
    %cst_176 = arith.constant 2.500000e-01 : f32
    %624 = vector.broadcast %cst_176 : f32 to vector<8x64xf32>
    %625 = arith.mulf %623, %624 : vector<8x64xf32>
    %626 = arith.truncf %625 : vector<8x64xf32> to vector<8x64xbf16>
    %c0_177 = arith.constant 0 : index
    %c0_178 = arith.constant 0 : index
    %627 = vector.load %arg3[%c0_177, %c0_178] : memref<64x64xbf16, #tpu.memory_space<vmem>>, vector<64x64xbf16>
    %cst_179 = arith.constant dense<0.000000e+00> : vector<8x64xf32>
    %628 = tpu.matmul %626, %627, %cst_179 {dimension_numbers = #tpu.dot_dimension_numbers<[1], [0], [0], [1], [0, 0, 1, 1], [], []>} : vector<8x64xbf16>, vector<64x64xbf16>, vector<8x64xf32> -> vector<8x64xf32>
    %629 = vector.broadcast %10 : vector<1x64xf32> to vector<8x64xf32>
    %630 = arith.addf %628, %629 : vector<8x64xf32>
    %cst_180 = arith.constant dense<0xFF800000> : vector<8xf32>
    %631 = vector.multi_reduction <maximumf>, %630, %cst_180 [1] : vector<8x64xf32> to vector<8xf32>
    %632 = vector.shape_cast %631 : vector<8xf32> to vector<8x1xf32>
    %633 = vector.broadcast %632 : vector<8x1xf32> to vector<8x64xf32>
    %634 = arith.subf %630, %633 : vector<8x64xf32>
    %635 = math.exp %634 : vector<8x64xf32>
    %cst_181 = arith.constant dense<0.000000e+00> : vector<8xf32>
    %636 = vector.multi_reduction <add>, %635, %cst_181 [1] : vector<8x64xf32> to vector<8xf32>
    %637 = vector.shape_cast %636 : vector<8xf32> to vector<8x1xf32>
    %638 = math.log %637 : vector<8x1xf32>
    %639 = vector.broadcast %638 : vector<8x1xf32> to vector<8x64xf32>
    %640 = arith.subf %634, %639 : vector<8x64xf32>
    %c48 = arith.constant 48 : index
    %c0_182 = arith.constant 0 : index
    %641 = vector.load %arg7[%c48, %c0_182] : memref<64x64xf32, #tpu.memory_space<vmem>>, vector<8x64xf32>
    tpu.vector_store %arg7[%c48, %c0_182], %640 {strides = array<i32>} : memref<64x64xf32, #tpu.memory_space<vmem>>, vector<8x64xf32>,
    %642 = vector.extract_strided_slice %9 {offsets = [56, 0], sizes = [8, 64], strides = [1, 1]} : vector<64x64xf32> to vector<8x64xf32>
    %643 = tpu.concatenate %642, %625 in 1 : vector<8x64xf32>, vector<8x64xf32> -> vector<8x128xf32>
    %644 = arith.truncf %643 : vector<8x128xf32> to vector<8x128xbf16>
    %c0_183 = arith.constant 0 : index
    %c0_184 = arith.constant 0 : index
    %645 = vector.load %arg4[%c0_183, %c0_184] : memref<128x128xbf16, #tpu.memory_space<vmem>>, vector<128x128xbf16>
    %cst_185 = arith.constant dense<0.000000e+00> : vector<8x128xf32>
    %646 = tpu.matmul %644, %645, %cst_185 {dimension_numbers = #tpu.dot_dimension_numbers<[1], [0], [0], [1], [0, 0, 1, 1], [], []>} : vector<8x128xbf16>, vector<128x128xbf16>, vector<8x128xf32> -> vector<8x128xf32>
    %647 = vector.extract_strided_slice %646 {offsets = [0, 0], sizes = [8, 64], strides = [1, 1]} : vector<8x128xf32> to vector<8x64xf32>
    %648 = arith.negf %647 : vector<8x64xf32>
    %649 = math.exp %648 : vector<8x64xf32>
    %cst_186 = arith.constant 1.000000e+00 : f32
    %650 = vector.broadcast %cst_186 : f32 to vector<8x64xf32>
    %651 = arith.addf %650, %649 : vector<8x64xf32>
    %652 = arith.divf %650, %651 : vector<8x64xf32>
    %653 = vector.extract_strided_slice %646 {offsets = [0, 64], sizes = [8, 64], strides = [1, 1]} : vector<8x128xf32> to vector<8x64xf32>
    %654 = math.tanh %653 : vector<8x64xf32>
    %655 = arith.subf %654, %625 : vector<8x64xf32>
    %656 = arith.mulf %652, %655 : vector<8x64xf32>
    %657 = arith.addf %625, %656 : vector<8x64xf32>
    %c0_187 = arith.constant 0 : index
    %c0_188 = arith.constant 0 : index
    %658 = vector.load %arg5[%c0_187, %c0_188] : memref<64x512xbf16, #tpu.memory_space<vmem>>, vector<64x256xbf16>
    %659 = arith.truncf %657 : vector<8x64xf32> to vector<8x64xbf16>
    %cst_189 = arith.constant dense<0.000000e+00> : vector<8x256xf32>
    %660 = tpu.matmul %659, %658, %cst_189 {dimension_numbers = #tpu.dot_dimension_numbers<[1], [0], [0], [1], [0, 0, 1, 1], [], []>} : vector<8x64xbf16>, vector<64x256xbf16>, vector<8x256xf32> -> vector<8x256xf32>
    %661 = vector.extract_strided_slice %660 {offsets = [0, 0], sizes = [8, 128], strides = [1, 1]} : vector<8x256xf32> to vector<8x128xf32>
    %662 = arith.negf %661 : vector<8x128xf32>
    %663 = math.exp %662 : vector<8x128xf32>
    %cst_190 = arith.constant 1.000000e+00 : f32
    %664 = vector.broadcast %cst_190 : f32 to vector<8x128xf32>
    %665 = arith.addf %664, %663 : vector<8x128xf32>
    %666 = arith.divf %664, %665 : vector<8x128xf32>
    %667 = vector.extract_strided_slice %666 {offsets = [0, 0], sizes = [8, 64], strides = [1, 1]} : vector<8x128xf32> to vector<8x64xf32>
    %668 = vector.extract_strided_slice %660 {offsets = [0, 128], sizes = [8, 64], strides = [1, 1]} : vector<8x256xf32> to vector<8x64xf32>
    %669 = math.tanh %668 : vector<8x64xf32>
    %670 = arith.subf %669, %657 : vector<8x64xf32>
    %671 = arith.mulf %667, %670 : vector<8x64xf32>
    %672 = arith.addf %657, %671 : vector<8x64xf32>
    %673 = vector.extract_strided_slice %666 {offsets = [0, 64], sizes = [8, 64], strides = [1, 1]} : vector<8x128xf32> to vector<8x64xf32>
    %674 = vector.extract_strided_slice %660 {offsets = [0, 192], sizes = [8, 64], strides = [1, 1]} : vector<8x256xf32> to vector<8x64xf32>
    %cst_191 = arith.constant 0.000000e+00 : f32
    %675 = vector.broadcast %cst_191 : f32 to vector<8x64xf32>
    %676 = arith.maximumf %674, %675 : vector<8x64xf32>
    %677 = arith.subf %676, %657 : vector<8x64xf32>
    %678 = arith.mulf %673, %677 : vector<8x64xf32>
    %679 = arith.addf %657, %678 : vector<8x64xf32>
    %c0_192 = arith.constant 0 : index
    %c256_193 = arith.constant 256 : index
    %680 = vector.load %arg5[%c0_192, %c256_193] : memref<64x512xbf16, #tpu.memory_space<vmem>>, vector<64x128xbf16>
    %681 = arith.truncf %672 : vector<8x64xf32> to vector<8x64xbf16>
    %cst_194 = arith.constant dense<0.000000e+00> : vector<8x128xf32>
    %682 = tpu.matmul %681, %680, %cst_194 {dimension_numbers = #tpu.dot_dimension_numbers<[1], [0], [0], [1], [0, 0, 1, 1], [], []>} : vector<8x64xbf16>, vector<64x128xbf16>, vector<8x128xf32> -> vector<8x128xf32>
    %683 = vector.extract_strided_slice %682 {offsets = [0, 0], sizes = [8, 64], strides = [1, 1]} : vector<8x128xf32> to vector<8x64xf32>
    %684 = arith.negf %683 : vector<8x64xf32>
    %685 = math.exp %684 : vector<8x64xf32>
    %cst_195 = arith.constant 1.000000e+00 : f32
    %686 = vector.broadcast %cst_195 : f32 to vector<8x64xf32>
    %687 = arith.addf %686, %685 : vector<8x64xf32>
    %688 = arith.divf %686, %687 : vector<8x64xf32>
    %689 = vector.extract_strided_slice %682 {offsets = [0, 64], sizes = [8, 64], strides = [1, 1]} : vector<8x128xf32> to vector<8x64xf32>
    %690 = arith.negf %689 : vector<8x64xf32>
    %691 = math.exp %690 : vector<8x64xf32>
    %cst_196 = arith.constant 1.000000e+00 : f32
    %692 = vector.broadcast %cst_196 : f32 to vector<8x64xf32>
    %693 = arith.addf %692, %691 : vector<8x64xf32>
    %694 = arith.divf %692, %693 : vector<8x64xf32>
    %695 = arith.subf %694, %672 : vector<8x64xf32>
    %696 = arith.mulf %688, %695 : vector<8x64xf32>
    %697 = arith.addf %672, %696 : vector<8x64xf32>
    %c0_197 = arith.constant 0 : index
    %c384_198 = arith.constant 384 : index
    %698 = vector.load %arg5[%c0_197, %c384_198] : memref<64x512xbf16, #tpu.memory_space<vmem>>, vector<64x128xbf16>
    %699 = arith.truncf %679 : vector<8x64xf32> to vector<8x64xbf16>
    %cst_199 = arith.constant dense<0.000000e+00> : vector<8x128xf32>
    %700 = tpu.matmul %699, %698, %cst_199 {dimension_numbers = #tpu.dot_dimension_numbers<[1], [0], [0], [1], [0, 0, 1, 1], [], []>} : vector<8x64xbf16>, vector<64x128xbf16>, vector<8x128xf32> -> vector<8x128xf32>
    %701 = vector.extract_strided_slice %700 {offsets = [0, 0], sizes = [8, 64], strides = [1, 1]} : vector<8x128xf32> to vector<8x64xf32>
    %702 = arith.negf %701 : vector<8x64xf32>
    %703 = math.exp %702 : vector<8x64xf32>
    %cst_200 = arith.constant 1.000000e+00 : f32
    %704 = vector.broadcast %cst_200 : f32 to vector<8x64xf32>
    %705 = arith.addf %704, %703 : vector<8x64xf32>
    %706 = arith.divf %704, %705 : vector<8x64xf32>
    %707 = vector.extract_strided_slice %700 {offsets = [0, 64], sizes = [8, 64], strides = [1, 1]} : vector<8x128xf32> to vector<8x64xf32>
    %708 = arith.subf %707, %679 : vector<8x64xf32>
    %709 = arith.mulf %706, %708 : vector<8x64xf32>
    %710 = arith.addf %679, %709 : vector<8x64xf32>
    %711 = arith.addf %672, %679 : vector<8x64xf32>
    %712 = arith.addf %711, %697 : vector<8x64xf32>
    %713 = arith.addf %712, %710 : vector<8x64xf32>
    %cst_201 = arith.constant 2.500000e-01 : f32
    %714 = vector.broadcast %cst_201 : f32 to vector<8x64xf32>
    %715 = arith.mulf %713, %714 : vector<8x64xf32>
    %716 = arith.truncf %715 : vector<8x64xf32> to vector<8x64xbf16>
    %c0_202 = arith.constant 0 : index
    %c0_203 = arith.constant 0 : index
    %717 = vector.load %arg3[%c0_202, %c0_203] : memref<64x64xbf16, #tpu.memory_space<vmem>>, vector<64x64xbf16>
    %cst_204 = arith.constant dense<0.000000e+00> : vector<8x64xf32>
    %718 = tpu.matmul %716, %717, %cst_204 {dimension_numbers = #tpu.dot_dimension_numbers<[1], [0], [0], [1], [0, 0, 1, 1], [], []>} : vector<8x64xbf16>, vector<64x64xbf16>, vector<8x64xf32> -> vector<8x64xf32>
    %719 = vector.broadcast %10 : vector<1x64xf32> to vector<8x64xf32>
    %720 = arith.addf %718, %719 : vector<8x64xf32>
    %cst_205 = arith.constant dense<0xFF800000> : vector<8xf32>
    %721 = vector.multi_reduction <maximumf>, %720, %cst_205 [1] : vector<8x64xf32> to vector<8xf32>
    %722 = vector.shape_cast %721 : vector<8xf32> to vector<8x1xf32>
    %723 = vector.broadcast %722 : vector<8x1xf32> to vector<8x64xf32>
    %724 = arith.subf %720, %723 : vector<8x64xf32>
    %725 = math.exp %724 : vector<8x64xf32>
    %cst_206 = arith.constant dense<0.000000e+00> : vector<8xf32>
    %726 = vector.multi_reduction <add>, %725, %cst_206 [1] : vector<8x64xf32> to vector<8xf32>
    %727 = vector.shape_cast %726 : vector<8xf32> to vector<8x1xf32>
    %728 = math.log %727 : vector<8x1xf32>
    %729 = vector.broadcast %728 : vector<8x1xf32> to vector<8x64xf32>
    %730 = arith.subf %724, %729 : vector<8x64xf32>
    %c56 = arith.constant 56 : index
    %c0_207 = arith.constant 0 : index
    %731 = vector.load %arg7[%c56, %c0_207] : memref<64x64xf32, #tpu.memory_space<vmem>>, vector<8x64xf32>
    tpu.vector_store %arg7[%c56, %c0_207], %730 {strides = array<i32>} : memref<64x64xf32, #tpu.memory_space<vmem>>, vector<8x64xf32>,
    %c0_208 = arith.constant 0 : index
    %c0_209 = arith.constant 0 : index
    %732 = vector.load %arg8[%c0_208, %c0_209] : memref<8x64xf32, #tpu.memory_space<vmem>>, vector<8x64xf32>
    tpu.vector_store %arg8[%c0_208, %c0_209], %715 {strides = array<i32>} : memref<8x64xf32, #tpu.memory_space<vmem>>, vector<8x64xf32>,
    return
  }
}

</mosaic_0001>

<llo_original>
// kernel: rnn_model_forward.1
$region0: #{rnn_model_forward.1}
  #allocation0 [shape = 'u32[]', space=smem, size = 0x4, offset = 0x4, fixed_abs, tag = 'smem constant byte address 0x4 - core index']
  #allocation1 [shape = 'u32[144,128]{1,0:T(1,128)}', space=vmem, size = 0x12000, scoped, tag = 'internal scratch']
  %s0 = inlined_call_operand.vmem [shape: s32[64,1], index: 0, kind: input, shape index: {}]
  %s1 = inlined_call_operand.vmem [shape: f32[8,64], index: 1, kind: input, shape index: {}]
  %s2 = inlined_call_operand.hbm [shape: bf16[64,64], index: 2, kind: input, shape index: {}]
  %s3 = inlined_call_operand.hbm [shape: bf16[64,64], index: 3, kind: input, shape index: {}]
  %s4 = inlined_call_operand.vmem [shape: bf16[128,128], index: 4, kind: input, shape index: {}]
  %s5 = inlined_call_operand.hbm [shape: bf16[64,512], index: 5, kind: input, shape index: {}]
  %s6 = inlined_call_operand.vmem [shape: f32[1,64], index: 6, kind: input, shape index: {}]
  %s7 = inlined_call_operand.hbm [shape: f32[64,64], index: 7, kind: output, shape index: {0}]
  %s8 = inlined_call_operand.hbm [shape: f32[8,64], index: 8, kind: output, shape index: {1}]
  %9 = xla_tuple %s7, %s8
  %s10 = sld [smem:[#allocation0]]
  $region58: #{rnn_model_forward.1} parent=0
    _
  %s12 = ssub.s32 1, %s10
  %s13 = scalar_select 0, %s12, %s10
  $region1: #{rnn_model_forward.1} parent=0
    #allocation2 [shape = 'u8[16384]{0}', space=vmem, size = 0x4000, scoped, tag = 'input window, operand 2, single buffered']
    #allocation3 [shape = 's32[1]{0}', space=sflag, size = 0x4, scoped, tag = 'scoped memory for rnn_model_forward.1']
    #allocation4 [shape = 's32[1]{0}', space=sflag, size = 0x4, scoped, tag = 'scoped memory for rnn_model_forward.1']
    #allocation5 [shape = 'u8[16384]{0}', space=vmem, size = 0x4000, scoped, tag = 'input window, operand 3, single buffered']
    #allocation6 [shape = 's32[1]{0}', space=sflag, size = 0x4, scoped, tag = 'scoped memory for rnn_model_forward.1']
    #allocation7 [shape = 'u8[65536]{0}', space=vmem, size = 0x10000, scoped, tag = 'input window, operand 5, single buffered']
    #allocation8 [shape = 'u8[32768]{0}', space=vmem, size = 0x8000, scoped, tag = 'output window, operand 0, single buffered']
    #allocation9 [shape = 'u8[4096]{0}', space=vmem, size = 0x1000, scoped, tag = 'output window, operand 1, single buffered']
    #allocation10 [shape = 's32[1]{0}', space=sflag, size = 0x4, scoped, tag = 'scoped memory for rnn_model_forward.1']
    %14 = vsyncpa [#allocation3], 0
    %15 = vsyncpa [#allocation6], 0
    %16 = vsyncpa [#allocation4], 0
    %17 = vsyncpa [#allocation10], 0
    // Predicated region
    $region2: #{rnn_model_forward.1} parent=1 // pred_check
      _
    $region3: #{rnn_model_forward.1} parent=1 // pred_check_branch
      %19 = sbr.rel (0) target = $region5
    $region4: #{rnn_model_forward.1} parent=1 // pred_region
      _
    $region5: #{rnn_model_forward.1} parent=1 // pred_fallthru
      _
    // Predicated region
    $region6: #{rnn_model_forward.1} parent=1 // pred_check
      _
    $region7: #{rnn_model_forward.1} parent=1 // pred_check_branch
      %21 = sbr.rel (0) target = $region9
    $region8: #{rnn_model_forward.1} parent=1 // pred_region
      _
    $region9: #{rnn_model_forward.1} parent=1 // pred_fallthru
      _
    // Predicated region
    $region10: #{rnn_model_forward.1} parent=1 // pred_check
      _
    $region11: #{rnn_model_forward.1} parent=1 // pred_check_branch
      %23 = sbr.rel (0) target = $region13
    $region12: #{rnn_model_forward.1} parent=1 // pred_region
      %s25 = ssub.s32 512, 512
      %26 = vsyncadd [#allocation3], %s25
      %s27 = sshll.u32 [#allocation2], 4
      %s28 = int_to_ptr.vmem [resolvable:$true] %s27
      %33 = dma.hbm_to_vmem [thread:$0]  %s2, 512, %s28, [#allocation3], 64, 64, 4
    $region13: #{rnn_model_forward.1} parent=1 // pred_fallthru
      _
    // Predicated region
    $region14: #{rnn_model_forward.1} parent=1 // pred_check
      _
    $region15: #{rnn_model_forward.1} parent=1 // pred_check_branch
      %35 = sbr.rel (0) target = $region17
    $region16: #{rnn_model_forward.1} parent=1 // pred_region
      %s37 = ssub.s32 512, 512
      %38 = vsyncadd [#allocation6], %s37
      %s39 = sshll.u32 [#allocation5], 4
      %s40 = int_to_ptr.vmem [resolvable:$true] %s39
      %45 = dma.hbm_to_vmem [thread:$0]  %s3, 512, %s40, [#allocation6], 64, 64, 4
    $region17: #{rnn_model_forward.1} parent=1 // pred_fallthru
      _
    // Predicated region
    $region18: #{rnn_model_forward.1} parent=1 // pred_check
      _
    $region19: #{rnn_model_forward.1} parent=1 // pred_check_branch
      %47 = sbr.rel (0) target = $region21
    $region20: #{rnn_model_forward.1} parent=1 // pred_region
      _
    $region21: #{rnn_model_forward.1} parent=1 // pred_fallthru
      _
    // Predicated region
    $region22: #{rnn_model_forward.1} parent=1 // pred_check
      _
    $region23: #{rnn_model_forward.1} parent=1 // pred_check_branch
      %49 = sbr.rel (0) target = $region25
    $region24: #{rnn_model_forward.1} parent=1 // pred_region
      %s51 = ssub.s32 2048, 2048
      %52 = vsyncadd [#allocation6], %s51
      %s53 = sshll.u32 [#allocation7], 4
      %s54 = int_to_ptr.vmem [resolvable:$true] %s53
      %59 = dma.hbm_to_vmem [thread:$0]  %s5, 2048, %s54, [#allocation6], 256, 256, 16
    $region25: #{rnn_model_forward.1} parent=1 // pred_fallthru
      _
    // Predicated region
    $region26: #{rnn_model_forward.1} parent=1 // pred_check
      _
    $region27: #{rnn_model_forward.1} parent=1 // pred_check_branch
      %61 = sbr.rel (0) target = $region29
    $region28: #{rnn_model_forward.1} parent=1 // pred_region
      _
    $region29: #{rnn_model_forward.1} parent=1 // pred_fallthru
      _
    // Predicated region
    $region30: #{rnn_model_forward.1} parent=1 // pred_check
      _
    $region31: #{rnn_model_forward.1} parent=1 // pred_check_branch
      %63 = sbr.rel (0) target = $region33
    $region32: #{rnn_model_forward.1} parent=1 // pred_region
      %64 = dma.done [#allocation3], 512
    $region33: #{rnn_model_forward.1} parent=1 // pred_fallthru
      _
    // Predicated region
    $region34: #{rnn_model_forward.1} parent=1 // pred_check
      _
    $region35: #{rnn_model_forward.1} parent=1 // pred_check_branch
      %66 = sbr.rel (0) target = $region37
    $region36: #{rnn_model_forward.1} parent=1 // pred_region
      %67 = dma.done [#allocation6], 512
    $region37: #{rnn_model_forward.1} parent=1 // pred_fallthru
      _
    // Predicated region
    $region38: #{rnn_model_forward.1} parent=1 // pred_check
      _
    $region39: #{rnn_model_forward.1} parent=1 // pred_check_branch
      %69 = sbr.rel (0) target = $region41
    $region40: #{rnn_model_forward.1} parent=1 // pred_region
      %70 = dma.done [#allocation6], 2048
    $region41: #{rnn_model_forward.1} parent=1 // pred_fallthru
      _
    %v72 = vld [vmem:[%s0] sm:$0xff]
    %v73 = vld [vmem:[%s0 + $0x8] sm:$0xff]
    %v74 = vld [vmem:[%s0 + $0x10] sm:$0xff]
    %v75 = vld [vmem:[%s0 + $0x18] sm:$0xff]
    %v76 = vld [vmem:[%s0 + $0x20] sm:$0xff]
    %v77 = vld [vmem:[%s0 + $0x28] sm:$0xff]
    %v78 = vld [vmem:[%s0 + $0x30] sm:$0xff]
    %v79 = vld [vmem:[%s0 + $0x38] sm:$0xff]
    %v80 = vlaneseq
    %v81 = vand.u32 %v80, 127
    %82 = vset.pattern.permute.xlu0 0
    %83 = vperm.xlu0 %82, %v72
    %v84 = vpop.permute.xlu0 %83
    %85 = vset.pattern.permute.xlu0 0
    %86 = vperm.xlu0 %85, %v73
    %v87 = vpop.permute.xlu0 %86
    %88 = vset.pattern.permute.xlu0 0
    %89 = vperm.xlu0 %88, %v74
    %v90 = vpop.permute.xlu0 %89
    %91 = vset.pattern.permute.xlu0 0
    %92 = vperm.xlu0 %91, %v75
    %v93 = vpop.permute.xlu0 %92
    %94 = vset.pattern.permute.xlu0 0
    %95 = vperm.xlu0 %94, %v76
    %v96 = vpop.permute.xlu0 %95
    %97 = vset.pattern.permute.xlu0 0
    %98 = vperm.xlu0 %97, %v77
    %v99 = vpop.permute.xlu0 %98
    %100 = vset.pattern.permute.xlu0 0
    %101 = vperm.xlu0 %100, %v78
    %v102 = vpop.permute.xlu0 %101
    %103 = vset.pattern.permute.xlu0 0
    %104 = vperm.xlu0 %103, %v79
    %v105 = vpop.permute.xlu0 %104
    %vm106 = vcmp.eq.s32.totalorder %v81, %v84
    %vm107 = vcmp.eq.s32.totalorder %v81, %v87
    %vm108 = vcmp.eq.s32.totalorder %v81, %v90
    %vm109 = vcmp.eq.s32.totalorder %v81, %v93
    %vm110 = vcmp.eq.s32.totalorder %v81, %v96
    %vm111 = vcmp.eq.s32.totalorder %v81, %v99
    %vm112 = vcmp.eq.s32.totalorder %v81, %v102
    %vm113 = vcmp.eq.s32.totalorder %v81, %v105
    %v114 = vsel %vm106, 1.0, 0.0
    %v115 = vsel %vm107, 1.0, 0.0
    %v116 = vsel %vm108, 1.0, 0.0
    %v117 = vsel %vm109, 1.0, 0.0
    %v118 = vsel %vm110, 1.0, 0.0
    %v119 = vsel %vm111, 1.0, 0.0
    %v120 = vsel %vm112, 1.0, 0.0
    %v121 = vsel %vm113, 1.0, 0.0
    %v122 = vpack.c.bf16 %v115, %v114
    %v123 = vpack.c.bf16 %v117, %v116
    %v124 = vpack.c.bf16 %v119, %v118
    %v125 = vpack.c.bf16 %v121, %v120
    %v126 = vld [vmem:[#allocation2] sm:$0xf]
    %v127 = vld [vmem:[#allocation2 + $0x4] sm:$0xf]
    %v128 = vld [vmem:[#allocation2 + $0x8] sm:$0xf]
    %v129 = vld [vmem:[#allocation2 + $0xc] sm:$0xf]
    %v130 = vld [vmem:[#allocation2 + $0x10] sm:$0xf]
    %v131 = vld [vmem:[#allocation2 + $0x14] sm:$0xf]
    %v132 = vld [vmem:[#allocation2 + $0x18] sm:$0xf]
    %v133 = vld [vmem:[#allocation2 + $0x1c] sm:$0xf]
    %v142 = vunpack.c.l.b16 %v126
    %v143 = vunpack.c.l.b16 %v127
    %v144 = vunpack.c.l.b16 %v128
    %v145 = vunpack.c.l.b16 %v129
    %v146 = vunpack.c.l.b16 %v130
    %v147 = vunpack.c.l.b16 %v131
    %v148 = vunpack.c.l.b16 %v132
    %v149 = vunpack.c.l.b16 %v133
    %v150 = vpack.c.b16 %v143, %v142
    %v151 = vpack.c.b16 %v145, %v144
    %v152 = vpack.c.b16 %v147, %v146
    %v153 = vpack.c.b16 %v149, %v148
    %vm158 = vcmask 523264
    %v160 = vsel %vm158, %v122, 0
    %v163 = vsel %vm158, %v123, 0
    %v166 = vsel %vm158, %v124, 0
    %v169 = vsel %vm158, %v125, 0
    %171 = vmatprep.subr.bf16.mxu0 0
    %172 = vmatpush1.bf16.msra.mxu0 %v150
    %173 = vmatprep.subr.bf16.mxu0 0
    %174 = vmatpush1.bf16.msra.mxu0 %v151
    %175 = vmatprep.subr.bf16.mxu0 0
    %176 = vmatpush1.bf16.msra.mxu0 %v152
    %177 = vmatprep.subr.bf16.mxu0 0
    %178 = vmatpush1.bf16.msra.mxu0 %v153
    %179 = vmatprep.subr.bf16.mxu0 0
    %180 = vmatpush1.bf16.msra.mxu0 0
    %181 = vmatprep.subr.bf16.mxu0 0
    %182 = vmatpush1.bf16.msra.mxu0 0
    %183 = vmatprep.subr.bf16.mxu0 0
    %184 = vmatpush1.bf16.msra.mxu0 0
    %185 = vmatprep.subr.bf16.mxu0 0
    %186 = vmatpush1.bf16.msra.mxu0 0
    %187 = vmatprep.subr.bf16.mxu0 0
    %188 = vmatpush1.bf16.msra.mxu0 0
    %189 = vmatprep.subr.bf16.mxu0 0
    %190 = vmatpush1.bf16.msra.mxu0 0
    %191 = vmatprep.subr.bf16.mxu0 0
    %192 = vmatpush1.bf16.msra.mxu0 0
    %193 = vmatprep.subr.bf16.mxu0 0
    %194 = vmatpush1.bf16.msra.mxu0 0
    %195 = vmatprep.subr.bf16.mxu0 0
    %196 = vmatpush1.bf16.msra.mxu0 0
    %197 = vmatprep.subr.bf16.mxu0 0
    %198 = vmatpush1.bf16.msra.mxu0 0
    %199 = vmatprep.subr.bf16.mxu0 0
    %200 = vmatpush1.bf16.msra.mxu0 0
    %201 = vmatprep.subr.bf16.mxu0 0
    %202 = vmatpush1.bf16.msra.mxu0 0
    %203 = vmatprep.mubr.bf16.mxu0 0
    %204 = vmatmul.mubr.bf16.gmra.mrb[0].mxu0 %v160
    %v205 = vpop.f32.mrb[0].mxu0
    %v206 = vadd.f32 0.0, %v205
    %v207 = vpop.f32.mrb[0].mxu0
    %v208 = vpop.f32.mrb[0].mxu0
    %v209 = vadd.f32 0.0, %v208
    %v210 = vpop.f32.mrb[0].mxu0
    %211 = vmatprep.mubr.bf16.mxu0 0
    %212 = vmatmul.mubr.bf16.gmra.mrb[0].mxu0 %v163
    %v213 = vpop.f32.mrb[0].mxu0
    %v214 = vadd.f32 0.0, %v213
    %v215 = vpop.f32.mrb[0].mxu0
    %v216 = vpop.f32.mrb[0].mxu0
    %v217 = vadd.f32 0.0, %v216
    %v218 = vpop.f32.mrb[0].mxu0
    %219 = vmatprep.mubr.bf16.mxu0 0
    %220 = vmatmul.mubr.bf16.gmra.mrb[0].mxu0 %v166
    %v221 = vpop.f32.mrb[0].mxu0
    %v222 = vadd.f32 0.0, %v221
    %v223 = vpop.f32.mrb[0].mxu0
    %v224 = vpop.f32.mrb[0].mxu0
    %v225 = vadd.f32 0.0, %v224
    %v226 = vpop.f32.mrb[0].mxu0
    %227 = vmatprep.mubr.bf16.mxu0 0
    %228 = vmatmul.mubr.bf16.gmra.mrb[0].mxu0 %v169
    %v229 = vpop.f32.mrb[0].mxu0
    %v230 = vadd.f32 0.0, %v229
    %v231 = vpop.f32.mrb[0].mxu0
    %v232 = vpop.f32.mrb[0].mxu0
    %v233 = vadd.f32 0.0, %v232
    %v234 = vpop.f32.mrb[0].mxu0
    %235 = vdwg.mxu0
    %v236 = vld [vmem:[%s6] sm:$0x1]
    %v237 = vld [vmem:[%s1] sm:$0xff]
    %239 = vrot.lane.b32.xlu0 %v237, 64
    %v240 = vpop.permute.xlu0 %239
    %v242 = vsel %vm158, %v206, %v240
    %v243 = vpack.c.bf16 %v242, %v242
    %v244 = vld [vmem:[%s4] sm:$0xf]
    %v245 = vld [vmem:[%s4 + $0x4] sm:$0xf]
    %v246 = vld [vmem:[%s4 + $0x8] sm:$0xf]
    %v247 = vld [vmem:[%s4 + $0xc] sm:$0xf]
    %v248 = vld [vmem:[%s4 + $0x10] sm:$0xf]
    %v249 = vld [vmem:[%s4 + $0x14] sm:$0xf]
    %v250 = vld [vmem:[%s4 + $0x18] sm:$0xf]
    %v251 = vld [vmem:[%s4 + $0x1c] sm:$0xf]
    %v252 = vld [vmem:[%s4 + $0x20] sm:$0xf]
    %v253 = vld [vmem:[%s4 + $0x24] sm:$0xf]
    %v254 = vld [vmem:[%s4 + $0x28] sm:$0xf]
    %v255 = vld [vmem:[%s4 + $0x2c] sm:$0xf]
    %v256 = vld [vmem:[%s4 + $0x30] sm:$0xf]
    %v257 = vld [vmem:[%s4 + $0x34] sm:$0xf]
    %v258 = vld [vmem:[%s4 + $0x38] sm:$0xf]
    %v259 = vld [vmem:[%s4 + $0x3c] sm:$0xf]
    %v276 = vunpack.c.l.b16 %v244
    %v277 = vunpack.c.l.b16 %v245
    %v278 = vunpack.c.l.b16 %v246
    %v279 = vunpack.c.l.b16 %v247
    %v280 = vunpack.c.l.b16 %v248
    %v281 = vunpack.c.l.b16 %v249
    %v282 = vunpack.c.l.b16 %v250
    %v283 = vunpack.c.l.b16 %v251
    %v284 = vunpack.c.l.b16 %v252
    %v285 = vunpack.c.l.b16 %v253
    %v286 = vunpack.c.l.b16 %v254
    %v287 = vunpack.c.l.b16 %v255
    %v288 = vunpack.c.l.b16 %v256
    %v289 = vunpack.c.l.b16 %v257
    %v290 = vunpack.c.l.b16 %v258
    %v291 = vunpack.c.l.b16 %v259
    %v292 = vpack.c.b16 %v277, %v276
    %v293 = vpack.c.b16 %v279, %v278
    %v294 = vpack.c.b16 %v281, %v280
    %v295 = vpack.c.b16 %v283, %v282
    %v296 = vpack.c.b16 %v285, %v284
    %v297 = vpack.c.b16 %v287, %v286
    %v298 = vpack.c.b16 %v289, %v288
    %v299 = vpack.c.b16 %v291, %v290
    %308 = vmatprep.subr.bf16.mxu0 0
    %309 = vmatpush1.bf16.msra.mxu0 %v292
    %310 = vmatprep.subr.bf16.mxu0 0
    %311 = vmatpush1.bf16.msra.mxu0 %v293
    %312 = vmatprep.subr.bf16.mxu0 0
    %313 = vmatpush1.bf16.msra.mxu0 %v294
    %314 = vmatprep.subr.bf16.mxu0 0
    %315 = vmatpush1.bf16.msra.mxu0 %v295
    %316 = vmatprep.subr.bf16.mxu0 0
    %317 = vmatpush1.bf16.msra.mxu0 %v296
    %318 = vmatprep.subr.bf16.mxu0 0
    %319 = vmatpush1.bf16.msra.mxu0 %v297
    %320 = vmatprep.subr.bf16.mxu0 0
    %321 = vmatpush1.bf16.msra.mxu0 %v298
    %322 = vmatprep.subr.bf16.mxu0 0
    %323 = vmatpush1.bf16.msra.mxu0 %v299
    %324 = vmatprep.subr.bf16.mxu0 0
    %325 = vmatpush1.bf16.msra.mxu0 0
    %326 = vmatprep.subr.bf16.mxu0 0
    %327 = vmatpush1.bf16.msra.mxu0 0
    %328 = vmatprep.subr.bf16.mxu0 0
    %329 = vmatpush1.bf16.msra.mxu0 0
    %330 = vmatprep.subr.bf16.mxu0 0
    %331 = vmatpush1.bf16.msra.mxu0 0
    %332 = vmatprep.subr.bf16.mxu0 0
    %333 = vmatpush1.bf16.msra.mxu0 0
    %334 = vmatprep.subr.bf16.mxu0 0
    %335 = vmatpush1.bf16.msra.mxu0 0
    %336 = vmatprep.subr.bf16.mxu0 0
    %337 = vmatpush1.bf16.msra.mxu0 0
    %338 = vmatprep.subr.bf16.mxu0 0
    %339 = vmatpush1.bf16.msra.mxu0 0
    %340 = vmatprep.mubr.bf16.mxu0 0
    %341 = vmatmul.mubr.bf16.gmra.mrb[0].mxu0 %v243
    %v342 = vpop.f32.mrb[0].mxu0
    %v343 = vadd.f32 0.0, %v342
    %v344 = vpop.f32.mrb[0].mxu0
    %v345 = vpop.f32.mrb[0].mxu0
    %v346 = vpop.f32.mrb[0].mxu0
    %347 = vdwg.mxu0
    %v348 = vxor.u32 %v343, 2147483648
    %v349 = vmul.f32 %v348, 1.442695
    %v350 = vpow.pop %v349
    %v351 = vadd.f32 %v350, 1.0
    %v352 = vrcp.pop %v351
    %v353 = vmul.f32 1.0, %v352
    %v354 = vtanh.pop %v343
    %v355 = vsub.f32 %v354, %v240
    %357 = vrot.lane.b32.xlu0 %v355, 64
    %v358 = vpop.permute.xlu0 %357
    %v360 = vmul.f32 %v353, %v358
    %v361 = vadd.f32 %v237, %v360
    %v362 = vld [vmem:[#allocation7] sm:$0xff]
    %v363 = vld [vmem:[#allocation7 + $0x10] sm:$0xff]
    %v364 = vld [vmem:[#allocation7 + $0x20] sm:$0xff]
    %v365 = vld [vmem:[#allocation7 + $0x30] sm:$0xff]
    %v366 = vld [vmem:[#allocation7 + $0x40] sm:$0xff]
    %v367 = vld [vmem:[#allocation7 + $0x50] sm:$0xff]
    %v368 = vld [vmem:[#allocation7 + $0x60] sm:$0xff]
    %v369 = vld [vmem:[#allocation7 + $0x70] sm:$0xff]
    %v370 = vpack.c.bf16 %v361, %v361
    %v379 = vunpack.c.l.b16 %v362
    %v380 = vunpack.c.h.b16 %v362
    %v381 = vunpack.c.l.b16 %v363
    %v382 = vunpack.c.h.b16 %v363
    %v383 = vunpack.c.l.b16 %v364
    %v384 = vunpack.c.h.b16 %v364
    %v385 = vunpack.c.l.b16 %v365
    %v386 = vunpack.c.h.b16 %v365
    %v387 = vunpack.c.l.b16 %v366
    %v388 = vunpack.c.h.b16 %v366
    %v389 = vunpack.c.l.b16 %v367
    %v390 = vunpack.c.h.b16 %v367
    %v391 = vunpack.c.l.b16 %v368
    %v392 = vunpack.c.h.b16 %v368
    %v393 = vunpack.c.l.b16 %v369
    %v394 = vunpack.c.h.b16 %v369
    %v395 = vpack.c.b16 %v381, %v379
    %v396 = vpack.c.b16 %v382, %v380
    %v397 = vpack.c.b16 %v385, %v383
    %v398 = vpack.c.b16 %v386, %v384
    %v399 = vpack.c.b16 %v389, %v387
    %v400 = vpack.c.b16 %v390, %v388
    %v401 = vpack.c.b16 %v393, %v391
    %v402 = vpack.c.b16 %v394, %v392
    %v412 = vsel %vm158, %v370, 0
    %414 = vmatprep.subr.bf16.mxu0 %v396
    %415 = vmatpush1.bf16.msra.mxu0 %v395
    %416 = vmatprep.subr.bf16.mxu0 %v398
    %417 = vmatpush1.bf16.msra.mxu0 %v397
    %418 = vmatprep.subr.bf16.mxu0 %v400
    %419 = vmatpush1.bf16.msra.mxu0 %v399
    %420 = vmatprep.subr.bf16.mxu0 %v402
    %421 = vmatpush1.bf16.msra.mxu0 %v401
    %422 = vmatprep.subr.bf16.mxu0 0
    %423 = vmatpush1.bf16.msra.mxu0 0
    %424 = vmatprep.subr.bf16.mxu0 0
    %425 = vmatpush1.bf16.msra.mxu0 0
    %426 = vmatprep.subr.bf16.mxu0 0
    %427 = vmatpush1.bf16.msra.mxu0 0
    %428 = vmatprep.subr.bf16.mxu0 0
    %429 = vmatpush1.bf16.msra.mxu0 0
    %430 = vmatprep.subr.bf16.mxu0 0
    %431 = vmatpush1.bf16.msra.mxu0 0
    %432 = vmatprep.subr.bf16.mxu0 0
    %433 = vmatpush1.bf16.msra.mxu0 0
    %434 = vmatprep.subr.bf16.mxu0 0
    %435 = vmatpush1.bf16.msra.mxu0 0
    %436 = vmatprep.subr.bf16.mxu0 0
    %437 = vmatpush1.bf16.msra.mxu0 0
    %438 = vmatprep.subr.bf16.mxu0 0
    %439 = vmatpush1.bf16.msra.mxu0 0
    %440 = vmatprep.subr.bf16.mxu0 0
    %441 = vmatpush1.bf16.msra.mxu0 0
    %442 = vmatprep.subr.bf16.mxu0 0
    %443 = vmatpush1.bf16.msra.mxu0 0
    %444 = vmatprep.subr.bf16.mxu0 0
    %445 = vmatpush1.bf16.msra.mxu0 0
    %446 = vmatprep.mubr.bf16.mxu0 0
    %447 = vmatmul.mubr.bf16.gmra.mrb[0].mxu0 %v412
    %v448 = vpop.f32.mrb[0].mxu0
    %v449 = vadd.f32 0.0, %v448
    %v450 = vpop.f32.mrb[0].mxu0
    %v451 = vadd.f32 0.0, %v450
    %v452 = vpop.f32.mrb[0].mxu0
    %v453 = vpop.f32.mrb[0].mxu0
    %454 = vdwg.mxu0
    %v455 = vxor.u32 %v449, 2147483648
    %v456 = vmul.f32 %v455, 1.442695
    %v457 = vpow.pop %v456
    %v458 = vadd.f32 %v457, 1.0
    %v459 = vrcp.pop %v458
    %v460 = vmul.f32 1.0, %v459
    %v461 = vtanh.pop %v451
    %v462 = vsub.f32 %v461, %v361
    %v463 = vmul.f32 %v460, %v462
    %v464 = vadd.f32 %v361, %v463
    %v465 = vmax.f32 %v451, 0.0
    %467 = vrot.lane.b32.xlu0 %v361, 64
    %v468 = vpop.permute.xlu0 %467
    %v470 = vsub.f32 %v465, %v468
    %v471 = vmul.f32 %v460, %v470
    %473 = vrot.lane.b32.xlu0 %v471, 64
    %v474 = vpop.permute.xlu0 %473
    %v476 = vadd.f32 %v361, %v474
    %v477 = vld [vmem:[#allocation7 + $0x8] sm:$0xf]
    %v478 = vld [vmem:[#allocation7 + $0x18] sm:$0xf]
    %v479 = vld [vmem:[#allocation7 + $0x28] sm:$0xf]
    %v480 = vld [vmem:[#allocation7 + $0x38] sm:$0xf]
    %v481 = vld [vmem:[#allocation7 + $0x48] sm:$0xf]
    %v482 = vld [vmem:[#allocation7 + $0x58] sm:$0xf]
    %v483 = vld [vmem:[#allocation7 + $0x68] sm:$0xf]
    %v484 = vld [vmem:[#allocation7 + $0x78] sm:$0xf]
    %v485 = vpack.c.bf16 %v464, %v464
    %v494 = vunpack.c.l.b16 %v477
    %v495 = vunpack.c.l.b16 %v478
    %v496 = vunpack.c.l.b16 %v479
    %v497 = vunpack.c.l.b16 %v480
    %v498 = vunpack.c.l.b16 %v481
    %v499 = vunpack.c.l.b16 %v482
    %v500 = vunpack.c.l.b16 %v483
    %v501 = vunpack.c.l.b16 %v484
    %v502 = vpack.c.b16 %v495, %v494
    %v503 = vpack.c.b16 %v497, %v496
    %v504 = vpack.c.b16 %v499, %v498
    %v505 = vpack.c.b16 %v501, %v500
    %v511 = vsel %vm158, %v485, 0
    %513 = vmatprep.subr.bf16.mxu0 0
    %514 = vmatpush1.bf16.msra.mxu0 %v502
    %515 = vmatprep.subr.bf16.mxu0 0
    %516 = vmatpush1.bf16.msra.mxu0 %v503
    %517 = vmatprep.subr.bf16.mxu0 0
    %518 = vmatpush1.bf16.msra.mxu0 %v504
    %519 = vmatprep.subr.bf16.mxu0 0
    %520 = vmatpush1.bf16.msra.mxu0 %v505
    %521 = vmatprep.subr.bf16.mxu0 0
    %522 = vmatpush1.bf16.msra.mxu0 0
    %523 = vmatprep.subr.bf16.mxu0 0
    %524 = vmatpush1.bf16.msra.mxu0 0
    %525 = vmatprep.subr.bf16.mxu0 0
    %526 = vmatpush1.bf16.msra.mxu0 0
    %527 = vmatprep.subr.bf16.mxu0 0
    %528 = vmatpush1.bf16.msra.mxu0 0
    %529 = vmatprep.subr.bf16.mxu0 0
    %530 = vmatpush1.bf16.msra.mxu0 0
    %531 = vmatprep.subr.bf16.mxu0 0
    %532 = vmatpush1.bf16.msra.mxu0 0
    %533 = vmatprep.subr.bf16.mxu0 0
    %534 = vmatpush1.bf16.msra.mxu0 0
    %535 = vmatprep.subr.bf16.mxu0 0
    %536 = vmatpush1.bf16.msra.mxu0 0
    %537 = vmatprep.subr.bf16.mxu0 0
    %538 = vmatpush1.bf16.msra.mxu0 0
    %539 = vmatprep.subr.bf16.mxu0 0
    %540 = vmatpush1.bf16.msra.mxu0 0
    %541 = vmatprep.subr.bf16.mxu0 0
    %542 = vmatpush1.bf16.msra.mxu0 0
    %543 = vmatprep.subr.bf16.mxu0 0
    %544 = vmatpush1.bf16.msra.mxu0 0
    %545 = vmatprep.mubr.bf16.mxu0 0
    %546 = vmatmul.mubr.bf16.gmra.mrb[0].mxu0 %v511
    %v547 = vpop.f32.mrb[0].mxu0
    %v548 = vadd.f32 0.0, %v547
    %v549 = vpop.f32.mrb[0].mxu0
    %v550 = vpop.f32.mrb[0].mxu0
    %v551 = vpop.f32.mrb[0].mxu0
    %552 = vdwg.mxu0
    %v553 = vxor.u32 %v548, 2147483648
    %v554 = vmul.f32 %v553, 1.442695
    %v555 = vpow.pop %v554
    %v556 = vadd.f32 %v555, 1.0
    %v557 = vrcp.pop %v556
    %v558 = vmul.f32 1.0, %v557
    %560 = vrot.lane.b32.xlu0 %v464, 64
    %v561 = vpop.permute.xlu0 %560
    %v563 = vsub.f32 %v558, %v561
    %565 = vrot.lane.b32.xlu0 %v563, 64
    %v566 = vpop.permute.xlu0 %565
    %v568 = vmul.f32 %v558, %v566
    %v569 = vadd.f32 %v464, %v568
    %v570 = vld [vmem:[#allocation7 + $0xc] sm:$0xf]
    %v571 = vld [vmem:[#allocation7 + $0x1c] sm:$0xf]
    %v572 = vld [vmem:[#allocation7 + $0x2c] sm:$0xf]
    %v573 = vld [vmem:[#allocation7 + $0x3c] sm:$0xf]
    %v574 = vld [vmem:[#allocation7 + $0x4c] sm:$0xf]
    %v575 = vld [vmem:[#allocation7 + $0x5c] sm:$0xf]
    %v576 = vld [vmem:[#allocation7 + $0x6c] sm:$0xf]
    %v577 = vld [vmem:[#allocation7 + $0x7c] sm:$0xf]
    %v578 = vpack.c.bf16 %v476, %v476
    %v587 = vunpack.c.l.b16 %v570
    %v588 = vunpack.c.l.b16 %v571
    %v589 = vunpack.c.l.b16 %v572
    %v590 = vunpack.c.l.b16 %v573
    %v591 = vunpack.c.l.b16 %v574
    %v592 = vunpack.c.l.b16 %v575
    %v593 = vunpack.c.l.b16 %v576
    %v594 = vunpack.c.l.b16 %v577
    %v595 = vpack.c.b16 %v588, %v587
    %v596 = vpack.c.b16 %v590, %v589
    %v597 = vpack.c.b16 %v592, %v591
    %v598 = vpack.c.b16 %v594, %v593
    %v604 = vsel %vm158, %v578, 0
    %606 = vmatprep.subr.bf16.mxu0 0
    %607 = vmatpush1.bf16.msra.mxu0 %v595
    %608 = vmatprep.subr.bf16.mxu0 0
    %609 = vmatpush1.bf16.msra.mxu0 %v596
    %610 = vmatprep.subr.bf16.mxu0 0
    %611 = vmatpush1.bf16.msra.mxu0 %v597
    %612 = vmatprep.subr.bf16.mxu0 0
    %613 = vmatpush1.bf16.msra.mxu0 %v598
    %614 = vmatprep.subr.bf16.mxu0 0
    %615 = vmatpush1.bf16.msra.mxu0 0
    %616 = vmatprep.subr.bf16.mxu0 0
    %617 = vmatpush1.bf16.msra.mxu0 0
    %618 = vmatprep.subr.bf16.mxu0 0
    %619 = vmatpush1.bf16.msra.mxu0 0
    %620 = vmatprep.subr.bf16.mxu0 0
    %621 = vmatpush1.bf16.msra.mxu0 0
    %622 = vmatprep.subr.bf16.mxu0 0
    %623 = vmatpush1.bf16.msra.mxu0 0
    %624 = vmatprep.subr.bf16.mxu0 0
    %625 = vmatpush1.bf16.msra.mxu0 0
    %626 = vmatprep.subr.bf16.mxu0 0
    %627 = vmatpush1.bf16.msra.mxu0 0
    %628 = vmatprep.subr.bf16.mxu0 0
    %629 = vmatpush1.bf16.msra.mxu0 0
    %630 = vmatprep.subr.bf16.mxu0 0
    %631 = vmatpush1.bf16.msra.mxu0 0
    %632 = vmatprep.subr.bf16.mxu0 0
    %633 = vmatpush1.bf16.msra.mxu0 0
    %634 = vmatprep.subr.bf16.mxu0 0
    %635 = vmatpush1.bf16.msra.mxu0 0
    %636 = vmatprep.subr.bf16.mxu0 0
    %637 = vmatpush1.bf16.msra.mxu0 0
    %638 = vmatprep.mubr.bf16.mxu0 0
    %639 = vmatmul.mubr.bf16.gmra.mrb[0].mxu0 %v604
    %v640 = vpop.f32.mrb[0].mxu0
    %v641 = vadd.f32 0.0, %v640
    %v642 = vpop.f32.mrb[0].mxu0
    %v643 = vpop.f32.mrb[0].mxu0
    %v644 = vpop.f32.mrb[0].mxu0
    %645 = vdwg.mxu0
    %v646 = vxor.u32 %v641, 2147483648
    %v647 = vmul.f32 %v646, 1.442695
    %v648 = vpow.pop %v647
    %v649 = vadd.f32 %v648, 1.0
    %v650 = vrcp.pop %v649
    %v651 = vmul.f32 1.0, %v650
    %653 = vrot.lane.b32.xlu0 %v476, 64
    %v654 = vpop.permute.xlu0 %653
    %v656 = vsub.f32 %v641, %v654
    %658 = vrot.lane.b32.xlu0 %v656, 64
    %v659 = vpop.permute.xlu0 %658
    %v661 = vmul.f32 %v651, %v659
    %v662 = vadd.f32 %v476, %v661
    %v663 = vadd.f32 %v464, %v476
    %v664 = vadd.f32 %v663, %v569
    %v665 = vadd.f32 %v664, %v662
    %v666 = vmul.f32 %v665, 0.25
    %v667 = vpack.c.bf16 %v666, %v666
    %v668 = vld [vmem:[#allocation5] sm:$0xf]
    %v669 = vld [vmem:[#allocation5 + $0x4] sm:$0xf]
    %v670 = vld [vmem:[#allocation5 + $0x8] sm:$0xf]
    %v671 = vld [vmem:[#allocation5 + $0xc] sm:$0xf]
    %v672 = vld [vmem:[#allocation5 + $0x10] sm:$0xf]
    %v673 = vld [vmem:[#allocation5 + $0x14] sm:$0xf]
    %v674 = vld [vmem:[#allocation5 + $0x18] sm:$0xf]
    %v675 = vld [vmem:[#allocation5 + $0x1c] sm:$0xf]
    %v677 = vlaneseq
    %v678 = vshrl.u32 %v677, 7
    %v679 = vsub.s32 0, %v678
    %v680 = vrot.slane %v236, %v679
    %v690 = vunpack.c.l.b16 %v668
    %v691 = vunpack.c.l.b16 %v669
    %v692 = vunpack.c.l.b16 %v670
    %v693 = vunpack.c.l.b16 %v671
    %v694 = vunpack.c.l.b16 %v672
    %v695 = vunpack.c.l.b16 %v673
    %v696 = vunpack.c.l.b16 %v674
    %v697 = vunpack.c.l.b16 %v675
    %v698 = vpack.c.b16 %v691, %v690
    %v699 = vpack.c.b16 %v693, %v692
    %v700 = vpack.c.b16 %v695, %v694
    %v701 = vpack.c.b16 %v697, %v696
    %v707 = vsel %vm158, %v667, 0
    %709 = vmatprep.subr.bf16.mxu0 0
    %710 = vmatpush1.bf16.msra.mxu0 %v698
    %711 = vmatprep.subr.bf16.mxu0 0
    %712 = vmatpush1.bf16.msra.mxu0 %v699
    %713 = vmatprep.subr.bf16.mxu0 0
    %714 = vmatpush1.bf16.msra.mxu0 %v700
    %715 = vmatprep.subr.bf16.mxu0 0
    %716 = vmatpush1.bf16.msra.mxu0 %v701
    %717 = vmatprep.subr.bf16.mxu0 0
    %718 = vmatpush1.bf16.msra.mxu0 0
    %719 = vmatprep.subr.bf16.mxu0 0
    %720 = vmatpush1.bf16.msra.mxu0 0
    %721 = vmatprep.subr.bf16.mxu0 0
    %722 = vmatpush1.bf16.msra.mxu0 0
    %723 = vmatprep.subr.bf16.mxu0 0
    %724 = vmatpush1.bf16.msra.mxu0 0
    %725 = vmatprep.subr.bf16.mxu0 0
    %726 = vmatpush1.bf16.msra.mxu0 0
    %727 = vmatprep.subr.bf16.mxu0 0
    %728 = vmatpush1.bf16.msra.mxu0 0
    %729 = vmatprep.subr.bf16.mxu0 0
    %730 = vmatpush1.bf16.msra.mxu0 0
    %731 = vmatprep.subr.bf16.mxu0 0
    %732 = vmatpush1.bf16.msra.mxu0 0
    %733 = vmatprep.subr.bf16.mxu0 0
    %734 = vmatpush1.bf16.msra.mxu0 0
    %735 = vmatprep.subr.bf16.mxu0 0
    %736 = vmatpush1.bf16.msra.mxu0 0
    %737 = vmatprep.subr.bf16.mxu0 0
    %738 = vmatpush1.bf16.msra.mxu0 0
    %739 = vmatprep.subr.bf16.mxu0 0
    %740 = vmatpush1.bf16.msra.mxu0 0
    %741 = vmatprep.mubr.bf16.mxu0 0
    %742 = vmatmul.mubr.bf16.gmra.mrb[0].mxu0 %v707
    %v743 = vpop.f32.mrb[0].mxu0
    %v744 = vadd.f32 %v680, %v743
    %v745 = vpop.f32.mrb[0].mxu0
    %v746 = vpop.f32.mrb[0].mxu0
    %v747 = vpop.f32.mrb[0].mxu0
    %748 = vdwg.mxu0
    %v749 = vsel %vm158, %v744, -inf
    %750 = vmax.xlane.f32.xlu0 %v749
    %v751 = vpop.xlane.xlu0 %750
    %v752 = vsub.f32 %v744, %v751
    %v753 = vmul.f32 %v752, 1.442695
    %v754 = vpow.pop %v753
    %v755 = vsel %vm158, %v754, 0.0
    %756 = vadd.xlane.f32.xlu0 %v755
    %v757 = vpop.xlane.xlu0 %756
    %v758 = vlog2.pop %v757
    %v759 = vmul.f32 %v758, 0.6931472
    %v760 = vsub.f32 %v752, %v759
    %761 = vst.msk [vmem:[#allocation8] sm:$0xff] %vm158, %v760
    %763 = vrot.lane.b32.xlu0 %v666, 64
    %v764 = vpop.permute.xlu0 %763
    %v766 = vsel %vm158, %v209, %v764
    %v767 = vpack.c.bf16 %v766, %v766
    %v768 = vld [vmem:[%s4] sm:$0xf]
    %v769 = vld [vmem:[%s4 + $0x4] sm:$0xf]
    %v770 = vld [vmem:[%s4 + $0x8] sm:$0xf]
    %v771 = vld [vmem:[%s4 + $0xc] sm:$0xf]
    %v772 = vld [vmem:[%s4 + $0x10] sm:$0xf]
    %v773 = vld [vmem:[%s4 + $0x14] sm:$0xf]
    %v774 = vld [vmem:[%s4 + $0x18] sm:$0xf]
    %v775 = vld [vmem:[%s4 + $0x1c] sm:$0xf]
    %v776 = vld [vmem:[%s4 + $0x20] sm:$0xf]
    %v777 = vld [vmem:[%s4 + $0x24] sm:$0xf]
    %v778 = vld [vmem:[%s4 + $0x28] sm:$0xf]
    %v779 = vld [vmem:[%s4 + $0x2c] sm:$0xf]
    %v780 = vld [vmem:[%s4 + $0x30] sm:$0xf]
    %v781 = vld [vmem:[%s4 + $0x34] sm:$0xf]
    %v782 = vld [vmem:[%s4 + $0x38] sm:$0xf]
    %v783 = vld [vmem:[%s4 + $0x3c] sm:$0xf]
    %v800 = vunpack.c.l.b16 %v768
    %v801 = vunpack.c.l.b16 %v769
    %v802 = vunpack.c.l.b16 %v770
    %v803 = vunpack.c.l.b16 %v771
    %v804 = vunpack.c.l.b16 %v772
    %v805 = vunpack.c.l.b16 %v773
    %v806 = vunpack.c.l.b16 %v774
    %v807 = vunpack.c.l.b16 %v775
    %v808 = vunpack.c.l.b16 %v776
    %v809 = vunpack.c.l.b16 %v777
    %v810 = vunpack.c.l.b16 %v778
    %v811 = vunpack.c.l.b16 %v779
    %v812 = vunpack.c.l.b16 %v780
    %v813 = vunpack.c.l.b16 %v781
    %v814 = vunpack.c.l.b16 %v782
    %v815 = vunpack.c.l.b16 %v783
    %v816 = vpack.c.b16 %v801, %v800
    %v817 = vpack.c.b16 %v803, %v802
    %v818 = vpack.c.b16 %v805, %v804
    %v819 = vpack.c.b16 %v807, %v806
    %v820 = vpack.c.b16 %v809, %v808
    %v821 = vpack.c.b16 %v811, %v810
    %v822 = vpack.c.b16 %v813, %v812
    %v823 = vpack.c.b16 %v815, %v814
    %832 = vmatprep.subr.bf16.mxu0 0
    %833 = vmatpush1.bf16.msra.mxu0 %v816
    %834 = vmatprep.subr.bf16.mxu0 0
    %835 = vmatpush1.bf16.msra.mxu0 %v817
    %836 = vmatprep.subr.bf16.mxu0 0
    %837 = vmatpush1.bf16.msra.mxu0 %v818
    %838 = vmatprep.subr.bf16.mxu0 0
    %839 = vmatpush1.bf16.msra.mxu0 %v819
    %840 = vmatprep.subr.bf16.mxu0 0
    %841 = vmatpush1.bf16.msra.mxu0 %v820
    %842 = vmatprep.subr.bf16.mxu0 0
    %843 = vmatpush1.bf16.msra.mxu0 %v821
    %844 = vmatprep.subr.bf16.mxu0 0
    %845 = vmatpush1.bf16.msra.mxu0 %v822
    %846 = vmatprep.subr.bf16.mxu0 0
    %847 = vmatpush1.bf16.msra.mxu0 %v823
    %848 = vmatprep.subr.bf16.mxu0 0
    %849 = vmatpush1.bf16.msra.mxu0 0
    %850 = vmatprep.subr.bf16.mxu0 0
    %851 = vmatpush1.bf16.msra.mxu0 0
    %852 = vmatprep.subr.bf16.mxu0 0
    %853 = vmatpush1.bf16.msra.mxu0 0
    %854 = vmatprep.subr.bf16.mxu0 0
    %855 = vmatpush1.bf16.msra.mxu0 0
    %856 = vmatprep.subr.bf16.mxu0 0
    %857 = vmatpush1.bf16.msra.mxu0 0
    %858 = vmatprep.subr.bf16.mxu0 0
    %859 = vmatpush1.bf16.msra.mxu0 0
    %860 = vmatprep.subr.bf16.mxu0 0
    %861 = vmatpush1.bf16.msra.mxu0 0
    %862 = vmatprep.subr.bf16.mxu0 0
    %863 = vmatpush1.bf16.msra.mxu0 0
    %864 = vmatprep.mubr.bf16.mxu0 0
    %865 = vmatmul.mubr.bf16.gmra.mrb[0].mxu0 %v767
    %v866 = vpop.f32.mrb[0].mxu0
    %v867 = vadd.f32 0.0, %v866
    %v868 = vpop.f32.mrb[0].mxu0
    %v869 = vpop.f32.mrb[0].mxu0
    %v870 = vpop.f32.mrb[0].mxu0
    %871 = vdwg.mxu0
    %v872 = vxor.u32 %v867, 2147483648
    %v873 = vmul.f32 %v872, 1.442695
    %v874 = vpow.pop %v873
    %v875 = vadd.f32 %v874, 1.0
    %v876 = vrcp.pop %v875
    %v877 = vmul.f32 1.0, %v876
    %v878 = vtanh.pop %v867
    %v879 = vsub.f32 %v878, %v764
    %881 = vrot.lane.b32.xlu0 %v879, 64
    %v882 = vpop.permute.xlu0 %881
    %v884 = vmul.f32 %v877, %v882
    %v885 = vadd.f32 %v666, %v884
    %v886 = vld [vmem:[#allocation7] sm:$0xff]
    %v887 = vld [vmem:[#allocation7 + $0x10] sm:$0xff]
    %v888 = vld [vmem:[#allocation7 + $0x20] sm:$0xff]
    %v889 = vld [vmem:[#allocation7 + $0x30] sm:$0xff]
    %v890 = vld [vmem:[#allocation7 + $0x40] sm:$0xff]
    %v891 = vld [vmem:[#allocation7 + $0x50] sm:$0xff]
    %v892 = vld [vmem:[#allocation7 + $0x60] sm:$0xff]
    %v893 = vld [vmem:[#allocation7 + $0x70] sm:$0xff]
    %v894 = vpack.c.bf16 %v885, %v885
    %v903 = vunpack.c.l.b16 %v886
    %v904 = vunpack.c.h.b16 %v886
    %v905 = vunpack.c.l.b16 %v887
    %v906 = vunpack.c.h.b16 %v887
    %v907 = vunpack.c.l.b16 %v888
    %v908 = vunpack.c.h.b16 %v888
    %v909 = vunpack.c.l.b16 %v889
    %v910 = vunpack.c.h.b16 %v889
    %v911 = vunpack.c.l.b16 %v890
    %v912 = vunpack.c.h.b16 %v890
    %v913 = vunpack.c.l.b16 %v891
    %v914 = vunpack.c.h.b16 %v891
    %v915 = vunpack.c.l.b16 %v892
    %v916 = vunpack.c.h.b16 %v892
    %v917 = vunpack.c.l.b16 %v893
    %v918 = vunpack.c.h.b16 %v893
    %v919 = vpack.c.b16 %v905, %v903
    %v920 = vpack.c.b16 %v906, %v904
    %v921 = vpack.c.b16 %v909, %v907
    %v922 = vpack.c.b16 %v910, %v908
    %v923 = vpack.c.b16 %v913, %v911
    %v924 = vpack.c.b16 %v914, %v912
    %v925 = vpack.c.b16 %v917, %v915
    %v926 = vpack.c.b16 %v918, %v916
    %v936 = vsel %vm158, %v894, 0
    %938 = vmatprep.subr.bf16.mxu0 %v920
    %939 = vmatpush1.bf16.msra.mxu0 %v919
    %940 = vmatprep.subr.bf16.mxu0 %v922
    %941 = vmatpush1.bf16.msra.mxu0 %v921
    %942 = vmatprep.subr.bf16.mxu0 %v924
    %943 = vmatpush1.bf16.msra.mxu0 %v923
    %944 = vmatprep.subr.bf16.mxu0 %v926
    %945 = vmatpush1.bf16.msra.mxu0 %v925
    %946 = vmatprep.subr.bf16.mxu0 0
    %947 = vmatpush1.bf16.msra.mxu0 0
    %948 = vmatprep.subr.bf16.mxu0 0
    %949 = vmatpush1.bf16.msra.mxu0 0
    %950 = vmatprep.subr.bf16.mxu0 0
    %951 = vmatpush1.bf16.msra.mxu0 0
    %952 = vmatprep.subr.bf16.mxu0 0
    %953 = vmatpush1.bf16.msra.mxu0 0
    %954 = vmatprep.subr.bf16.mxu0 0
    %955 = vmatpush1.bf16.msra.mxu0 0
    %956 = vmatprep.subr.bf16.mxu0 0
    %957 = vmatpush1.bf16.msra.mxu0 0
    %958 = vmatprep.subr.bf16.mxu0 0
    %959 = vmatpush1.bf16.msra.mxu0 0
    %960 = vmatprep.subr.bf16.mxu0 0
    %961 = vmatpush1.bf16.msra.mxu0 0
    %962 = vmatprep.subr.bf16.mxu0 0
    %963 = vmatpush1.bf16.msra.mxu0 0
    %964 = vmatprep.subr.bf16.mxu0 0
    %965 = vmatpush1.bf16.msra.mxu0 0
    %966 = vmatprep.subr.bf16.mxu0 0
    %967 = vmatpush1.bf16.msra.mxu0 0
    %968 = vmatprep.subr.bf16.mxu0 0
    %969 = vmatpush1.bf16.msra.mxu0 0
    %970 = vmatprep.mubr.bf16.mxu0 0
    %971 = vmatmul.mubr.bf16.gmra.mrb[0].mxu0 %v936
    %v972 = vpop.f32.mrb[0].mxu0
    %v973 = vadd.f32 0.0, %v972
    %v974 = vpop.f32.mrb[0].mxu0
    %v975 = vadd.f32 0.0, %v974
    %v976 = vpop.f32.mrb[0].mxu0
    %v977 = vpop.f32.mrb[0].mxu0
    %978 = vdwg.mxu0
    %v979 = vxor.u32 %v973, 2147483648
    %v980 = vmul.f32 %v979, 1.442695
    %v981 = vpow.pop %v980
    %v982 = vadd.f32 %v981, 1.0
    %v983 = vrcp.pop %v982
    %v984 = vmul.f32 1.0, %v983
    %v985 = vtanh.pop %v975
    %v986 = vsub.f32 %v985, %v885
    %v987 = vmul.f32 %v984, %v986
    %v988 = vadd.f32 %v885, %v987
    %v989 = vmax.f32 %v975, 0.0
    %991 = vrot.lane.b32.xlu0 %v885, 64
    %v992 = vpop.permute.xlu0 %991
    %v994 = vsub.f32 %v989, %v992
    %v995 = vmul.f32 %v984, %v994
    %997 = vrot.lane.b32.xlu0 %v995, 64
    %v998 = vpop.permute.xlu0 %997
    %v1000 = vadd.f32 %v885, %v998
    %v1001 = vld [vmem:[#allocation7 + $0x8] sm:$0xf]
    %v1002 = vld [vmem:[#allocation7 + $0x18] sm:$0xf]
    %v1003 = vld [vmem:[#allocation7 + $0x28] sm:$0xf]
    %v1004 = vld [vmem:[#allocation7 + $0x38] sm:$0xf]
    %v1005 = vld [vmem:[#allocation7 + $0x48] sm:$0xf]
    %v1006 = vld [vmem:[#allocation7 + $0x58] sm:$0xf]
    %v1007 = vld [vmem:[#allocation7 + $0x68] sm:$0xf]
    %v1008 = vld [vmem:[#allocation7 + $0x78] sm:$0xf]
    %v1009 = vpack.c.bf16 %v988, %v988
    %v1018 = vunpack.c.l.b16 %v1001
    %v1019 = vunpack.c.l.b16 %v1002
    %v1020 = vunpack.c.l.b16 %v1003
    %v1021 = vunpack.c.l.b16 %v1004
    %v1022 = vunpack.c.l.b16 %v1005
    %v1023 = vunpack.c.l.b16 %v1006
    %v1024 = vunpack.c.l.b16 %v1007
    %v1025 = vunpack.c.l.b16 %v1008
    %v1026 = vpack.c.b16 %v1019, %v1018
    %v1027 = vpack.c.b16 %v1021, %v1020
    %v1028 = vpack.c.b16 %v1023, %v1022
    %v1029 = vpack.c.b16 %v1025, %v1024
    %v1035 = vsel %vm158, %v1009, 0
    %1037 = vmatprep.subr.bf16.mxu0 0
    %1038 = vmatpush1.bf16.msra.mxu0 %v1026
    %1039 = vmatprep.subr.bf16.mxu0 0
    %1040 = vmatpush1.bf16.msra.mxu0 %v1027
    %1041 = vmatprep.subr.bf16.mxu0 0
    %1042 = vmatpush1.bf16.msra.mxu0 %v1028
    %1043 = vmatprep.subr.bf16.mxu0 0
    %1044 = vmatpush1.bf16.msra.mxu0 %v1029
    %1045 = vmatprep.subr.bf16.mxu0 0
    %1046 = vmatpush1.bf16.msra.mxu0 0
    %1047 = vmatprep.subr.bf16.mxu0 0
    %1048 = vmatpush1.bf16.msra.mxu0 0
    %1049 = vmatprep.subr.bf16.mxu0 0
    %1050 = vmatpush1.bf16.msra.mxu0 0
    %1051 = vmatprep.subr.bf16.mxu0 0
    %1052 = vmatpush1.bf16.msra.mxu0 0
    %1053 = vmatprep.subr.bf16.mxu0 0
    %1054 = vmatpush1.bf16.msra.mxu0 0
    %1055 = vmatprep.subr.bf16.mxu0 0
    %1056 = vmatpush1.bf16.msra.mxu0 0
    %1057 = vmatprep.subr.bf16.mxu0 0
    %1058 = vmatpush1.bf16.msra.mxu0 0
    %1059 = vmatprep.subr.bf16.mxu0 0
    %1060 = vmatpush1.bf16.msra.mxu0 0
    %1061 = vmatprep.subr.bf16.mxu0 0
    %1062 = vmatpush1.bf16.msra.mxu0 0
    %1063 = vmatprep.subr.bf16.mxu0 0
    %1064 = vmatpush1.bf16.msra.mxu0 0
    %1065 = vmatprep.subr.bf16.mxu0 0
    %1066 = vmatpush1.bf16.msra.mxu0 0
    %1067 = vmatprep.subr.bf16.mxu0 0
    %1068 = vmatpush1.bf16.msra.mxu0 0
    %1069 = vmatprep.mubr.bf16.mxu0 0
    %1070 = vmatmul.mubr.bf16.gmra.mrb[0].mxu0 %v1035
    %v1071 = vpop.f32.mrb[0].mxu0
    %v1072 = vadd.f32 0.0, %v1071
    %v1073 = vpop.f32.mrb[0].mxu0
    %v1074 = vpop.f32.mrb[0].mxu0
    %v1075 = vpop.f32.mrb[0].mxu0
    %1076 = vdwg.mxu0
    %v1077 = vxor.u32 %v1072, 2147483648
    %v1078 = vmul.f32 %v1077, 1.442695
    %v1079 = vpow.pop %v1078
    %v1080 = vadd.f32 %v1079, 1.0
    %v1081 = vrcp.pop %v1080
    %v1082 = vmul.f32 1.0, %v1081
    %1084 = vrot.lane.b32.xlu0 %v988, 64
    %v1085 = vpop.permute.xlu0 %1084
    %v1087 = vsub.f32 %v1082, %v1085
    %1089 = vrot.lane.b32.xlu0 %v1087, 64
    %v1090 = vpop.permute.xlu0 %1089
    %v1092 = vmul.f32 %v1082, %v1090
    %v1093 = vadd.f32 %v988, %v1092
    %v1094 = vld [vmem:[#allocation7 + $0xc] sm:$0xf]
    %v1095 = vld [vmem:[#allocation7 + $0x1c] sm:$0xf]
    %v1096 = vld [vmem:[#allocation7 + $0x2c] sm:$0xf]
    %v1097 = vld [vmem:[#allocation7 + $0x3c] sm:$0xf]
    %v1098 = vld [vmem:[#allocation7 + $0x4c] sm:$0xf]
    %v1099 = vld [vmem:[#allocation7 + $0x5c] sm:$0xf]
    %v1100 = vld [vmem:[#allocation7 + $0x6c] sm:$0xf]
    %v1101 = vld [vmem:[#allocation7 + $0x7c] sm:$0xf]
    %v1102 = vpack.c.bf16 %v1000, %v1000
    %v1111 = vunpack.c.l.b16 %v1094
    %v1112 = vunpack.c.l.b16 %v1095
    %v1113 = vunpack.c.l.b16 %v1096
    %v1114 = vunpack.c.l.b16 %v1097
    %v1115 = vunpack.c.l.b16 %v1098
    %v1116 = vunpack.c.l.b16 %v1099
    %v1117 = vunpack.c.l.b16 %v1100
    %v1118 = vunpack.c.l.b16 %v1101
    %v1119 = vpack.c.b16 %v1112, %v1111
    %v1120 = vpack.c.b16 %v1114, %v1113
    %v1121 = vpack.c.b16 %v1116, %v1115
    %v1122 = vpack.c.b16 %v1118, %v1117
    %v1128 = vsel %vm158, %v1102, 0
    %1130 = vmatprep.subr.bf16.mxu0 0
    %1131 = vmatpush1.bf16.msra.mxu0 %v1119
    %1132 = vmatprep.subr.bf16.mxu0 0
    %1133 = vmatpush1.bf16.msra.mxu0 %v1120
    %1134 = vmatprep.subr.bf16.mxu0 0
    %1135 = vmatpush1.bf16.msra.mxu0 %v1121
    %1136 = vmatprep.subr.bf16.mxu0 0
    %1137 = vmatpush1.bf16.msra.mxu0 %v1122
    %1138 = vmatprep.subr.bf16.mxu0 0
    %1139 = vmatpush1.bf16.msra.mxu0 0
    %1140 = vmatprep.subr.bf16.mxu0 0
    %1141 = vmatpush1.bf16.msra.mxu0 0
    %1142 = vmatprep.subr.bf16.mxu0 0
    %1143 = vmatpush1.bf16.msra.mxu0 0
    %1144 = vmatprep.subr.bf16.mxu0 0
    %1145 = vmatpush1.bf16.msra.mxu0 0
    %1146 = vmatprep.subr.bf16.mxu0 0
    %1147 = vmatpush1.bf16.msra.mxu0 0
    %1148 = vmatprep.subr.bf16.mxu0 0
    %1149 = vmatpush1.bf16.msra.mxu0 0
    %1150 = vmatprep.subr.bf16.mxu0 0
    %1151 = vmatpush1.bf16.msra.mxu0 0
    %1152 = vmatprep.subr.bf16.mxu0 0
    %1153 = vmatpush1.bf16.msra.mxu0 0
    %1154 = vmatprep.subr.bf16.mxu0 0
    %1155 = vmatpush1.bf16.msra.mxu0 0
    %1156 = vmatprep.subr.bf16.mxu0 0
    %1157 = vmatpush1.bf16.msra.mxu0 0
    %1158 = vmatprep.subr.bf16.mxu0 0
    %1159 = vmatpush1.bf16.msra.mxu0 0
    %1160 = vmatprep.subr.bf16.mxu0 0
    %1161 = vmatpush1.bf16.msra.mxu0 0
    %1162 = vmatprep.mubr.bf16.mxu0 0
    %1163 = vmatmul.mubr.bf16.gmra.mrb[0].mxu0 %v1128
    %v1164 = vpop.f32.mrb[0].mxu0
    %v1165 = vadd.f32 0.0, %v1164
    %v1166 = vpop.f32.mrb[0].mxu0
    %v1167 = vpop.f32.mrb[0].mxu0
    %v1168 = vpop.f32.mrb[0].mxu0
    %1169 = vdwg.mxu0
    %v1170 = vxor.u32 %v1165, 2147483648
    %v1171 = vmul.f32 %v1170, 1.442695
    %v1172 = vpow.pop %v1171
    %v1173 = vadd.f32 %v1172, 1.0
    %v1174 = vrcp.pop %v1173
    %v1175 = vmul.f32 1.0, %v1174
    %1177 = vrot.lane.b32.xlu0 %v1000, 64
    %v1178 = vpop.permute.xlu0 %1177
    %v1180 = vsub.f32 %v1165, %v1178
    %1182 = vrot.lane.b32.xlu0 %v1180, 64
    %v1183 = vpop.permute.xlu0 %1182
    %v1185 = vmul.f32 %v1175, %v1183
    %v1186 = vadd.f32 %v1000, %v1185
    %v1187 = vadd.f32 %v988, %v1000
    %v1188 = vadd.f32 %v1187, %v1093
    %v1189 = vadd.f32 %v1188, %v1186
    %v1190 = vmul.f32 %v1189, 0.25
    %v1191 = vpack.c.bf16 %v1190, %v1190
    %v1192 = vld [vmem:[#allocation5] sm:$0xf]
    %v1193 = vld [vmem:[#allocation5 + $0x4] sm:$0xf]
    %v1194 = vld [vmem:[#allocation5 + $0x8] sm:$0xf]
    %v1195 = vld [vmem:[#allocation5 + $0xc] sm:$0xf]
    %v1196 = vld [vmem:[#allocation5 + $0x10] sm:$0xf]
    %v1197 = vld [vmem:[#allocation5 + $0x14] sm:$0xf]
    %v1198 = vld [vmem:[#allocation5 + $0x18] sm:$0xf]
    %v1199 = vld [vmem:[#allocation5 + $0x1c] sm:$0xf]
    %v1208 = vunpack.c.l.b16 %v1192
    %v1209 = vunpack.c.l.b16 %v1193
    %v1210 = vunpack.c.l.b16 %v1194
    %v1211 = vunpack.c.l.b16 %v1195
    %v1212 = vunpack.c.l.b16 %v1196
    %v1213 = vunpack.c.l.b16 %v1197
    %v1214 = vunpack.c.l.b16 %v1198
    %v1215 = vunpack.c.l.b16 %v1199
    %v1216 = vpack.c.b16 %v1209, %v1208
    %v1217 = vpack.c.b16 %v1211, %v1210
    %v1218 = vpack.c.b16 %v1213, %v1212
    %v1219 = vpack.c.b16 %v1215, %v1214
    %v1225 = vsel %vm158, %v1191, 0
    %1227 = vmatprep.subr.bf16.mxu0 0
    %1228 = vmatpush1.bf16.msra.mxu0 %v1216
    %1229 = vmatprep.subr.bf16.mxu0 0
    %1230 = vmatpush1.bf16.msra.mxu0 %v1217
    %1231 = vmatprep.subr.bf16.mxu0 0
    %1232 = vmatpush1.bf16.msra.mxu0 %v1218
    %1233 = vmatprep.subr.bf16.mxu0 0
    %1234 = vmatpush1.bf16.msra.mxu0 %v1219
    %1235 = vmatprep.subr.bf16.mxu0 0
    %1236 = vmatpush1.bf16.msra.mxu0 0
    %1237 = vmatprep.subr.bf16.mxu0 0
    %1238 = vmatpush1.bf16.msra.mxu0 0
    %1239 = vmatprep.subr.bf16.mxu0 0
    %1240 = vmatpush1.bf16.msra.mxu0 0
    %1241 = vmatprep.subr.bf16.mxu0 0
    %1242 = vmatpush1.bf16.msra.mxu0 0
    %1243 = vmatprep.subr.bf16.mxu0 0
    %1244 = vmatpush1.bf16.msra.mxu0 0
    %1245 = vmatprep.subr.bf16.mxu0 0
    %1246 = vmatpush1.bf16.msra.mxu0 0
    %1247 = vmatprep.subr.bf16.mxu0 0
    %1248 = vmatpush1.bf16.msra.mxu0 0
    %1249 = vmatprep.subr.bf16.mxu0 0
    %1250 = vmatpush1.bf16.msra.mxu0 0
    %1251 = vmatprep.subr.bf16.mxu0 0
    %1252 = vmatpush1.bf16.msra.mxu0 0
    %1253 = vmatprep.subr.bf16.mxu0 0
    %1254 = vmatpush1.bf16.msra.mxu0 0
    %1255 = vmatprep.subr.bf16.mxu0 0
    %1256 = vmatpush1.bf16.msra.mxu0 0
    %1257 = vmatprep.subr.bf16.mxu0 0
    %1258 = vmatpush1.bf16.msra.mxu0 0
    %1259 = vmatprep.mubr.bf16.mxu0 0
    %1260 = vmatmul.mubr.bf16.gmra.mrb[0].mxu0 %v1225
    %v1261 = vpop.f32.mrb[0].mxu0
    %v1262 = vadd.f32 %v680, %v1261
    %v1263 = vpop.f32.mrb[0].mxu0
    %v1264 = vpop.f32.mrb[0].mxu0
    %v1265 = vpop.f32.mrb[0].mxu0
    %1266 = vdwg.mxu0
    %v1267 = vsel %vm158, %v1262, -inf
    %1268 = vmax.xlane.f32.xlu0 %v1267
    %v1269 = vpop.xlane.xlu0 %1268
    %v1270 = vsub.f32 %v1262, %v1269
    %v1271 = vmul.f32 %v1270, 1.442695
    %v1272 = vpow.pop %v1271
    %v1273 = vsel %vm158, %v1272, 0.0
    %1274 = vadd.xlane.f32.xlu0 %v1273
    %v1275 = vpop.xlane.xlu0 %1274
    %v1276 = vlog2.pop %v1275
    %v1277 = vmul.f32 %v1276, 0.6931472
    %v1278 = vsub.f32 %v1270, %v1277
    %1279 = vst.msk [vmem:[#allocation8 + $0x8] sm:$0xff] %vm158, %v1278
    %1281 = vrot.lane.b32.xlu0 %v1190, 64
    %v1282 = vpop.permute.xlu0 %1281
    %v1284 = vsel %vm158, %v214, %v1282
    %v1285 = vpack.c.bf16 %v1284, %v1284
    %v1286 = vld [vmem:[%s4] sm:$0xf]
    %v1287 = vld [vmem:[%s4 + $0x4] sm:$0xf]
    %v1288 = vld [vmem:[%s4 + $0x8] sm:$0xf]
    %v1289 = vld [vmem:[%s4 + $0xc] sm:$0xf]
    %v1290 = vld [vmem:[%s4 + $0x10] sm:$0xf]
    %v1291 = vld [vmem:[%s4 + $0x14] sm:$0xf]
    %v1292 = vld [vmem:[%s4 + $0x18] sm:$0xf]
    %v1293 = vld [vmem:[%s4 + $0x1c] sm:$0xf]
    %v1294 = vld [vmem:[%s4 + $0x20] sm:$0xf]
    %v1295 = vld [vmem:[%s4 + $0x24] sm:$0xf]
    %v1296 = vld [vmem:[%s4 + $0x28] sm:$0xf]
    %v1297 = vld [vmem:[%s4 + $0x2c] sm:$0xf]
    %v1298 = vld [vmem:[%s4 + $0x30] sm:$0xf]
    %v1299 = vld [vmem:[%s4 + $0x34] sm:$0xf]
    %v1300 = vld [vmem:[%s4 + $0x38] sm:$0xf]
    %v1301 = vld [vmem:[%s4 + $0x3c] sm:$0xf]
    %v1318 = vunpack.c.l.b16 %v1286
    %v1319 = vunpack.c.l.b16 %v1287
    %v1320 = vunpack.c.l.b16 %v1288
    %v1321 = vunpack.c.l.b16 %v1289
    %v1322 = vunpack.c.l.b16 %v1290
    %v1323 = vunpack.c.l.b16 %v1291
    %v1324 = vunpack.c.l.b16 %v1292
    %v1325 = vunpack.c.l.b16 %v1293
    %v1326 = vunpack.c.l.b16 %v1294
    %v1327 = vunpack.c.l.b16 %v1295
    %v1328 = vunpack.c.l.b16 %v1296
    %v1329 = vunpack.c.l.b16 %v1297
    %v1330 = vunpack.c.l.b16 %v1298
    %v1331 = vunpack.c.l.b16 %v1299
    %v1332 = vunpack.c.l.b16 %v1300
    %v1333 = vunpack.c.l.b16 %v1301
    %v1334 = vpack.c.b16 %v1319, %v1318
    %v1335 = vpack.c.b16 %v1321, %v1320
    %v1336 = vpack.c.b16 %v1323, %v1322
    %v1337 = vpack.c.b16 %v1325, %v1324
    %v1338 = vpack.c.b16 %v1327, %v1326
    %v1339 = vpack.c.b16 %v1329, %v1328
    %v1340 = vpack.c.b16 %v1331, %v1330
    %v1341 = vpack.c.b16 %v1333, %v1332
    %1350 = vmatprep.subr.bf16.mxu0 0
    %1351 = vmatpush1.bf16.msra.mxu0 %v1334
    %1352 = vmatprep.subr.bf16.mxu0 0
    %1353 = vmatpush1.bf16.msra.mxu0 %v1335
    %1354 = vmatprep.subr.bf16.mxu0 0
    %1355 = vmatpush1.bf16.msra.mxu0 %v1336
    %1356 = vmatprep.subr.bf16.mxu0 0
    %1357 = vmatpush1.bf16.msra.mxu0 %v1337
    %1358 = vmatprep.subr.bf16.mxu0 0
    %1359 = vmatpush1.bf16.msra.mxu0 %v1338
    %1360 = vmatprep.subr.bf16.mxu0 0
    %1361 = vmatpush1.bf16.msra.mxu0 %v1339
    %1362 = vmatprep.subr.bf16.mxu0 0
    %1363 = vmatpush1.bf16.msra.mxu0 %v1340
    %1364 = vmatprep.subr.bf16.mxu0 0
    %1365 = vmatpush1.bf16.msra.mxu0 %v1341
    %1366 = vmatprep.subr.bf16.mxu0 0
    %1367 = vmatpush1.bf16.msra.mxu0 0
    %1368 = vmatprep.subr.bf16.mxu0 0
    %1369 = vmatpush1.bf16.msra.mxu0 0
    %1370 = vmatprep.subr.bf16.mxu0 0
    %1371 = vmatpush1.bf16.msra.mxu0 0
    %1372 = vmatprep.subr.bf16.mxu0 0
    %1373 = vmatpush1.bf16.msra.mxu0 0
    %1374 = vmatprep.subr.bf16.mxu0 0
    %1375 = vmatpush1.bf16.msra.mxu0 0
    %1376 = vmatprep.subr.bf16.mxu0 0
    %1377 = vmatpush1.bf16.msra.mxu0 0
    %1378 = vmatprep.subr.bf16.mxu0 0
    %1379 = vmatpush1.bf16.msra.mxu0 0
    %1380 = vmatprep.subr.bf16.mxu0 0
    %1381 = vmatpush1.bf16.msra.mxu0 0
    %1382 = vmatprep.mubr.bf16.mxu0 0
    %1383 = vmatmul.mubr.bf16.gmra.mrb[0].mxu0 %v1285
    %v1384 = vpop.f32.mrb[0].mxu0
    %v1385 = vadd.f32 0.0, %v1384
    %v1386 = vpop.f32.mrb[0].mxu0
    %v1387 = vpop.f32.mrb[0].mxu0
    %v1388 = vpop.f32.mrb[0].mxu0
    %1389 = vdwg.mxu0
    %v1390 = vxor.u32 %v1385, 2147483648
    %v1391 = vmul.f32 %v1390, 1.442695
    %v1392 = vpow.pop %v1391
    %v1393 = vadd.f32 %v1392, 1.0
    %v1394 = vrcp.pop %v1393
    %v1395 = vmul.f32 1.0, %v1394
    %v1396 = vtanh.pop %v1385
    %v1397 = vsub.f32 %v1396, %v1282
    %1399 = vrot.lane.b32.xlu0 %v1397, 64
    %v1400 = vpop.permute.xlu0 %1399
    %v1402 = vmul.f32 %v1395, %v1400
    %v1403 = vadd.f32 %v1190, %v1402
    %v1404 = vld [vmem:[#allocation7] sm:$0xff]
    %v1405 = vld [vmem:[#allocation7 + $0x10] sm:$0xff]
    %v1406 = vld [vmem:[#allocation7 + $0x20] sm:$0xff]
    %v1407 = vld [vmem:[#allocation7 + $0x30] sm:$0xff]
    %v1408 = vld [vmem:[#allocation7 + $0x40] sm:$0xff]
    %v1409 = vld [vmem:[#allocation7 + $0x50] sm:$0xff]
    %v1410 = vld [vmem:[#allocation7 + $0x60] sm:$0xff]
    %v1411 = vld [vmem:[#allocation7 + $0x70] sm:$0xff]
    %v1412 = vpack.c.bf16 %v1403, %v1403
    %v1421 = vunpack.c.l.b16 %v1404
    %v1422 = vunpack.c.h.b16 %v1404
    %v1423 = vunpack.c.l.b16 %v1405
    %v1424 = vunpack.c.h.b16 %v1405
    %v1425 = vunpack.c.l.b16 %v1406
    %v1426 = vunpack.c.h.b16 %v1406
    %v1427 = vunpack.c.l.b16 %v1407
    %v1428 = vunpack.c.h.b16 %v1407
    %v1429 = vunpack.c.l.b16 %v1408
    %v1430 = vunpack.c.h.b16 %v1408
    %v1431 = vunpack.c.l.b16 %v1409
    %v1432 = vunpack.c.h.b16 %v1409
    %v1433 = vunpack.c.l.b16 %v1410
    %v1434 = vunpack.c.h.b16 %v1410
    %v1435 = vunpack.c.l.b16 %v1411
    %v1436 = vunpack.c.h.b16 %v1411
    %v1437 = vpack.c.b16 %v1423, %v1421
    %v1438 = vpack.c.b16 %v1424, %v1422
    %v1439 = vpack.c.b16 %v1427, %v1425
    %v1440 = vpack.c.b16 %v1428, %v1426
    %v1441 = vpack.c.b16 %v1431, %v1429
    %v1442 = vpack.c.b16 %v1432, %v1430
    %v1443 = vpack.c.b16 %v1435, %v1433
    %v1444 = vpack.c.b16 %v1436, %v1434
    %v1454 = vsel %vm158, %v1412, 0
    %1456 = vmatprep.subr.bf16.mxu0 %v1438
    %1457 = vmatpush1.bf16.msra.mxu0 %v1437
    %1458 = vmatprep.subr.bf16.mxu0 %v1440
    %1459 = vmatpush1.bf16.msra.mxu0 %v1439
    %1460 = vmatprep.subr.bf16.mxu0 %v1442
    %1461 = vmatpush1.bf16.msra.mxu0 %v1441
    %1462 = vmatprep.subr.bf16.mxu0 %v1444
    %1463 = vmatpush1.bf16.msra.mxu0 %v1443
    %1464 = vmatprep.subr.bf16.mxu0 0
    %1465 = vmatpush1.bf16.msra.mxu0 0
    %1466 = vmatprep.subr.bf16.mxu0 0
    %1467 = vmatpush1.bf16.msra.mxu0 0
    %1468 = vmatprep.subr.bf16.mxu0 0
    %1469 = vmatpush1.bf16.msra.mxu0 0
    %1470 = vmatprep.subr.bf16.mxu0 0
    %1471 = vmatpush1.bf16.msra.mxu0 0
    %1472 = vmatprep.subr.bf16.mxu0 0
    %1473 = vmatpush1.bf16.msra.mxu0 0
    %1474 = vmatprep.subr.bf16.mxu0 0
    %1475 = vmatpush1.bf16.msra.mxu0 0
    %1476 = vmatprep.subr.bf16.mxu0 0
    %1477 = vmatpush1.bf16.msra.mxu0 0
    %1478 = vmatprep.subr.bf16.mxu0 0
    %1479 = vmatpush1.bf16.msra.mxu0 0
    %1480 = vmatprep.subr.bf16.mxu0 0
    %1481 = vmatpush1.bf16.msra.mxu0 0
    %1482 = vmatprep.subr.bf16.mxu0 0
    %1483 = vmatpush1.bf16.msra.mxu0 0
    %1484 = vmatprep.subr.bf16.mxu0 0
    %1485 = vmatpush1.bf16.msra.mxu0 0
    %1486 = vmatprep.subr.bf16.mxu0 0
    %1487 = vmatpush1.bf16.msra.mxu0 0
    %1488 = vmatprep.mubr.bf16.mxu0 0
    %1489 = vmatmul.mubr.bf16.gmra.mrb[0].mxu0 %v1454
    %v1490 = vpop.f32.mrb[0].mxu0
    %v1491 = vadd.f32 0.0, %v1490
    %v1492 = vpop.f32.mrb[0].mxu0
    %v1493 = vadd.f32 0.0, %v1492
    %v1494 = vpop.f32.mrb[0].mxu0
    %v1495 = vpop.f32.mrb[0].mxu0
    %1496 = vdwg.mxu0
    %v1497 = vxor.u32 %v1491, 2147483648
    %v1498 = vmul.f32 %v1497, 1.442695
    %v1499 = vpow.pop %v1498
    %v1500 = vadd.f32 %v1499, 1.0
    %v1501 = vrcp.pop %v1500
    %v1502 = vmul.f32 1.0, %v1501
    %v1503 = vtanh.pop %v1493
    %v1504 = vsub.f32 %v1503, %v1403
    %v1505 = vmul.f32 %v1502, %v1504
    %v1506 = vadd.f32 %v1403, %v1505
    %v1507 = vmax.f32 %v1493, 0.0
    %1509 = vrot.lane.b32.xlu0 %v1403, 64
    %v1510 = vpop.permute.xlu0 %1509
    %v1512 = vsub.f32 %v1507, %v1510
    %v1513 = vmul.f32 %v1502, %v1512
    %1515 = vrot.lane.b32.xlu0 %v1513, 64
    %v1516 = vpop.permute.xlu0 %1515
    %v1518 = vadd.f32 %v1403, %v1516
    %v1519 = vld [vmem:[#allocation7 + $0x8] sm:$0xf]
    %v1520 = vld [vmem:[#allocation7 + $0x18] sm:$0xf]
    %v1521 = vld [vmem:[#allocation7 + $0x28] sm:$0xf]
    %v1522 = vld [vmem:[#allocation7 + $0x38] sm:$0xf]
    %v1523 = vld [vmem:[#allocation7 + $0x48] sm:$0xf]
    %v1524 = vld [vmem:[#allocation7 + $0x58] sm:$0xf]
    %v1525 = vld [vmem:[#allocation7 + $0x68] sm:$0xf]
    %v1526 = vld [vmem:[#allocation7 + $0x78] sm:$0xf]
    %v1527 = vpack.c.bf16 %v1506, %v1506
    %v1536 = vunpack.c.l.b16 %v1519
    %v1537 = vunpack.c.l.b16 %v1520
    %v1538 = vunpack.c.l.b16 %v1521
    %v1539 = vunpack.c.l.b16 %v1522
    %v1540 = vunpack.c.l.b16 %v1523
    %v1541 = vunpack.c.l.b16 %v1524
    %v1542 = vunpack.c.l.b16 %v1525
    %v1543 = vunpack.c.l.b16 %v1526
    %v1544 = vpack.c.b16 %v1537, %v1536
    %v1545 = vpack.c.b16 %v1539, %v1538
    %v1546 = vpack.c.b16 %v1541, %v1540
    %v1547 = vpack.c.b16 %v1543, %v1542
    %v1553 = vsel %vm158, %v1527, 0
    %1555 = vmatprep.subr.bf16.mxu0 0
    %1556 = vmatpush1.bf16.msra.mxu0 %v1544
    %1557 = vmatprep.subr.bf16.mxu0 0
    %1558 = vmatpush1.bf16.msra.mxu0 %v1545
    %1559 = vmatprep.subr.bf16.mxu0 0
    %1560 = vmatpush1.bf16.msra.mxu0 %v1546
    %1561 = vmatprep.subr.bf16.mxu0 0
    %1562 = vmatpush1.bf16.msra.mxu0 %v1547
    %1563 = vmatprep.subr.bf16.mxu0 0
    %1564 = vmatpush1.bf16.msra.mxu0 0
    %1565 = vmatprep.subr.bf16.mxu0 0
    %1566 = vmatpush1.bf16.msra.mxu0 0
    %1567 = vmatprep.subr.bf16.mxu0 0
    %1568 = vmatpush1.bf16.msra.mxu0 0
    %1569 = vmatprep.subr.bf16.mxu0 0
    %1570 = vmatpush1.bf16.msra.mxu0 0
    %1571 = vmatprep.subr.bf16.mxu0 0
    %1572 = vmatpush1.bf16.msra.mxu0 0
    %1573 = vmatprep.subr.bf16.mxu0 0
    %1574 = vmatpush1.bf16.msra.mxu0 0
    %1575 = vmatprep.subr.bf16.mxu0 0
    %1576 = vmatpush1.bf16.msra.mxu0 0
    %1577 = vmatprep.subr.bf16.mxu0 0
    %1578 = vmatpush1.bf16.msra.mxu0 0
    %1579 = vmatprep.subr.bf16.mxu0 0
    %1580 = vmatpush1.bf16.msra.mxu0 0
    %1581 = vmatprep.subr.bf16.mxu0 0
    %1582 = vmatpush1.bf16.msra.mxu0 0
    %1583 = vmatprep.subr.bf16.mxu0 0
    %1584 = vmatpush1.bf16.msra.mxu0 0
    %1585 = vmatprep.subr.bf16.mxu0 0
    %1586 = vmatpush1.bf16.msra.mxu0 0
    %1587 = vmatprep.mubr.bf16.mxu0 0
    %1588 = vmatmul.mubr.bf16.gmra.mrb[0].mxu0 %v1553
    %v1589 = vpop.f32.mrb[0].mxu0
    %v1590 = vadd.f32 0.0, %v1589
    %v1591 = vpop.f32.mrb[0].mxu0
    %v1592 = vpop.f32.mrb[0].mxu0
    %v1593 = vpop.f32.mrb[0].mxu0
    %1594 = vdwg.mxu0
    %v1595 = vxor.u32 %v1590, 2147483648
    %v1596 = vmul.f32 %v1595, 1.442695
    %v1597 = vpow.pop %v1596
    %v1598 = vadd.f32 %v1597, 1.0
    %v1599 = vrcp.pop %v1598
    %v1600 = vmul.f32 1.0, %v1599
    %1602 = vrot.lane.b32.xlu0 %v1506, 64
    %v1603 = vpop.permute.xlu0 %1602
    %v1605 = vsub.f32 %v1600, %v1603
    %1607 = vrot.lane.b32.xlu0 %v1605, 64
    %v1608 = vpop.permute.xlu0 %1607
    %v1610 = vmul.f32 %v1600, %v1608
    %v1611 = vadd.f32 %v1506, %v1610
    %v1612 = vld [vmem:[#allocation7 + $0xc] sm:$0xf]
    %v1613 = vld [vmem:[#allocation7 + $0x1c] sm:$0xf]
    %v1614 = vld [vmem:[#allocation7 + $0x2c] sm:$0xf]
    %v1615 = vld [vmem:[#allocation7 + $0x3c] sm:$0xf]
    %v1616 = vld [vmem:[#allocation7 + $0x4c] sm:$0xf]
    %v1617 = vld [vmem:[#allocation7 + $0x5c] sm:$0xf]
    %v1618 = vld [vmem:[#allocation7 + $0x6c] sm:$0xf]
    %v1619 = vld [vmem:[#allocation7 + $0x7c] sm:$0xf]
    %v1620 = vpack.c.bf16 %v1518, %v1518
    %v1629 = vunpack.c.l.b16 %v1612
    %v1630 = vunpack.c.l.b16 %v1613
    %v1631 = vunpack.c.l.b16 %v1614
    %v1632 = vunpack.c.l.b16 %v1615
    %v1633 = vunpack.c.l.b16 %v1616
    %v1634 = vunpack.c.l.b16 %v1617
    %v1635 = vunpack.c.l.b16 %v1618
    %v1636 = vunpack.c.l.b16 %v1619
    %v1637 = vpack.c.b16 %v1630, %v1629
    %v1638 = vpack.c.b16 %v1632, %v1631
    %v1639 = vpack.c.b16 %v1634, %v1633
    %v1640 = vpack.c.b16 %v1636, %v1635
    %v1646 = vsel %vm158, %v1620, 0
    %1648 = vmatprep.subr.bf16.mxu0 0
    %1649 = vmatpush1.bf16.msra.mxu0 %v1637
    %1650 = vmatprep.subr.bf16.mxu0 0
    %1651 = vmatpush1.bf16.msra.mxu0 %v1638
    %1652 = vmatprep.subr.bf16.mxu0 0
    %1653 = vmatpush1.bf16.msra.mxu0 %v1639
    %1654 = vmatprep.subr.bf16.mxu0 0
    %1655 = vmatpush1.bf16.msra.mxu0 %v1640
    %1656 = vmatprep.subr.bf16.mxu0 0
    %1657 = vmatpush1.bf16.msra.mxu0 0
    %1658 = vmatprep.subr.bf16.mxu0 0
    %1659 = vmatpush1.bf16.msra.mxu0 0
    %1660 = vmatprep.subr.bf16.mxu0 0
    %1661 = vmatpush1.bf16.msra.mxu0 0
    %1662 = vmatprep.subr.bf16.mxu0 0
    %1663 = vmatpush1.bf16.msra.mxu0 0
    %1664 = vmatprep.subr.bf16.mxu0 0
    %1665 = vmatpush1.bf16.msra.mxu0 0
    %1666 = vmatprep.subr.bf16.mxu0 0
    %1667 = vmatpush1.bf16.msra.mxu0 0
    %1668 = vmatprep.subr.bf16.mxu0 0
    %1669 = vmatpush1.bf16.msra.mxu0 0
    %1670 = vmatprep.subr.bf16.mxu0 0
    %1671 = vmatpush1.bf16.msra.mxu0 0
    %1672 = vmatprep.subr.bf16.mxu0 0
    %1673 = vmatpush1.bf16.msra.mxu0 0
    %1674 = vmatprep.subr.bf16.mxu0 0
    %1675 = vmatpush1.bf16.msra.mxu0 0
    %1676 = vmatprep.subr.bf16.mxu0 0
    %1677 = vmatpush1.bf16.msra.mxu0 0
    %1678 = vmatprep.subr.bf16.mxu0 0
    %1679 = vmatpush1.bf16.msra.mxu0 0
    %1680 = vmatprep.mubr.bf16.mxu0 0
    %1681 = vmatmul.mubr.bf16.gmra.mrb[0].mxu0 %v1646
    %v1682 = vpop.f32.mrb[0].mxu0
    %v1683 = vadd.f32 0.0, %v1682
    %v1684 = vpop.f32.mrb[0].mxu0
    %v1685 = vpop.f32.mrb[0].mxu0
    %v1686 = vpop.f32.mrb[0].mxu0
    %1687 = vdwg.mxu0
    %v1688 = vxor.u32 %v1683, 2147483648
    %v1689 = vmul.f32 %v1688, 1.442695
    %v1690 = vpow.pop %v1689
    %v1691 = vadd.f32 %v1690, 1.0
    %v1692 = vrcp.pop %v1691
    %v1693 = vmul.f32 1.0, %v1692
    %1695 = vrot.lane.b32.xlu0 %v1518, 64
    %v1696 = vpop.permute.xlu0 %1695
    %v1698 = vsub.f32 %v1683, %v1696
    %1700 = vrot.lane.b32.xlu0 %v1698, 64
    %v1701 = vpop.permute.xlu0 %1700
    %v1703 = vmul.f32 %v1693, %v1701
    %v1704 = vadd.f32 %v1518, %v1703
    %v1705 = vadd.f32 %v1506, %v1518
    %v1706 = vadd.f32 %v1705, %v1611
    %v1707 = vadd.f32 %v1706, %v1704
    %v1708 = vmul.f32 %v1707, 0.25
    %v1709 = vpack.c.bf16 %v1708, %v1708
    %v1710 = vld [vmem:[#allocation5] sm:$0xf]
    %v1711 = vld [vmem:[#allocation5 + $0x4] sm:$0xf]
    %v1712 = vld [vmem:[#allocation5 + $0x8] sm:$0xf]
    %v1713 = vld [vmem:[#allocation5 + $0xc] sm:$0xf]
    %v1714 = vld [vmem:[#allocation5 + $0x10] sm:$0xf]
    %v1715 = vld [vmem:[#allocation5 + $0x14] sm:$0xf]
    %v1716 = vld [vmem:[#allocation5 + $0x18] sm:$0xf]
    %v1717 = vld [vmem:[#allocation5 + $0x1c] sm:$0xf]
    %v1726 = vunpack.c.l.b16 %v1710
    %v1727 = vunpack.c.l.b16 %v1711
    %v1728 = vunpack.c.l.b16 %v1712
    %v1729 = vunpack.c.l.b16 %v1713
    %v1730 = vunpack.c.l.b16 %v1714
    %v1731 = vunpack.c.l.b16 %v1715
    %v1732 = vunpack.c.l.b16 %v1716
    %v1733 = vunpack.c.l.b16 %v1717
    %v1734 = vpack.c.b16 %v1727, %v1726
    %v1735 = vpack.c.b16 %v1729, %v1728
    %v1736 = vpack.c.b16 %v1731, %v1730
    %v1737 = vpack.c.b16 %v1733, %v1732
    %v1743 = vsel %vm158, %v1709, 0
    %1745 = vmatprep.subr.bf16.mxu0 0
    %1746 = vmatpush1.bf16.msra.mxu0 %v1734
    %1747 = vmatprep.subr.bf16.mxu0 0
    %1748 = vmatpush1.bf16.msra.mxu0 %v1735
    %1749 = vmatprep.subr.bf16.mxu0 0
    %1750 = vmatpush1.bf16.msra.mxu0 %v1736
    %1751 = vmatprep.subr.bf16.mxu0 0
    %1752 = vmatpush1.bf16.msra.mxu0 %v1737
    %1753 = vmatprep.subr.bf16.mxu0 0
    %1754 = vmatpush1.bf16.msra.mxu0 0
    %1755 = vmatprep.subr.bf16.mxu0 0
    %1756 = vmatpush1.bf16.msra.mxu0 0
    %1757 = vmatprep.subr.bf16.mxu0 0
    %1758 = vmatpush1.bf16.msra.mxu0 0
    %1759 = vmatprep.subr.bf16.mxu0 0
    %1760 = vmatpush1.bf16.msra.mxu0 0
    %1761 = vmatprep.subr.bf16.mxu0 0
    %1762 = vmatpush1.bf16.msra.mxu0 0
    %1763 = vmatprep.subr.bf16.mxu0 0
    %1764 = vmatpush1.bf16.msra.mxu0 0
    %1765 = vmatprep.subr.bf16.mxu0 0
    %1766 = vmatpush1.bf16.msra.mxu0 0
    %1767 = vmatprep.subr.bf16.mxu0 0
    %1768 = vmatpush1.bf16.msra.mxu0 0
    %1769 = vmatprep.subr.bf16.mxu0 0
    %1770 = vmatpush1.bf16.msra.mxu0 0
    %1771 = vmatprep.subr.bf16.mxu0 0
    %1772 = vmatpush1.bf16.msra.mxu0 0
    %1773 = vmatprep.subr.bf16.mxu0 0
    %1774 = vmatpush1.bf16.msra.mxu0 0
    %1775 = vmatprep.subr.bf16.mxu0 0
    %1776 = vmatpush1.bf16.msra.mxu0 0
    %1777 = vmatprep.mubr.bf16.mxu0 0
    %1778 = vmatmul.mubr.bf16.gmra.mrb[0].mxu0 %v1743
    %v1779 = vpop.f32.mrb[0].mxu0
    %v1780 = vadd.f32 %v680, %v1779
    %v1781 = vpop.f32.mrb[0].mxu0
    %v1782 = vpop.f32.mrb[0].mxu0
    %v1783 = vpop.f32.mrb[0].mxu0
    %1784 = vdwg.mxu0
    %v1785 = vsel %vm158, %v1780, -inf
    %1786 = vmax.xlane.f32.xlu0 %v1785
    %v1787 = vpop.xlane.xlu0 %1786
    %v1788 = vsub.f32 %v1780, %v1787
    %v1789 = vmul.f32 %v1788, 1.442695
    %v1790 = vpow.pop %v1789
    %v1791 = vsel %vm158, %v1790, 0.0
    %1792 = vadd.xlane.f32.xlu0 %v1791
    %v1793 = vpop.xlane.xlu0 %1792
    %v1794 = vlog2.pop %v1793
    %v1795 = vmul.f32 %v1794, 0.6931472
    %v1796 = vsub.f32 %v1788, %v1795
    %1797 = vst.msk [vmem:[#allocation8 + $0x10] sm:$0xff] %vm158, %v1796
    %1799 = vrot.lane.b32.xlu0 %v1708, 64
    %v1800 = vpop.permute.xlu0 %1799
    %v1802 = vsel %vm158, %v217, %v1800
    %v1803 = vpack.c.bf16 %v1802, %v1802
    %v1804 = vld [vmem:[%s4] sm:$0xf]
    %v1805 = vld [vmem:[%s4 + $0x4] sm:$0xf]
    %v1806 = vld [vmem:[%s4 + $0x8] sm:$0xf]
    %v1807 = vld [vmem:[%s4 + $0xc] sm:$0xf]
    %v1808 = vld [vmem:[%s4 + $0x10] sm:$0xf]
    %v1809 = vld [vmem:[%s4 + $0x14] sm:$0xf]
    %v1810 = vld [vmem:[%s4 + $0x18] sm:$0xf]
    %v1811 = vld [vmem:[%s4 + $0x1c] sm:$0xf]
    %v1812 = vld [vmem:[%s4 + $0x20] sm:$0xf]
    %v1813 = vld [vmem:[%s4 + $0x24] sm:$0xf]
    %v1814 = vld [vmem:[%s4 + $0x28] sm:$0xf]
    %v1815 = vld [vmem:[%s4 + $0x2c] sm:$0xf]
    %v1816 = vld [vmem:[%s4 + $0x30] sm:$0xf]
    %v1817 = vld [vmem:[%s4 + $0x34] sm:$0xf]
    %v1818 = vld [vmem:[%s4 + $0x38] sm:$0xf]
    %v1819 = vld [vmem:[%s4 + $0x3c] sm:$0xf]
    %v1836 = vunpack.c.l.b16 %v1804
    %v1837 = vunpack.c.l.b16 %v1805
    %v1838 = vunpack.c.l.b16 %v1806
    %v1839 = vunpack.c.l.b16 %v1807
    %v1840 = vunpack.c.l.b16 %v1808
    %v1841 = vunpack.c.l.b16 %v1809
    %v1842 = vunpack.c.l.b16 %v1810
    %v1843 = vunpack.c.l.b16 %v1811
    %v1844 = vunpack.c.l.b16 %v1812
    %v1845 = vunpack.c.l.b16 %v1813
    %v1846 = vunpack.c.l.b16 %v1814
    %v1847 = vunpack.c.l.b16 %v1815
    %v1848 = vunpack.c.l.b16 %v1816
    %v1849 = vunpack.c.l.b16 %v1817
    %v1850 = vunpack.c.l.b16 %v1818
    %v1851 = vunpack.c.l.b16 %v1819
    %v1852 = vpack.c.b16 %v1837, %v1836
    %v1853 = vpack.c.b16 %v1839, %v1838
    %v1854 = vpack.c.b16 %v1841, %v1840
    %v1855 = vpack.c.b16 %v1843, %v1842
    %v1856 = vpack.c.b16 %v1845, %v1844
    %v1857 = vpack.c.b16 %v1847, %v1846
    %v1858 = vpack.c.b16 %v1849, %v1848
    %v1859 = vpack.c.b16 %v1851, %v1850
    %1868 = vmatprep.subr.bf16.mxu0 0
    %1869 = vmatpush1.bf16.msra.mxu0 %v1852
    %1870 = vmatprep.subr.bf16.mxu0 0
    %1871 = vmatpush1.bf16.msra.mxu0 %v1853
    %1872 = vmatprep.subr.bf16.mxu0 0
    %1873 = vmatpush1.bf16.msra.mxu0 %v1854
    %1874 = vmatprep.subr.bf16.mxu0 0
    %1875 = vmatpush1.bf16.msra.mxu0 %v1855
    %1876 = vmatprep.subr.bf16.mxu0 0
    %1877 = vmatpush1.bf16.msra.mxu0 %v1856
    %1878 = vmatprep.subr.bf16.mxu0 0
    %1879 = vmatpush1.bf16.msra.mxu0 %v1857
    %1880 = vmatprep.subr.bf16.mxu0 0
    %1881 = vmatpush1.bf16.msra.mxu0 %v1858
    %1882 = vmatprep.subr.bf16.mxu0 0
    %1883 = vmatpush1.bf16.msra.mxu0 %v1859
    %1884 = vmatprep.subr.bf16.mxu0 0
    %1885 = vmatpush1.bf16.msra.mxu0 0
    %1886 = vmatprep.subr.bf16.mxu0 0
    %1887 = vmatpush1.bf16.msra.mxu0 0
    %1888 = vmatprep.subr.bf16.mxu0 0
    %1889 = vmatpush1.bf16.msra.mxu0 0
    %1890 = vmatprep.subr.bf16.mxu0 0
    %1891 = vmatpush1.bf16.msra.mxu0 0
    %1892 = vmatprep.subr.bf16.mxu0 0
    %1893 = vmatpush1.bf16.msra.mxu0 0
    %1894 = vmatprep.subr.bf16.mxu0 0
    %1895 = vmatpush1.bf16.msra.mxu0 0
    %1896 = vmatprep.subr.bf16.mxu0 0
    %1897 = vmatpush1.bf16.msra.mxu0 0
    %1898 = vmatprep.subr.bf16.mxu0 0
    %1899 = vmatpush1.bf16.msra.mxu0 0
    %1900 = vmatprep.mubr.bf16.mxu0 0
    %1901 = vmatmul.mubr.bf16.gmra.mrb[0].mxu0 %v1803
    %v1902 = vpop.f32.mrb[0].mxu0
    %v1903 = vadd.f32 0.0, %v1902
    %v1904 = vpop.f32.mrb[0].mxu0
    %v1905 = vpop.f32.mrb[0].mxu0
    %v1906 = vpop.f32.mrb[0].mxu0
    %1907 = vdwg.mxu0
    %v1908 = vxor.u32 %v1903, 2147483648
    %v1909 = vmul.f32 %v1908, 1.442695
    %v1910 = vpow.pop %v1909
    %v1911 = vadd.f32 %v1910, 1.0
    %v1912 = vrcp.pop %v1911
    %v1913 = vmul.f32 1.0, %v1912
    %v1914 = vtanh.pop %v1903
    %v1915 = vsub.f32 %v1914, %v1800
    %1917 = vrot.lane.b32.xlu0 %v1915, 64
    %v1918 = vpop.permute.xlu0 %1917
    %v1920 = vmul.f32 %v1913, %v1918
    %v1921 = vadd.f32 %v1708, %v1920
    %v1922 = vld [vmem:[#allocation7] sm:$0xff]
    %v1923 = vld [vmem:[#allocation7 + $0x10] sm:$0xff]
    %v1924 = vld [vmem:[#allocation7 + $0x20] sm:$0xff]
    %v1925 = vld [vmem:[#allocation7 + $0x30] sm:$0xff]
    %v1926 = vld [vmem:[#allocation7 + $0x40] sm:$0xff]
    %v1927 = vld [vmem:[#allocation7 + $0x50] sm:$0xff]
    %v1928 = vld [vmem:[#allocation7 + $0x60] sm:$0xff]
    %v1929 = vld [vmem:[#allocation7 + $0x70] sm:$0xff]
    %v1930 = vpack.c.bf16 %v1921, %v1921
    %v1939 = vunpack.c.l.b16 %v1922
    %v1940 = vunpack.c.h.b16 %v1922
    %v1941 = vunpack.c.l.b16 %v1923
    %v1942 = vunpack.c.h.b16 %v1923
    %v1943 = vunpack.c.l.b16 %v1924
    %v1944 = vunpack.c.h.b16 %v1924
    %v1945 = vunpack.c.l.b16 %v1925
    %v1946 = vunpack.c.h.b16 %v1925
    %v1947 = vunpack.c.l.b16 %v1926
    %v1948 = vunpack.c.h.b16 %v1926
    %v1949 = vunpack.c.l.b16 %v1927
    %v1950 = vunpack.c.h.b16 %v1927
    %v1951 = vunpack.c.l.b16 %v1928
    %v1952 = vunpack.c.h.b16 %v1928
    %v1953 = vunpack.c.l.b16 %v1929
    %v1954 = vunpack.c.h.b16 %v1929
    %v1955 = vpack.c.b16 %v1941, %v1939
    %v1956 = vpack.c.b16 %v1942, %v1940
    %v1957 = vpack.c.b16 %v1945, %v1943
    %v1958 = vpack.c.b16 %v1946, %v1944
    %v1959 = vpack.c.b16 %v1949, %v1947
    %v1960 = vpack.c.b16 %v1950, %v1948
    %v1961 = vpack.c.b16 %v1953, %v1951
    %v1962 = vpack.c.b16 %v1954, %v1952
    %v1972 = vsel %vm158, %v1930, 0
    %1974 = vmatprep.subr.bf16.mxu0 %v1956
    %1975 = vmatpush1.bf16.msra.mxu0 %v1955
    %1976 = vmatprep.subr.bf16.mxu0 %v1958
    %1977 = vmatpush1.bf16.msra.mxu0 %v1957
    %1978 = vmatprep.subr.bf16.mxu0 %v1960
    %1979 = vmatpush1.bf16.msra.mxu0 %v1959
    %1980 = vmatprep.subr.bf16.mxu0 %v1962
    %1981 = vmatpush1.bf16.msra.mxu0 %v1961
    %1982 = vmatprep.subr.bf16.mxu0 0
    %1983 = vmatpush1.bf16.msra.mxu0 0
    %1984 = vmatprep.subr.bf16.mxu0 0
    %1985 = vmatpush1.bf16.msra.mxu0 0
    %1986 = vmatprep.subr.bf16.mxu0 0
    %1987 = vmatpush1.bf16.msra.mxu0 0
    %1988 = vmatprep.subr.bf16.mxu0 0
    %1989 = vmatpush1.bf16.msra.mxu0 0
    %1990 = vmatprep.subr.bf16.mxu0 0
    %1991 = vmatpush1.bf16.msra.mxu0 0
    %1992 = vmatprep.subr.bf16.mxu0 0
    %1993 = vmatpush1.bf16.msra.mxu0 0
    %1994 = vmatprep.subr.bf16.mxu0 0
    %1995 = vmatpush1.bf16.msra.mxu0 0
    %1996 = vmatprep.subr.bf16.mxu0 0
    %1997 = vmatpush1.bf16.msra.mxu0 0
    %1998 = vmatprep.subr.bf16.mxu0 0
    %1999 = vmatpush1.bf16.msra.mxu0 0
    %2000 = vmatprep.subr.bf16.mxu0 0
    %2001 = vmatpush1.bf16.msra.mxu0 0
    %2002 = vmatprep.subr.bf16.mxu0 0
    %2003 = vmatpush1.bf16.msra.mxu0 0
    %2004 = vmatprep.subr.bf16.mxu0 0
    %2005 = vmatpush1.bf16.msra.mxu0 0
    %2006 = vmatprep.mubr.bf16.mxu0 0
    %2007 = vmatmul.mubr.bf16.gmra.mrb[0].mxu0 %v1972
    %v2008 = vpop.f32.mrb[0].mxu0
    %v2009 = vadd.f32 0.0, %v2008
    %v2010 = vpop.f32.mrb[0].mxu0
    %v2011 = vadd.f32 0.0, %v2010
    %v2012 = vpop.f32.mrb[0].mxu0
    %v2013 = vpop.f32.mrb[0].mxu0
    %2014 = vdwg.mxu0
    %v2015 = vxor.u32 %v2009, 2147483648
    %v2016 = vmul.f32 %v2015, 1.442695
    %v2017 = vpow.pop %v2016
    %v2018 = vadd.f32 %v2017, 1.0
    %v2019 = vrcp.pop %v2018
    %v2020 = vmul.f32 1.0, %v2019
    %v2021 = vtanh.pop %v2011
    %v2022 = vsub.f32 %v2021, %v1921
    %v2023 = vmul.f32 %v2020, %v2022
    %v2024 = vadd.f32 %v1921, %v2023
    %v2025 = vmax.f32 %v2011, 0.0
    %2027 = vrot.lane.b32.xlu0 %v1921, 64
    %v2028 = vpop.permute.xlu0 %2027
    %v2030 = vsub.f32 %v2025, %v2028
    %v2031 = vmul.f32 %v2020, %v2030
    %2033 = vrot.lane.b32.xlu0 %v2031, 64
    %v2034 = vpop.permute.xlu0 %2033
    %v2036 = vadd.f32 %v1921, %v2034
    %v2037 = vld [vmem:[#allocation7 + $0x8] sm:$0xf]
    %v2038 = vld [vmem:[#allocation7 + $0x18] sm:$0xf]
    %v2039 = vld [vmem:[#allocation7 + $0x28] sm:$0xf]
    %v2040 = vld [vmem:[#allocation7 + $0x38] sm:$0xf]
    %v2041 = vld [vmem:[#allocation7 + $0x48] sm:$0xf]
    %v2042 = vld [vmem:[#allocation7 + $0x58] sm:$0xf]
    %v2043 = vld [vmem:[#allocation7 + $0x68] sm:$0xf]
    %v2044 = vld [vmem:[#allocation7 + $0x78] sm:$0xf]
    %v2045 = vpack.c.bf16 %v2024, %v2024
    %v2054 = vunpack.c.l.b16 %v2037
    %v2055 = vunpack.c.l.b16 %v2038
    %v2056 = vunpack.c.l.b16 %v2039
    %v2057 = vunpack.c.l.b16 %v2040
    %v2058 = vunpack.c.l.b16 %v2041
    %v2059 = vunpack.c.l.b16 %v2042
    %v2060 = vunpack.c.l.b16 %v2043
    %v2061 = vunpack.c.l.b16 %v2044
    %v2062 = vpack.c.b16 %v2055, %v2054
    %v2063 = vpack.c.b16 %v2057, %v2056
    %v2064 = vpack.c.b16 %v2059, %v2058
    %v2065 = vpack.c.b16 %v2061, %v2060
    %v2071 = vsel %vm158, %v2045, 0
    %2073 = vmatprep.subr.bf16.mxu0 0
    %2074 = vmatpush1.bf16.msra.mxu0 %v2062
    %2075 = vmatprep.subr.bf16.mxu0 0
    %2076 = vmatpush1.bf16.msra.mxu0 %v2063
    %2077 = vmatprep.subr.bf16.mxu0 0
    %2078 = vmatpush1.bf16.msra.mxu0 %v2064
    %2079 = vmatprep.subr.bf16.mxu0 0
    %2080 = vmatpush1.bf16.msra.mxu0 %v2065
    %2081 = vmatprep.subr.bf16.mxu0 0
    %2082 = vmatpush1.bf16.msra.mxu0 0
    %2083 = vmatprep.subr.bf16.mxu0 0
    %2084 = vmatpush1.bf16.msra.mxu0 0
    %2085 = vmatprep.subr.bf16.mxu0 0
    %2086 = vmatpush1.bf16.msra.mxu0 0
    %2087 = vmatprep.subr.bf16.mxu0 0
    %2088 = vmatpush1.bf16.msra.mxu0 0
    %2089 = vmatprep.subr.bf16.mxu0 0
    %2090 = vmatpush1.bf16.msra.mxu0 0
    %2091 = vmatprep.subr.bf16.mxu0 0
    %2092 = vmatpush1.bf16.msra.mxu0 0
    %2093 = vmatprep.subr.bf16.mxu0 0
    %2094 = vmatpush1.bf16.msra.mxu0 0
    %2095 = vmatprep.subr.bf16.mxu0 0
    %2096 = vmatpush1.bf16.msra.mxu0 0
    %2097 = vmatprep.subr.bf16.mxu0 0
    %2098 = vmatpush1.bf16.msra.mxu0 0
    %2099 = vmatprep.subr.bf16.mxu0 0
    %2100 = vmatpush1.bf16.msra.mxu0 0
    %2101 = vmatprep.subr.bf16.mxu0 0
    %2102 = vmatpush1.bf16.msra.mxu0 0
    %2103 = vmatprep.subr.bf16.mxu0 0
    %2104 = vmatpush1.bf16.msra.mxu0 0
    %2105 = vmatprep.mubr.bf16.mxu0 0
    %2106 = vmatmul.mubr.bf16.gmra.mrb[0].mxu0 %v2071
    %v2107 = vpop.f32.mrb[0].mxu0
    %v2108 = vadd.f32 0.0, %v2107
    %v2109 = vpop.f32.mrb[0].mxu0
    %v2110 = vpop.f32.mrb[0].mxu0
    %v2111 = vpop.f32.mrb[0].mxu0
    %2112 = vdwg.mxu0
    %v2113 = vxor.u32 %v2108, 2147483648
    %v2114 = vmul.f32 %v2113, 1.442695
    %v2115 = vpow.pop %v2114
    %v2116 = vadd.f32 %v2115, 1.0
    %v2117 = vrcp.pop %v2116
    %v2118 = vmul.f32 1.0, %v2117
    %2120 = vrot.lane.b32.xlu0 %v2024, 64
    %v2121 = vpop.permute.xlu0 %2120
    %v2123 = vsub.f32 %v2118, %v2121
    %2125 = vrot.lane.b32.xlu0 %v2123, 64
    %v2126 = vpop.permute.xlu0 %2125
    %v2128 = vmul.f32 %v2118, %v2126
    %v2129 = vadd.f32 %v2024, %v2128
    %v2130 = vld [vmem:[#allocation7 + $0xc] sm:$0xf]
    %v2131 = vld [vmem:[#allocation7 + $0x1c] sm:$0xf]
    %v2132 = vld [vmem:[#allocation7 + $0x2c] sm:$0xf]
    %v2133 = vld [vmem:[#allocation7 + $0x3c] sm:$0xf]
    %v2134 = vld [vmem:[#allocation7 + $0x4c] sm:$0xf]
    %v2135 = vld [vmem:[#allocation7 + $0x5c] sm:$0xf]
    %v2136 = vld [vmem:[#allocation7 + $0x6c] sm:$0xf]
    %v2137 = vld [vmem:[#allocation7 + $0x7c] sm:$0xf]
    %v2138 = vpack.c.bf16 %v2036, %v2036
    %v2147 = vunpack.c.l.b16 %v2130
    %v2148 = vunpack.c.l.b16 %v2131
    %v2149 = vunpack.c.l.b16 %v2132
    %v2150 = vunpack.c.l.b16 %v2133
    %v2151 = vunpack.c.l.b16 %v2134
    %v2152 = vunpack.c.l.b16 %v2135
    %v2153 = vunpack.c.l.b16 %v2136
    %v2154 = vunpack.c.l.b16 %v2137
    %v2155 = vpack.c.b16 %v2148, %v2147
    %v2156 = vpack.c.b16 %v2150, %v2149
    %v2157 = vpack.c.b16 %v2152, %v2151
    %v2158 = vpack.c.b16 %v2154, %v2153
    %v2164 = vsel %vm158, %v2138, 0
    %2166 = vmatprep.subr.bf16.mxu0 0
    %2167 = vmatpush1.bf16.msra.mxu0 %v2155
    %2168 = vmatprep.subr.bf16.mxu0 0
    %2169 = vmatpush1.bf16.msra.mxu0 %v2156
    %2170 = vmatprep.subr.bf16.mxu0 0
    %2171 = vmatpush1.bf16.msra.mxu0 %v2157
    %2172 = vmatprep.subr.bf16.mxu0 0
    %2173 = vmatpush1.bf16.msra.mxu0 %v2158
    %2174 = vmatprep.subr.bf16.mxu0 0
    %2175 = vmatpush1.bf16.msra.mxu0 0
    %2176 = vmatprep.subr.bf16.mxu0 0
    %2177 = vmatpush1.bf16.msra.mxu0 0
    %2178 = vmatprep.subr.bf16.mxu0 0
    %2179 = vmatpush1.bf16.msra.mxu0 0
    %2180 = vmatprep.subr.bf16.mxu0 0
    %2181 = vmatpush1.bf16.msra.mxu0 0
    %2182 = vmatprep.subr.bf16.mxu0 0
    %2183 = vmatpush1.bf16.msra.mxu0 0
    %2184 = vmatprep.subr.bf16.mxu0 0
    %2185 = vmatpush1.bf16.msra.mxu0 0
    %2186 = vmatprep.subr.bf16.mxu0 0
    %2187 = vmatpush1.bf16.msra.mxu0 0
    %2188 = vmatprep.subr.bf16.mxu0 0
    %2189 = vmatpush1.bf16.msra.mxu0 0
    %2190 = vmatprep.subr.bf16.mxu0 0
    %2191 = vmatpush1.bf16.msra.mxu0 0
    %2192 = vmatprep.subr.bf16.mxu0 0
    %2193 = vmatpush1.bf16.msra.mxu0 0
    %2194 = vmatprep.subr.bf16.mxu0 0
    %2195 = vmatpush1.bf16.msra.mxu0 0
    %2196 = vmatprep.subr.bf16.mxu0 0
    %2197 = vmatpush1.bf16.msra.mxu0 0
    %2198 = vmatprep.mubr.bf16.mxu0 0
    %2199 = vmatmul.mubr.bf16.gmra.mrb[0].mxu0 %v2164
    %v2200 = vpop.f32.mrb[0].mxu0
    %v2201 = vadd.f32 0.0, %v2200
    %v2202 = vpop.f32.mrb[0].mxu0
    %v2203 = vpop.f32.mrb[0].mxu0
    %v2204 = vpop.f32.mrb[0].mxu0
    %2205 = vdwg.mxu0
    %v2206 = vxor.u32 %v2201, 2147483648
    %v2207 = vmul.f32 %v2206, 1.442695
    %v2208 = vpow.pop %v2207
    %v2209 = vadd.f32 %v2208, 1.0
    %v2210 = vrcp.pop %v2209
    %v2211 = vmul.f32 1.0, %v2210
    %2213 = vrot.lane.b32.xlu0 %v2036, 64
    %v2214 = vpop.permute.xlu0 %2213
    %v2216 = vsub.f32 %v2201, %v2214
    %2218 = vrot.lane.b32.xlu0 %v2216, 64
    %v2219 = vpop.permute.xlu0 %2218
    %v2221 = vmul.f32 %v2211, %v2219
    %v2222 = vadd.f32 %v2036, %v2221
    %v2223 = vadd.f32 %v2024, %v2036
    %v2224 = vadd.f32 %v2223, %v2129
    %v2225 = vadd.f32 %v2224, %v2222
    %v2226 = vmul.f32 %v2225, 0.25
    %v2227 = vpack.c.bf16 %v2226, %v2226
    %v2228 = vld [vmem:[#allocation5] sm:$0xf]
    %v2229 = vld [vmem:[#allocation5 + $0x4] sm:$0xf]
    %v2230 = vld [vmem:[#allocation5 + $0x8] sm:$0xf]
    %v2231 = vld [vmem:[#allocation5 + $0xc] sm:$0xf]
    %v2232 = vld [vmem:[#allocation5 + $0x10] sm:$0xf]
    %v2233 = vld [vmem:[#allocation5 + $0x14] sm:$0xf]
    %v2234 = vld [vmem:[#allocation5 + $0x18] sm:$0xf]
    %v2235 = vld [vmem:[#allocation5 + $0x1c] sm:$0xf]
    %v2244 = vunpack.c.l.b16 %v2228
    %v2245 = vunpack.c.l.b16 %v2229
    %v2246 = vunpack.c.l.b16 %v2230
    %v2247 = vunpack.c.l.b16 %v2231
    %v2248 = vunpack.c.l.b16 %v2232
    %v2249 = vunpack.c.l.b16 %v2233
    %v2250 = vunpack.c.l.b16 %v2234
    %v2251 = vunpack.c.l.b16 %v2235
    %v2252 = vpack.c.b16 %v2245, %v2244
    %v2253 = vpack.c.b16 %v2247, %v2246
    %v2254 = vpack.c.b16 %v2249, %v2248
    %v2255 = vpack.c.b16 %v2251, %v2250
    %v2261 = vsel %vm158, %v2227, 0
    %2263 = vmatprep.subr.bf16.mxu0 0
    %2264 = vmatpush1.bf16.msra.mxu0 %v2252
    %2265 = vmatprep.subr.bf16.mxu0 0
    %2266 = vmatpush1.bf16.msra.mxu0 %v2253
    %2267 = vmatprep.subr.bf16.mxu0 0
    %2268 = vmatpush1.bf16.msra.mxu0 %v2254
    %2269 = vmatprep.subr.bf16.mxu0 0
    %2270 = vmatpush1.bf16.msra.mxu0 %v2255
    %2271 = vmatprep.subr.bf16.mxu0 0
    %2272 = vmatpush1.bf16.msra.mxu0 0
    %2273 = vmatprep.subr.bf16.mxu0 0
    %2274 = vmatpush1.bf16.msra.mxu0 0
    %2275 = vmatprep.subr.bf16.mxu0 0
    %2276 = vmatpush1.bf16.msra.mxu0 0
    %2277 = vmatprep.subr.bf16.mxu0 0
    %2278 = vmatpush1.bf16.msra.mxu0 0
    %2279 = vmatprep.subr.bf16.mxu0 0
    %2280 = vmatpush1.bf16.msra.mxu0 0
    %2281 = vmatprep.subr.bf16.mxu0 0
    %2282 = vmatpush1.bf16.msra.mxu0 0
    %2283 = vmatprep.subr.bf16.mxu0 0
    %2284 = vmatpush1.bf16.msra.mxu0 0
    %2285 = vmatprep.subr.bf16.mxu0 0
    %2286 = vmatpush1.bf16.msra.mxu0 0
    %2287 = vmatprep.subr.bf16.mxu0 0
    %2288 = vmatpush1.bf16.msra.mxu0 0
    %2289 = vmatprep.subr.bf16.mxu0 0
    %2290 = vmatpush1.bf16.msra.mxu0 0
    %2291 = vmatprep.subr.bf16.mxu0 0
    %2292 = vmatpush1.bf16.msra.mxu0 0
    %2293 = vmatprep.subr.bf16.mxu0 0
    %2294 = vmatpush1.bf16.msra.mxu0 0
    %2295 = vmatprep.mubr.bf16.mxu0 0
    %2296 = vmatmul.mubr.bf16.gmra.mrb[0].mxu0 %v2261
    %v2297 = vpop.f32.mrb[0].mxu0
    %v2298 = vadd.f32 %v680, %v2297
    %v2299 = vpop.f32.mrb[0].mxu0
    %v2300 = vpop.f32.mrb[0].mxu0
    %v2301 = vpop.f32.mrb[0].mxu0
    %2302 = vdwg.mxu0
    %v2303 = vsel %vm158, %v2298, -inf
    %2304 = vmax.xlane.f32.xlu0 %v2303
    %v2305 = vpop.xlane.xlu0 %2304
    %v2306 = vsub.f32 %v2298, %v2305
    %v2307 = vmul.f32 %v2306, 1.442695
    %v2308 = vpow.pop %v2307
    %v2309 = vsel %vm158, %v2308, 0.0
    %2310 = vadd.xlane.f32.xlu0 %v2309
    %v2311 = vpop.xlane.xlu0 %2310
    %v2312 = vlog2.pop %v2311
    %v2313 = vmul.f32 %v2312, 0.6931472
    %v2314 = vsub.f32 %v2306, %v2313
    %2315 = vst.msk [vmem:[#allocation8 + $0x18] sm:$0xff] %vm158, %v2314
    %2317 = vrot.lane.b32.xlu0 %v2226, 64
    %v2318 = vpop.permute.xlu0 %2317
    %v2320 = vsel %vm158, %v222, %v2318
    %v2321 = vpack.c.bf16 %v2320, %v2320
    %v2322 = vld [vmem:[%s4] sm:$0xf]
    %v2323 = vld [vmem:[%s4 + $0x4] sm:$0xf]
    %v2324 = vld [vmem:[%s4 + $0x8] sm:$0xf]
    %v2325 = vld [vmem:[%s4 + $0xc] sm:$0xf]
    %v2326 = vld [vmem:[%s4 + $0x10] sm:$0xf]
    %v2327 = vld [vmem:[%s4 + $0x14] sm:$0xf]
    %v2328 = vld [vmem:[%s4 + $0x18] sm:$0xf]
    %v2329 = vld [vmem:[%s4 + $0x1c] sm:$0xf]
    %v2330 = vld [vmem:[%s4 + $0x20] sm:$0xf]
    %v2331 = vld [vmem:[%s4 + $0x24] sm:$0xf]
    %v2332 = vld [vmem:[%s4 + $0x28] sm:$0xf]
    %v2333 = vld [vmem:[%s4 + $0x2c] sm:$0xf]
    %v2334 = vld [vmem:[%s4 + $0x30] sm:$0xf]
    %v2335 = vld [vmem:[%s4 + $0x34] sm:$0xf]
    %v2336 = vld [vmem:[%s4 + $0x38] sm:$0xf]
    %v2337 = vld [vmem:[%s4 + $0x3c] sm:$0xf]
    %v2354 = vunpack.c.l.b16 %v2322
    %v2355 = vunpack.c.l.b16 %v2323
    %v2356 = vunpack.c.l.b16 %v2324
    %v2357 = vunpack.c.l.b16 %v2325
    %v2358 = vunpack.c.l.b16 %v2326
    %v2359 = vunpack.c.l.b16 %v2327
    %v2360 = vunpack.c.l.b16 %v2328
    %v2361 = vunpack.c.l.b16 %v2329
    %v2362 = vunpack.c.l.b16 %v2330
    %v2363 = vunpack.c.l.b16 %v2331
    %v2364 = vunpack.c.l.b16 %v2332
    %v2365 = vunpack.c.l.b16 %v2333
    %v2366 = vunpack.c.l.b16 %v2334
    %v2367 = vunpack.c.l.b16 %v2335
    %v2368 = vunpack.c.l.b16 %v2336
    %v2369 = vunpack.c.l.b16 %v2337
    %v2370 = vpack.c.b16 %v2355, %v2354
    %v2371 = vpack.c.b16 %v2357, %v2356
    %v2372 = vpack.c.b16 %v2359, %v2358
    %v2373 = vpack.c.b16 %v2361, %v2360
    %v2374 = vpack.c.b16 %v2363, %v2362
    %v2375 = vpack.c.b16 %v2365, %v2364
    %v2376 = vpack.c.b16 %v2367, %v2366
    %v2377 = vpack.c.b16 %v2369, %v2368
    %2386 = vmatprep.subr.bf16.mxu0 0
    %2387 = vmatpush1.bf16.msra.mxu0 %v2370
    %2388 = vmatprep.subr.bf16.mxu0 0
    %2389 = vmatpush1.bf16.msra.mxu0 %v2371
    %2390 = vmatprep.subr.bf16.mxu0 0
    %2391 = vmatpush1.bf16.msra.mxu0 %v2372
    %2392 = vmatprep.subr.bf16.mxu0 0
    %2393 = vmatpush1.bf16.msra.mxu0 %v2373
    %2394 = vmatprep.subr.bf16.mxu0 0
    %2395 = vmatpush1.bf16.msra.mxu0 %v2374
    %2396 = vmatprep.subr.bf16.mxu0 0
    %2397 = vmatpush1.bf16.msra.mxu0 %v2375
    %2398 = vmatprep.subr.bf16.mxu0 0
    %2399 = vmatpush1.bf16.msra.mxu0 %v2376
    %2400 = vmatprep.subr.bf16.mxu0 0
    %2401 = vmatpush1.bf16.msra.mxu0 %v2377
    %2402 = vmatprep.subr.bf16.mxu0 0
    %2403 = vmatpush1.bf16.msra.mxu0 0
    %2404 = vmatprep.subr.bf16.mxu0 0
    %2405 = vmatpush1.bf16.msra.mxu0 0
    %2406 = vmatprep.subr.bf16.mxu0 0
    %2407 = vmatpush1.bf16.msra.mxu0 0
    %2408 = vmatprep.subr.bf16.mxu0 0
    %2409 = vmatpush1.bf16.msra.mxu0 0
    %2410 = vmatprep.subr.bf16.mxu0 0
    %2411 = vmatpush1.bf16.msra.mxu0 0
    %2412 = vmatprep.subr.bf16.mxu0 0
    %2413 = vmatpush1.bf16.msra.mxu0 0
    %2414 = vmatprep.subr.bf16.mxu0 0
    %2415 = vmatpush1.bf16.msra.mxu0 0
    %2416 = vmatprep.subr.bf16.mxu0 0
    %2417 = vmatpush1.bf16.msra.mxu0 0
    %2418 = vmatprep.mubr.bf16.mxu0 0
    %2419 = vmatmul.mubr.bf16.gmra.mrb[0].mxu0 %v2321
    %v2420 = vpop.f32.mrb[0].mxu0
    %v2421 = vadd.f32 0.0, %v2420
    %v2422 = vpop.f32.mrb[0].mxu0
    %v2423 = vpop.f32.mrb[0].mxu0
    %v2424 = vpop.f32.mrb[0].mxu0
    %2425 = vdwg.mxu0
    %v2426 = vxor.u32 %v2421, 2147483648
    %v2427 = vmul.f32 %v2426, 1.442695
    %v2428 = vpow.pop %v2427
    %v2429 = vadd.f32 %v2428, 1.0
    %v2430 = vrcp.pop %v2429
    %v2431 = vmul.f32 1.0, %v2430
    %v2432 = vtanh.pop %v2421
    %v2433 = vsub.f32 %v2432, %v2318
    %2435 = vrot.lane.b32.xlu0 %v2433, 64
    %v2436 = vpop.permute.xlu0 %2435
    %v2438 = vmul.f32 %v2431, %v2436
    %v2439 = vadd.f32 %v2226, %v2438
    %v2440 = vld [vmem:[#allocation7] sm:$0xff]
    %v2441 = vld [vmem:[#allocation7 + $0x10] sm:$0xff]
    %v2442 = vld [vmem:[#allocation7 + $0x20] sm:$0xff]
    %v2443 = vld [vmem:[#allocation7 + $0x30] sm:$0xff]
    %v2444 = vld [vmem:[#allocation7 + $0x40] sm:$0xff]
    %v2445 = vld [vmem:[#allocation7 + $0x50] sm:$0xff]
    %v2446 = vld [vmem:[#allocation7 + $0x60] sm:$0xff]
    %v2447 = vld [vmem:[#allocation7 + $0x70] sm:$0xff]
    %v2448 = vpack.c.bf16 %v2439, %v2439
    %v2457 = vunpack.c.l.b16 %v2440
    %v2458 = vunpack.c.h.b16 %v2440
    %v2459 = vunpack.c.l.b16 %v2441
    %v2460 = vunpack.c.h.b16 %v2441
    %v2461 = vunpack.c.l.b16 %v2442
    %v2462 = vunpack.c.h.b16 %v2442
    %v2463 = vunpack.c.l.b16 %v2443
    %v2464 = vunpack.c.h.b16 %v2443
    %v2465 = vunpack.c.l.b16 %v2444
    %v2466 = vunpack.c.h.b16 %v2444
    %v2467 = vunpack.c.l.b16 %v2445
    %v2468 = vunpack.c.h.b16 %v2445
    %v2469 = vunpack.c.l.b16 %v2446
    %v2470 = vunpack.c.h.b16 %v2446
    %v2471 = vunpack.c.l.b16 %v2447
    %v2472 = vunpack.c.h.b16 %v2447
    %v2473 = vpack.c.b16 %v2459, %v2457
    %v2474 = vpack.c.b16 %v2460, %v2458
    %v2475 = vpack.c.b16 %v2463, %v2461
    %v2476 = vpack.c.b16 %v2464, %v2462
    %v2477 = vpack.c.b16 %v2467, %v2465
    %v2478 = vpack.c.b16 %v2468, %v2466
    %v2479 = vpack.c.b16 %v2471, %v2469
    %v2480 = vpack.c.b16 %v2472, %v2470
    %v2490 = vsel %vm158, %v2448, 0
    %2492 = vmatprep.subr.bf16.mxu0 %v2474
    %2493 = vmatpush1.bf16.msra.mxu0 %v2473
    %2494 = vmatprep.subr.bf16.mxu0 %v2476
    %2495 = vmatpush1.bf16.msra.mxu0 %v2475
    %2496 = vmatprep.subr.bf16.mxu0 %v2478
    %2497 = vmatpush1.bf16.msra.mxu0 %v2477
    %2498 = vmatprep.subr.bf16.mxu0 %v2480
    %2499 = vmatpush1.bf16.msra.mxu0 %v2479
    %2500 = vmatprep.subr.bf16.mxu0 0
    %2501 = vmatpush1.bf16.msra.mxu0 0
    %2502 = vmatprep.subr.bf16.mxu0 0
    %2503 = vmatpush1.bf16.msra.mxu0 0
    %2504 = vmatprep.subr.bf16.mxu0 0
    %2505 = vmatpush1.bf16.msra.mxu0 0
    %2506 = vmatprep.subr.bf16.mxu0 0
    %2507 = vmatpush1.bf16.msra.mxu0 0
    %2508 = vmatprep.subr.bf16.mxu0 0
    %2509 = vmatpush1.bf16.msra.mxu0 0
    %2510 = vmatprep.subr.bf16.mxu0 0
    %2511 = vmatpush1.bf16.msra.mxu0 0
    %2512 = vmatprep.subr.bf16.mxu0 0
    %2513 = vmatpush1.bf16.msra.mxu0 0
    %2514 = vmatprep.subr.bf16.mxu0 0
    %2515 = vmatpush1.bf16.msra.mxu0 0
    %2516 = vmatprep.subr.bf16.mxu0 0
    %2517 = vmatpush1.bf16.msra.mxu0 0
    %2518 = vmatprep.subr.bf16.mxu0 0
    %2519 = vmatpush1.bf16.msra.mxu0 0
    %2520 = vmatprep.subr.bf16.mxu0 0
    %2521 = vmatpush1.bf16.msra.mxu0 0
    %2522 = vmatprep.subr.bf16.mxu0 0
    %2523 = vmatpush1.bf16.msra.mxu0 0
    %2524 = vmatprep.mubr.bf16.mxu0 0
    %2525 = vmatmul.mubr.bf16.gmra.mrb[0].mxu0 %v2490
    %v2526 = vpop.f32.mrb[0].mxu0
    %v2527 = vadd.f32 0.0, %v2526
    %v2528 = vpop.f32.mrb[0].mxu0
    %v2529 = vadd.f32 0.0, %v2528
    %v2530 = vpop.f32.mrb[0].mxu0
    %v2531 = vpop.f32.mrb[0].mxu0
    %2532 = vdwg.mxu0
    %v2533 = vxor.u32 %v2527, 2147483648
    %v2534 = vmul.f32 %v2533, 1.442695
    %v2535 = vpow.pop %v2534
    %v2536 = vadd.f32 %v2535, 1.0
    %v2537 = vrcp.pop %v2536
    %v2538 = vmul.f32 1.0, %v2537
    %v2539 = vtanh.pop %v2529
    %v2540 = vsub.f32 %v2539, %v2439
    %v2541 = vmul.f32 %v2538, %v2540
    %v2542 = vadd.f32 %v2439, %v2541
    %v2543 = vmax.f32 %v2529, 0.0
    %2545 = vrot.lane.b32.xlu0 %v2439, 64
    %v2546 = vpop.permute.xlu0 %2545
    %v2548 = vsub.f32 %v2543, %v2546
    %v2549 = vmul.f32 %v2538, %v2548
    %2551 = vrot.lane.b32.xlu0 %v2549, 64
    %v2552 = vpop.permute.xlu0 %2551
    %v2554 = vadd.f32 %v2439, %v2552
    %v2555 = vld [vmem:[#allocation7 + $0x8] sm:$0xf]
    %v2556 = vld [vmem:[#allocation7 + $0x18] sm:$0xf]
    %v2557 = vld [vmem:[#allocation7 + $0x28] sm:$0xf]
    %v2558 = vld [vmem:[#allocation7 + $0x38] sm:$0xf]
    %v2559 = vld [vmem:[#allocation7 + $0x48] sm:$0xf]
    %v2560 = vld [vmem:[#allocation7 + $0x58] sm:$0xf]
    %v2561 = vld [vmem:[#allocation7 + $0x68] sm:$0xf]
    %v2562 = vld [vmem:[#allocation7 + $0x78] sm:$0xf]
    %v2563 = vpack.c.bf16 %v2542, %v2542
    %v2572 = vunpack.c.l.b16 %v2555
    %v2573 = vunpack.c.l.b16 %v2556
    %v2574 = vunpack.c.l.b16 %v2557
    %v2575 = vunpack.c.l.b16 %v2558
    %v2576 = vunpack.c.l.b16 %v2559
    %v2577 = vunpack.c.l.b16 %v2560
    %v2578 = vunpack.c.l.b16 %v2561
    %v2579 = vunpack.c.l.b16 %v2562
    %v2580 = vpack.c.b16 %v2573, %v2572
    %v2581 = vpack.c.b16 %v2575, %v2574
    %v2582 = vpack.c.b16 %v2577, %v2576
    %v2583 = vpack.c.b16 %v2579, %v2578
    %v2589 = vsel %vm158, %v2563, 0
    %2591 = vmatprep.subr.bf16.mxu0 0
    %2592 = vmatpush1.bf16.msra.mxu0 %v2580
    %2593 = vmatprep.subr.bf16.mxu0 0
    %2594 = vmatpush1.bf16.msra.mxu0 %v2581
    %2595 = vmatprep.subr.bf16.mxu0 0
    %2596 = vmatpush1.bf16.msra.mxu0 %v2582
    %2597 = vmatprep.subr.bf16.mxu0 0
    %2598 = vmatpush1.bf16.msra.mxu0 %v2583
    %2599 = vmatprep.subr.bf16.mxu0 0
    %2600 = vmatpush1.bf16.msra.mxu0 0
    %2601 = vmatprep.subr.bf16.mxu0 0
    %2602 = vmatpush1.bf16.msra.mxu0 0
    %2603 = vmatprep.subr.bf16.mxu0 0
    %2604 = vmatpush1.bf16.msra.mxu0 0
    %2605 = vmatprep.subr.bf16.mxu0 0
    %2606 = vmatpush1.bf16.msra.mxu0 0
    %2607 = vmatprep.subr.bf16.mxu0 0
    %2608 = vmatpush1.bf16.msra.mxu0 0
    %2609 = vmatprep.subr.bf16.mxu0 0
    %2610 = vmatpush1.bf16.msra.mxu0 0
    %2611 = vmatprep.subr.bf16.mxu0 0
    %2612 = vmatpush1.bf16.msra.mxu0 0
    %2613 = vmatprep.subr.bf16.mxu0 0
    %2614 = vmatpush1.bf16.msra.mxu0 0
    %2615 = vmatprep.subr.bf16.mxu0 0
    %2616 = vmatpush1.bf16.msra.mxu0 0
    %2617 = vmatprep.subr.bf16.mxu0 0
    %2618 = vmatpush1.bf16.msra.mxu0 0
    %2619 = vmatprep.subr.bf16.mxu0 0
    %2620 = vmatpush1.bf16.msra.mxu0 0
    %2621 = vmatprep.subr.bf16.mxu0 0
    %2622 = vmatpush1.bf16.msra.mxu0 0
    %2623 = vmatprep.mubr.bf16.mxu0 0
    %2624 = vmatmul.mubr.bf16.gmra.mrb[0].mxu0 %v2589
    %v2625 = vpop.f32.mrb[0].mxu0
    %v2626 = vadd.f32 0.0, %v2625
    %v2627 = vpop.f32.mrb[0].mxu0
    %v2628 = vpop.f32.mrb[0].mxu0
    %v2629 = vpop.f32.mrb[0].mxu0
    %2630 = vdwg.mxu0
    %v2631 = vxor.u32 %v2626, 2147483648
    %v2632 = vmul.f32 %v2631, 1.442695
    %v2633 = vpow.pop %v2632
    %v2634 = vadd.f32 %v2633, 1.0
    %v2635 = vrcp.pop %v2634
    %v2636 = vmul.f32 1.0, %v2635
    %2638 = vrot.lane.b32.xlu0 %v2542, 64
    %v2639 = vpop.permute.xlu0 %2638
    %v2641 = vsub.f32 %v2636, %v2639
    %2643 = vrot.lane.b32.xlu0 %v2641, 64
    %v2644 = vpop.permute.xlu0 %2643
    %v2646 = vmul.f32 %v2636, %v2644
    %v2647 = vadd.f32 %v2542, %v2646
    %v2648 = vld [vmem:[#allocation7 + $0xc] sm:$0xf]
    %v2649 = vld [vmem:[#allocation7 + $0x1c] sm:$0xf]
    %v2650 = vld [vmem:[#allocation7 + $0x2c] sm:$0xf]
    %v2651 = vld [vmem:[#allocation7 + $0x3c] sm:$0xf]
    %v2652 = vld [vmem:[#allocation7 + $0x4c] sm:$0xf]
    %v2653 = vld [vmem:[#allocation7 + $0x5c] sm:$0xf]
    %v2654 = vld [vmem:[#allocation7 + $0x6c] sm:$0xf]
    %v2655 = vld [vmem:[#allocation7 + $0x7c] sm:$0xf]
    %v2656 = vpack.c.bf16 %v2554, %v2554
    %v2665 = vunpack.c.l.b16 %v2648
    %v2666 = vunpack.c.l.b16 %v2649
    %v2667 = vunpack.c.l.b16 %v2650
    %v2668 = vunpack.c.l.b16 %v2651
    %v2669 = vunpack.c.l.b16 %v2652
    %v2670 = vunpack.c.l.b16 %v2653
    %v2671 = vunpack.c.l.b16 %v2654
    %v2672 = vunpack.c.l.b16 %v2655
    %v2673 = vpack.c.b16 %v2666, %v2665
    %v2674 = vpack.c.b16 %v2668, %v2667
    %v2675 = vpack.c.b16 %v2670, %v2669
    %v2676 = vpack.c.b16 %v2672, %v2671
    %v2682 = vsel %vm158, %v2656, 0
    %2684 = vmatprep.subr.bf16.mxu0 0
    %2685 = vmatpush1.bf16.msra.mxu0 %v2673
    %2686 = vmatprep.subr.bf16.mxu0 0
    %2687 = vmatpush1.bf16.msra.mxu0 %v2674
    %2688 = vmatprep.subr.bf16.mxu0 0
    %2689 = vmatpush1.bf16.msra.mxu0 %v2675
    %2690 = vmatprep.subr.bf16.mxu0 0
    %2691 = vmatpush1.bf16.msra.mxu0 %v2676
    %2692 = vmatprep.subr.bf16.mxu0 0
    %2693 = vmatpush1.bf16.msra.mxu0 0
    %2694 = vmatprep.subr.bf16.mxu0 0
    %2695 = vmatpush1.bf16.msra.mxu0 0
    %2696 = vmatprep.subr.bf16.mxu0 0
    %2697 = vmatpush1.bf16.msra.mxu0 0
    %2698 = vmatprep.subr.bf16.mxu0 0
    %2699 = vmatpush1.bf16.msra.mxu0 0
    %2700 = vmatprep.subr.bf16.mxu0 0
    %2701 = vmatpush1.bf16.msra.mxu0 0
    %2702 = vmatprep.subr.bf16.mxu0 0
    %2703 = vmatpush1.bf16.msra.mxu0 0
    %2704 = vmatprep.subr.bf16.mxu0 0
    %2705 = vmatpush1.bf16.msra.mxu0 0
    %2706 = vmatprep.subr.bf16.mxu0 0
    %2707 = vmatpush1.bf16.msra.mxu0 0
    %2708 = vmatprep.subr.bf16.mxu0 0
    %2709 = vmatpush1.bf16.msra.mxu0 0
    %2710 = vmatprep.subr.bf16.mxu0 0
    %2711 = vmatpush1.bf16.msra.mxu0 0
    %2712 = vmatprep.subr.bf16.mxu0 0
    %2713 = vmatpush1.bf16.msra.mxu0 0
    %2714 = vmatprep.subr.bf16.mxu0 0
    %2715 = vmatpush1.bf16.msra.mxu0 0
    %2716 = vmatprep.mubr.bf16.mxu0 0
    %2717 = vmatmul.mubr.bf16.gmra.mrb[0].mxu0 %v2682
    %v2718 = vpop.f32.mrb[0].mxu0
    %v2719 = vadd.f32 0.0, %v2718
    %v2720 = vpop.f32.mrb[0].mxu0
    %v2721 = vpop.f32.mrb[0].mxu0
    %v2722 = vpop.f32.mrb[0].mxu0
    %2723 = vdwg.mxu0
    %v2724 = vxor.u32 %v2719, 2147483648
    %v2725 = vmul.f32 %v2724, 1.442695
    %v2726 = vpow.pop %v2725
    %v2727 = vadd.f32 %v2726, 1.0
    %v2728 = vrcp.pop %v2727
    %v2729 = vmul.f32 1.0, %v2728
    %2731 = vrot.lane.b32.xlu0 %v2554, 64
    %v2732 = vpop.permute.xlu0 %2731
    %v2734 = vsub.f32 %v2719, %v2732
    %2736 = vrot.lane.b32.xlu0 %v2734, 64
    %v2737 = vpop.permute.xlu0 %2736
    %v2739 = vmul.f32 %v2729, %v2737
    %v2740 = vadd.f32 %v2554, %v2739
    %v2741 = vadd.f32 %v2542, %v2554
    %v2742 = vadd.f32 %v2741, %v2647
    %v2743 = vadd.f32 %v2742, %v2740
    %v2744 = vmul.f32 %v2743, 0.25
    %v2745 = vpack.c.bf16 %v2744, %v2744
    %v2746 = vld [vmem:[#allocation5] sm:$0xf]
    %v2747 = vld [vmem:[#allocation5 + $0x4] sm:$0xf]
    %v2748 = vld [vmem:[#allocation5 + $0x8] sm:$0xf]
    %v2749 = vld [vmem:[#allocation5 + $0xc] sm:$0xf]
    %v2750 = vld [vmem:[#allocation5 + $0x10] sm:$0xf]
    %v2751 = vld [vmem:[#allocation5 + $0x14] sm:$0xf]
    %v2752 = vld [vmem:[#allocation5 + $0x18] sm:$0xf]
    %v2753 = vld [vmem:[#allocation5 + $0x1c] sm:$0xf]
    %v2762 = vunpack.c.l.b16 %v2746
    %v2763 = vunpack.c.l.b16 %v2747
    %v2764 = vunpack.c.l.b16 %v2748
    %v2765 = vunpack.c.l.b16 %v2749
    %v2766 = vunpack.c.l.b16 %v2750
    %v2767 = vunpack.c.l.b16 %v2751
    %v2768 = vunpack.c.l.b16 %v2752
    %v2769 = vunpack.c.l.b16 %v2753
    %v2770 = vpack.c.b16 %v2763, %v2762
    %v2771 = vpack.c.b16 %v2765, %v2764
    %v2772 = vpack.c.b16 %v2767, %v2766
    %v2773 = vpack.c.b16 %v2769, %v2768
    %v2779 = vsel %vm158, %v2745, 0
    %2781 = vmatprep.subr.bf16.mxu0 0
    %2782 = vmatpush1.bf16.msra.mxu0 %v2770
    %2783 = vmatprep.subr.bf16.mxu0 0
    %2784 = vmatpush1.bf16.msra.mxu0 %v2771
    %2785 = vmatprep.subr.bf16.mxu0 0
    %2786 = vmatpush1.bf16.msra.mxu0 %v2772
    %2787 = vmatprep.subr.bf16.mxu0 0
    %2788 = vmatpush1.bf16.msra.mxu0 %v2773
    %2789 = vmatprep.subr.bf16.mxu0 0
    %2790 = vmatpush1.bf16.msra.mxu0 0
    %2791 = vmatprep.subr.bf16.mxu0 0
    %2792 = vmatpush1.bf16.msra.mxu0 0
    %2793 = vmatprep.subr.bf16.mxu0 0
    %2794 = vmatpush1.bf16.msra.mxu0 0
    %2795 = vmatprep.subr.bf16.mxu0 0
    %2796 = vmatpush1.bf16.msra.mxu0 0
    %2797 = vmatprep.subr.bf16.mxu0 0
    %2798 = vmatpush1.bf16.msra.mxu0 0
    %2799 = vmatprep.subr.bf16.mxu0 0
    %2800 = vmatpush1.bf16.msra.mxu0 0
    %2801 = vmatprep.subr.bf16.mxu0 0
    %2802 = vmatpush1.bf16.msra.mxu0 0
    %2803 = vmatprep.subr.bf16.mxu0 0
    %2804 = vmatpush1.bf16.msra.mxu0 0
    %2805 = vmatprep.subr.bf16.mxu0 0
    %2806 = vmatpush1.bf16.msra.mxu0 0
    %2807 = vmatprep.subr.bf16.mxu0 0
    %2808 = vmatpush1.bf16.msra.mxu0 0
    %2809 = vmatprep.subr.bf16.mxu0 0
    %2810 = vmatpush1.bf16.msra.mxu0 0
    %2811 = vmatprep.subr.bf16.mxu0 0
    %2812 = vmatpush1.bf16.msra.mxu0 0
    %2813 = vmatprep.mubr.bf16.mxu0 0
    %2814 = vmatmul.mubr.bf16.gmra.mrb[0].mxu0 %v2779
    %v2815 = vpop.f32.mrb[0].mxu0
    %v2816 = vadd.f32 %v680, %v2815
    %v2817 = vpop.f32.mrb[0].mxu0
    %v2818 = vpop.f32.mrb[0].mxu0
    %v2819 = vpop.f32.mrb[0].mxu0
    %2820 = vdwg.mxu0
    %v2821 = vsel %vm158, %v2816, -inf
    %2822 = vmax.xlane.f32.xlu0 %v2821
    %v2823 = vpop.xlane.xlu0 %2822
    %v2824 = vsub.f32 %v2816, %v2823
    %v2825 = vmul.f32 %v2824, 1.442695
    %v2826 = vpow.pop %v2825
    %v2827 = vsel %vm158, %v2826, 0.0
    %2828 = vadd.xlane.f32.xlu0 %v2827
    %v2829 = vpop.xlane.xlu0 %2828
    %v2830 = vlog2.pop %v2829
    %v2831 = vmul.f32 %v2830, 0.6931472
    %v2832 = vsub.f32 %v2824, %v2831
    %2833 = vst.msk [vmem:[#allocation8 + $0x20] sm:$0xff] %vm158, %v2832
    %2835 = vrot.lane.b32.xlu0 %v2744, 64
    %v2836 = vpop.permute.xlu0 %2835
    %v2838 = vsel %vm158, %v225, %v2836
    %v2839 = vpack.c.bf16 %v2838, %v2838
    %v2840 = vld [vmem:[%s4] sm:$0xf]
    %v2841 = vld [vmem:[%s4 + $0x4] sm:$0xf]
    %v2842 = vld [vmem:[%s4 + $0x8] sm:$0xf]
    %v2843 = vld [vmem:[%s4 + $0xc] sm:$0xf]
    %v2844 = vld [vmem:[%s4 + $0x10] sm:$0xf]
    %v2845 = vld [vmem:[%s4 + $0x14] sm:$0xf]
    %v2846 = vld [vmem:[%s4 + $0x18] sm:$0xf]
    %v2847 = vld [vmem:[%s4 + $0x1c] sm:$0xf]
    %v2848 = vld [vmem:[%s4 + $0x20] sm:$0xf]
    %v2849 = vld [vmem:[%s4 + $0x24] sm:$0xf]
    %v2850 = vld [vmem:[%s4 + $0x28] sm:$0xf]
    %v2851 = vld [vmem:[%s4 + $0x2c] sm:$0xf]
    %v2852 = vld [vmem:[%s4 + $0x30] sm:$0xf]
    %v2853 = vld [vmem:[%s4 + $0x34] sm:$0xf]
    %v2854 = vld [vmem:[%s4 + $0x38] sm:$0xf]
    %v2855 = vld [vmem:[%s4 + $0x3c] sm:$0xf]
    %v2872 = vunpack.c.l.b16 %v2840
    %v2873 = vunpack.c.l.b16 %v2841
    %v2874 = vunpack.c.l.b16 %v2842
    %v2875 = vunpack.c.l.b16 %v2843
    %v2876 = vunpack.c.l.b16 %v2844
    %v2877 = vunpack.c.l.b16 %v2845
    %v2878 = vunpack.c.l.b16 %v2846
    %v2879 = vunpack.c.l.b16 %v2847
    %v2880 = vunpack.c.l.b16 %v2848
    %v2881 = vunpack.c.l.b16 %v2849
    %v2882 = vunpack.c.l.b16 %v2850
    %v2883 = vunpack.c.l.b16 %v2851
    %v2884 = vunpack.c.l.b16 %v2852
    %v2885 = vunpack.c.l.b16 %v2853
    %v2886 = vunpack.c.l.b16 %v2854
    %v2887 = vunpack.c.l.b16 %v2855
    %v2888 = vpack.c.b16 %v2873, %v2872
    %v2889 = vpack.c.b16 %v2875, %v2874
    %v2890 = vpack.c.b16 %v2877, %v2876
    %v2891 = vpack.c.b16 %v2879, %v2878
    %v2892 = vpack.c.b16 %v2881, %v2880
    %v2893 = vpack.c.b16 %v2883, %v2882
    %v2894 = vpack.c.b16 %v2885, %v2884
    %v2895 = vpack.c.b16 %v2887, %v2886
    %2904 = vmatprep.subr.bf16.mxu0 0
    %2905 = vmatpush1.bf16.msra.mxu0 %v2888
    %2906 = vmatprep.subr.bf16.mxu0 0
    %2907 = vmatpush1.bf16.msra.mxu0 %v2889
    %2908 = vmatprep.subr.bf16.mxu0 0
    %2909 = vmatpush1.bf16.msra.mxu0 %v2890
    %2910 = vmatprep.subr.bf16.mxu0 0
    %2911 = vmatpush1.bf16.msra.mxu0 %v2891
    %2912 = vmatprep.subr.bf16.mxu0 0
    %2913 = vmatpush1.bf16.msra.mxu0 %v2892
    %2914 = vmatprep.subr.bf16.mxu0 0
    %2915 = vmatpush1.bf16.msra.mxu0 %v2893
    %2916 = vmatprep.subr.bf16.mxu0 0
    %2917 = vmatpush1.bf16.msra.mxu0 %v2894
    %2918 = vmatprep.subr.bf16.mxu0 0
    %2919 = vmatpush1.bf16.msra.mxu0 %v2895
    %2920 = vmatprep.subr.bf16.mxu0 0
    %2921 = vmatpush1.bf16.msra.mxu0 0
    %2922 = vmatprep.subr.bf16.mxu0 0
    %2923 = vmatpush1.bf16.msra.mxu0 0
    %2924 = vmatprep.subr.bf16.mxu0 0
    %2925 = vmatpush1.bf16.msra.mxu0 0
    %2926 = vmatprep.subr.bf16.mxu0 0
    %2927 = vmatpush1.bf16.msra.mxu0 0
    %2928 = vmatprep.subr.bf16.mxu0 0
    %2929 = vmatpush1.bf16.msra.mxu0 0
    %2930 = vmatprep.subr.bf16.mxu0 0
    %2931 = vmatpush1.bf16.msra.mxu0 0
    %2932 = vmatprep.subr.bf16.mxu0 0
    %2933 = vmatpush1.bf16.msra.mxu0 0
    %2934 = vmatprep.subr.bf16.mxu0 0
    %2935 = vmatpush1.bf16.msra.mxu0 0
    %2936 = vmatprep.mubr.bf16.mxu0 0
    %2937 = vmatmul.mubr.bf16.gmra.mrb[0].mxu0 %v2839
    %v2938 = vpop.f32.mrb[0].mxu0
    %v2939 = vadd.f32 0.0, %v2938
    %v2940 = vpop.f32.mrb[0].mxu0
    %v2941 = vpop.f32.mrb[0].mxu0
    %v2942 = vpop.f32.mrb[0].mxu0
    %2943 = vdwg.mxu0
    %v2944 = vxor.u32 %v2939, 2147483648
    %v2945 = vmul.f32 %v2944, 1.442695
    %v2946 = vpow.pop %v2945
    %v2947 = vadd.f32 %v2946, 1.0
    %v2948 = vrcp.pop %v2947
    %v2949 = vmul.f32 1.0, %v2948
    %v2950 = vtanh.pop %v2939
    %v2951 = vsub.f32 %v2950, %v2836
    %2953 = vrot.lane.b32.xlu0 %v2951, 64
    %v2954 = vpop.permute.xlu0 %2953
    %v2956 = vmul.f32 %v2949, %v2954
    %v2957 = vadd.f32 %v2744, %v2956
    %v2958 = vld [vmem:[#allocation7] sm:$0xff]
    %v2959 = vld [vmem:[#allocation7 + $0x10] sm:$0xff]
    %v2960 = vld [vmem:[#allocation7 + $0x20] sm:$0xff]
    %v2961 = vld [vmem:[#allocation7 + $0x30] sm:$0xff]
    %v2962 = vld [vmem:[#allocation7 + $0x40] sm:$0xff]
    %v2963 = vld [vmem:[#allocation7 + $0x50] sm:$0xff]
    %v2964 = vld [vmem:[#allocation7 + $0x60] sm:$0xff]
    %v2965 = vld [vmem:[#allocation7 + $0x70] sm:$0xff]
    %v2966 = vpack.c.bf16 %v2957, %v2957
    %v2975 = vunpack.c.l.b16 %v2958
    %v2976 = vunpack.c.h.b16 %v2958
    %v2977 = vunpack.c.l.b16 %v2959
    %v2978 = vunpack.c.h.b16 %v2959
    %v2979 = vunpack.c.l.b16 %v2960
    %v2980 = vunpack.c.h.b16 %v2960
    %v2981 = vunpack.c.l.b16 %v2961
    %v2982 = vunpack.c.h.b16 %v2961
    %v2983 = vunpack.c.l.b16 %v2962
    %v2984 = vunpack.c.h.b16 %v2962
    %v2985 = vunpack.c.l.b16 %v2963
    %v2986 = vunpack.c.h.b16 %v2963
    %v2987 = vunpack.c.l.b16 %v2964
    %v2988 = vunpack.c.h.b16 %v2964
    %v2989 = vunpack.c.l.b16 %v2965
    %v2990 = vunpack.c.h.b16 %v2965
    %v2991 = vpack.c.b16 %v2977, %v2975
    %v2992 = vpack.c.b16 %v2978, %v2976
    %v2993 = vpack.c.b16 %v2981, %v2979
    %v2994 = vpack.c.b16 %v2982, %v2980
    %v2995 = vpack.c.b16 %v2985, %v2983
    %v2996 = vpack.c.b16 %v2986, %v2984
    %v2997 = vpack.c.b16 %v2989, %v2987
    %v2998 = vpack.c.b16 %v2990, %v2988
    %v3008 = vsel %vm158, %v2966, 0
    %3010 = vmatprep.subr.bf16.mxu0 %v2992
    %3011 = vmatpush1.bf16.msra.mxu0 %v2991
    %3012 = vmatprep.subr.bf16.mxu0 %v2994
    %3013 = vmatpush1.bf16.msra.mxu0 %v2993
    %3014 = vmatprep.subr.bf16.mxu0 %v2996
    %3015 = vmatpush1.bf16.msra.mxu0 %v2995
    %3016 = vmatprep.subr.bf16.mxu0 %v2998
    %3017 = vmatpush1.bf16.msra.mxu0 %v2997
    %3018 = vmatprep.subr.bf16.mxu0 0
    %3019 = vmatpush1.bf16.msra.mxu0 0
    %3020 = vmatprep.subr.bf16.mxu0 0
    %3021 = vmatpush1.bf16.msra.mxu0 0
    %3022 = vmatprep.subr.bf16.mxu0 0
    %3023 = vmatpush1.bf16.msra.mxu0 0
    %3024 = vmatprep.subr.bf16.mxu0 0
    %3025 = vmatpush1.bf16.msra.mxu0 0
    %3026 = vmatprep.subr.bf16.mxu0 0
    %3027 = vmatpush1.bf16.msra.mxu0 0
    %3028 = vmatprep.subr.bf16.mxu0 0
    %3029 = vmatpush1.bf16.msra.mxu0 0
    %3030 = vmatprep.subr.bf16.mxu0 0
    %3031 = vmatpush1.bf16.msra.mxu0 0
    %3032 = vmatprep.subr.bf16.mxu0 0
    %3033 = vmatpush1.bf16.msra.mxu0 0
    %3034 = vmatprep.subr.bf16.mxu0 0
    %3035 = vmatpush1.bf16.msra.mxu0 0
    %3036 = vmatprep.subr.bf16.mxu0 0
    %3037 = vmatpush1.bf16.msra.mxu0 0
    %3038 = vmatprep.subr.bf16.mxu0 0
    %3039 = vmatpush1.bf16.msra.mxu0 0
    %3040 = vmatprep.subr.bf16.mxu0 0
    %3041 = vmatpush1.bf16.msra.mxu0 0
    %3042 = vmatprep.mubr.bf16.mxu0 0
    %3043 = vmatmul.mubr.bf16.gmra.mrb[0].mxu0 %v3008
    %v3044 = vpop.f32.mrb[0].mxu0
    %v3045 = vadd.f32 0.0, %v3044
    %v3046 = vpop.f32.mrb[0].mxu0
    %v3047 = vadd.f32 0.0, %v3046
    %v3048 = vpop.f32.mrb[0].mxu0
    %v3049 = vpop.f32.mrb[0].mxu0
    %3050 = vdwg.mxu0
    %v3051 = vxor.u32 %v3045, 2147483648
    %v3052 = vmul.f32 %v3051, 1.442695
    %v3053 = vpow.pop %v3052
    %v3054 = vadd.f32 %v3053, 1.0
    %v3055 = vrcp.pop %v3054
    %v3056 = vmul.f32 1.0, %v3055
    %v3057 = vtanh.pop %v3047
    %v3058 = vsub.f32 %v3057, %v2957
    %v3059 = vmul.f32 %v3056, %v3058
    %v3060 = vadd.f32 %v2957, %v3059
    %v3061 = vmax.f32 %v3047, 0.0
    %3063 = vrot.lane.b32.xlu0 %v2957, 64
    %v3064 = vpop.permute.xlu0 %3063
    %v3066 = vsub.f32 %v3061, %v3064
    %v3067 = vmul.f32 %v3056, %v3066
    %3069 = vrot.lane.b32.xlu0 %v3067, 64
    %v3070 = vpop.permute.xlu0 %3069
    %v3072 = vadd.f32 %v2957, %v3070
    %v3073 = vld [vmem:[#allocation7 + $0x8] sm:$0xf]
    %v3074 = vld [vmem:[#allocation7 + $0x18] sm:$0xf]
    %v3075 = vld [vmem:[#allocation7 + $0x28] sm:$0xf]
    %v3076 = vld [vmem:[#allocation7 + $0x38] sm:$0xf]
    %v3077 = vld [vmem:[#allocation7 + $0x48] sm:$0xf]
    %v3078 = vld [vmem:[#allocation7 + $0x58] sm:$0xf]
    %v3079 = vld [vmem:[#allocation7 + $0x68] sm:$0xf]
    %v3080 = vld [vmem:[#allocation7 + $0x78] sm:$0xf]
    %v3081 = vpack.c.bf16 %v3060, %v3060
    %v3090 = vunpack.c.l.b16 %v3073
    %v3091 = vunpack.c.l.b16 %v3074
    %v3092 = vunpack.c.l.b16 %v3075
    %v3093 = vunpack.c.l.b16 %v3076
    %v3094 = vunpack.c.l.b16 %v3077
    %v3095 = vunpack.c.l.b16 %v3078
    %v3096 = vunpack.c.l.b16 %v3079
    %v3097 = vunpack.c.l.b16 %v3080
    %v3098 = vpack.c.b16 %v3091, %v3090
    %v3099 = vpack.c.b16 %v3093, %v3092
    %v3100 = vpack.c.b16 %v3095, %v3094
    %v3101 = vpack.c.b16 %v3097, %v3096
    %v3107 = vsel %vm158, %v3081, 0
    %3109 = vmatprep.subr.bf16.mxu0 0
    %3110 = vmatpush1.bf16.msra.mxu0 %v3098
    %3111 = vmatprep.subr.bf16.mxu0 0
    %3112 = vmatpush1.bf16.msra.mxu0 %v3099
    %3113 = vmatprep.subr.bf16.mxu0 0
    %3114 = vmatpush1.bf16.msra.mxu0 %v3100
    %3115 = vmatprep.subr.bf16.mxu0 0
    %3116 = vmatpush1.bf16.msra.mxu0 %v3101
    %3117 = vmatprep.subr.bf16.mxu0 0
    %3118 = vmatpush1.bf16.msra.mxu0 0
    %3119 = vmatprep.subr.bf16.mxu0 0
    %3120 = vmatpush1.bf16.msra.mxu0 0
    %3121 = vmatprep.subr.bf16.mxu0 0
    %3122 = vmatpush1.bf16.msra.mxu0 0
    %3123 = vmatprep.subr.bf16.mxu0 0
    %3124 = vmatpush1.bf16.msra.mxu0 0
    %3125 = vmatprep.subr.bf16.mxu0 0
    %3126 = vmatpush1.bf16.msra.mxu0 0
    %3127 = vmatprep.subr.bf16.mxu0 0
    %3128 = vmatpush1.bf16.msra.mxu0 0
    %3129 = vmatprep.subr.bf16.mxu0 0
    %3130 = vmatpush1.bf16.msra.mxu0 0
    %3131 = vmatprep.subr.bf16.mxu0 0
    %3132 = vmatpush1.bf16.msra.mxu0 0
    %3133 = vmatprep.subr.bf16.mxu0 0
    %3134 = vmatpush1.bf16.msra.mxu0 0
    %3135 = vmatprep.subr.bf16.mxu0 0
    %3136 = vmatpush1.bf16.msra.mxu0 0
    %3137 = vmatprep.subr.bf16.mxu0 0
    %3138 = vmatpush1.bf16.msra.mxu0 0
    %3139 = vmatprep.subr.bf16.mxu0 0
    %3140 = vmatpush1.bf16.msra.mxu0 0
    %3141 = vmatprep.mubr.bf16.mxu0 0
    %3142 = vmatmul.mubr.bf16.gmra.mrb[0].mxu0 %v3107
    %v3143 = vpop.f32.mrb[0].mxu0
    %v3144 = vadd.f32 0.0, %v3143
    %v3145 = vpop.f32.mrb[0].mxu0
    %v3146 = vpop.f32.mrb[0].mxu0
    %v3147 = vpop.f32.mrb[0].mxu0
    %3148 = vdwg.mxu0
    %v3149 = vxor.u32 %v3144, 2147483648
    %v3150 = vmul.f32 %v3149, 1.442695
    %v3151 = vpow.pop %v3150
    %v3152 = vadd.f32 %v3151, 1.0
    %v3153 = vrcp.pop %v3152
    %v3154 = vmul.f32 1.0, %v3153
    %3156 = vrot.lane.b32.xlu0 %v3060, 64
    %v3157 = vpop.permute.xlu0 %3156
    %v3159 = vsub.f32 %v3154, %v3157
    %3161 = vrot.lane.b32.xlu0 %v3159, 64
    %v3162 = vpop.permute.xlu0 %3161
    %v3164 = vmul.f32 %v3154, %v3162
    %v3165 = vadd.f32 %v3060, %v3164
    %v3166 = vld [vmem:[#allocation7 + $0xc] sm:$0xf]
    %v3167 = vld [vmem:[#allocation7 + $0x1c] sm:$0xf]
    %v3168 = vld [vmem:[#allocation7 + $0x2c] sm:$0xf]
    %v3169 = vld [vmem:[#allocation7 + $0x3c] sm:$0xf]
    %v3170 = vld [vmem:[#allocation7 + $0x4c] sm:$0xf]
    %v3171 = vld [vmem:[#allocation7 + $0x5c] sm:$0xf]
    %v3172 = vld [vmem:[#allocation7 + $0x6c] sm:$0xf]
    %v3173 = vld [vmem:[#allocation7 + $0x7c] sm:$0xf]
    %v3174 = vpack.c.bf16 %v3072, %v3072
    %v3183 = vunpack.c.l.b16 %v3166
    %v3184 = vunpack.c.l.b16 %v3167
    %v3185 = vunpack.c.l.b16 %v3168
    %v3186 = vunpack.c.l.b16 %v3169
    %v3187 = vunpack.c.l.b16 %v3170
    %v3188 = vunpack.c.l.b16 %v3171
    %v3189 = vunpack.c.l.b16 %v3172
    %v3190 = vunpack.c.l.b16 %v3173
    %v3191 = vpack.c.b16 %v3184, %v3183
    %v3192 = vpack.c.b16 %v3186, %v3185
    %v3193 = vpack.c.b16 %v3188, %v3187
    %v3194 = vpack.c.b16 %v3190, %v3189
    %v3200 = vsel %vm158, %v3174, 0
    %3202 = vmatprep.subr.bf16.mxu0 0
    %3203 = vmatpush1.bf16.msra.mxu0 %v3191
    %3204 = vmatprep.subr.bf16.mxu0 0
    %3205 = vmatpush1.bf16.msra.mxu0 %v3192
    %3206 = vmatprep.subr.bf16.mxu0 0
    %3207 = vmatpush1.bf16.msra.mxu0 %v3193
    %3208 = vmatprep.subr.bf16.mxu0 0
    %3209 = vmatpush1.bf16.msra.mxu0 %v3194
    %3210 = vmatprep.subr.bf16.mxu0 0
    %3211 = vmatpush1.bf16.msra.mxu0 0
    %3212 = vmatprep.subr.bf16.mxu0 0
    %3213 = vmatpush1.bf16.msra.mxu0 0
    %3214 = vmatprep.subr.bf16.mxu0 0
    %3215 = vmatpush1.bf16.msra.mxu0 0
    %3216 = vmatprep.subr.bf16.mxu0 0
    %3217 = vmatpush1.bf16.msra.mxu0 0
    %3218 = vmatprep.subr.bf16.mxu0 0
    %3219 = vmatpush1.bf16.msra.mxu0 0
    %3220 = vmatprep.subr.bf16.mxu0 0
    %3221 = vmatpush1.bf16.msra.mxu0 0
    %3222 = vmatprep.subr.bf16.mxu0 0
    %3223 = vmatpush1.bf16.msra.mxu0 0
    %3224 = vmatprep.subr.bf16.mxu0 0
    %3225 = vmatpush1.bf16.msra.mxu0 0
    %3226 = vmatprep.subr.bf16.mxu0 0
    %3227 = vmatpush1.bf16.msra.mxu0 0
    %3228 = vmatprep.subr.bf16.mxu0 0
    %3229 = vmatpush1.bf16.msra.mxu0 0
    %3230 = vmatprep.subr.bf16.mxu0 0
    %3231 = vmatpush1.bf16.msra.mxu0 0
    %3232 = vmatprep.subr.bf16.mxu0 0
    %3233 = vmatpush1.bf16.msra.mxu0 0
    %3234 = vmatprep.mubr.bf16.mxu0 0
    %3235 = vmatmul.mubr.bf16.gmra.mrb[0].mxu0 %v3200
    %v3236 = vpop.f32.mrb[0].mxu0
    %v3237 = vadd.f32 0.0, %v3236
    %v3238 = vpop.f32.mrb[0].mxu0
    %v3239 = vpop.f32.mrb[0].mxu0
    %v3240 = vpop.f32.mrb[0].mxu0
    %3241 = vdwg.mxu0
    %v3242 = vxor.u32 %v3237, 2147483648
    %v3243 = vmul.f32 %v3242, 1.442695
    %v3244 = vpow.pop %v3243
    %v3245 = vadd.f32 %v3244, 1.0
    %v3246 = vrcp.pop %v3245
    %v3247 = vmul.f32 1.0, %v3246
    %3249 = vrot.lane.b32.xlu0 %v3072, 64
    %v3250 = vpop.permute.xlu0 %3249
    %v3252 = vsub.f32 %v3237, %v3250
    %3254 = vrot.lane.b32.xlu0 %v3252, 64
    %v3255 = vpop.permute.xlu0 %3254
    %v3257 = vmul.f32 %v3247, %v3255
    %v3258 = vadd.f32 %v3072, %v3257
    %v3259 = vadd.f32 %v3060, %v3072
    %v3260 = vadd.f32 %v3259, %v3165
    %v3261 = vadd.f32 %v3260, %v3258
    %v3262 = vmul.f32 %v3261, 0.25
    %v3263 = vpack.c.bf16 %v3262, %v3262
    %v3264 = vld [vmem:[#allocation5] sm:$0xf]
    %v3265 = vld [vmem:[#allocation5 + $0x4] sm:$0xf]
    %v3266 = vld [vmem:[#allocation5 + $0x8] sm:$0xf]
    %v3267 = vld [vmem:[#allocation5 + $0xc] sm:$0xf]
    %v3268 = vld [vmem:[#allocation5 + $0x10] sm:$0xf]
    %v3269 = vld [vmem:[#allocation5 + $0x14] sm:$0xf]
    %v3270 = vld [vmem:[#allocation5 + $0x18] sm:$0xf]
    %v3271 = vld [vmem:[#allocation5 + $0x1c] sm:$0xf]
    %v3280 = vunpack.c.l.b16 %v3264
    %v3281 = vunpack.c.l.b16 %v3265
    %v3282 = vunpack.c.l.b16 %v3266
    %v3283 = vunpack.c.l.b16 %v3267
    %v3284 = vunpack.c.l.b16 %v3268
    %v3285 = vunpack.c.l.b16 %v3269
    %v3286 = vunpack.c.l.b16 %v3270
    %v3287 = vunpack.c.l.b16 %v3271
    %v3288 = vpack.c.b16 %v3281, %v3280
    %v3289 = vpack.c.b16 %v3283, %v3282
    %v3290 = vpack.c.b16 %v3285, %v3284
    %v3291 = vpack.c.b16 %v3287, %v3286
    %v3297 = vsel %vm158, %v3263, 0
    %3299 = vmatprep.subr.bf16.mxu0 0
    %3300 = vmatpush1.bf16.msra.mxu0 %v3288
    %3301 = vmatprep.subr.bf16.mxu0 0
    %3302 = vmatpush1.bf16.msra.mxu0 %v3289
    %3303 = vmatprep.subr.bf16.mxu0 0
    %3304 = vmatpush1.bf16.msra.mxu0 %v3290
    %3305 = vmatprep.subr.bf16.mxu0 0
    %3306 = vmatpush1.bf16.msra.mxu0 %v3291
    %3307 = vmatprep.subr.bf16.mxu0 0
    %3308 = vmatpush1.bf16.msra.mxu0 0
    %3309 = vmatprep.subr.bf16.mxu0 0
    %3310 = vmatpush1.bf16.msra.mxu0 0
    %3311 = vmatprep.subr.bf16.mxu0 0
    %3312 = vmatpush1.bf16.msra.mxu0 0
    %3313 = vmatprep.subr.bf16.mxu0 0
    %3314 = vmatpush1.bf16.msra.mxu0 0
    %3315 = vmatprep.subr.bf16.mxu0 0
    %3316 = vmatpush1.bf16.msra.mxu0 0
    %3317 = vmatprep.subr.bf16.mxu0 0
    %3318 = vmatpush1.bf16.msra.mxu0 0
    %3319 = vmatprep.subr.bf16.mxu0 0
    %3320 = vmatpush1.bf16.msra.mxu0 0
    %3321 = vmatprep.subr.bf16.mxu0 0
    %3322 = vmatpush1.bf16.msra.mxu0 0
    %3323 = vmatprep.subr.bf16.mxu0 0
    %3324 = vmatpush1.bf16.msra.mxu0 0
    %3325 = vmatprep.subr.bf16.mxu0 0
    %3326 = vmatpush1.bf16.msra.mxu0 0
    %3327 = vmatprep.subr.bf16.mxu0 0
    %3328 = vmatpush1.bf16.msra.mxu0 0
    %3329 = vmatprep.subr.bf16.mxu0 0
    %3330 = vmatpush1.bf16.msra.mxu0 0
    %3331 = vmatprep.mubr.bf16.mxu0 0
    %3332 = vmatmul.mubr.bf16.gmra.mrb[0].mxu0 %v3297
    %v3333 = vpop.f32.mrb[0].mxu0
    %v3334 = vadd.f32 %v680, %v3333
    %v3335 = vpop.f32.mrb[0].mxu0
    %v3336 = vpop.f32.mrb[0].mxu0
    %v3337 = vpop.f32.mrb[0].mxu0
    %3338 = vdwg.mxu0
    %v3339 = vsel %vm158, %v3334, -inf
    %3340 = vmax.xlane.f32.xlu0 %v3339
    %v3341 = vpop.xlane.xlu0 %3340
    %v3342 = vsub.f32 %v3334, %v3341
    %v3343 = vmul.f32 %v3342, 1.442695
    %v3344 = vpow.pop %v3343
    %v3345 = vsel %vm158, %v3344, 0.0
    %3346 = vadd.xlane.f32.xlu0 %v3345
    %v3347 = vpop.xlane.xlu0 %3346
    %v3348 = vlog2.pop %v3347
    %v3349 = vmul.f32 %v3348, 0.6931472
    %v3350 = vsub.f32 %v3342, %v3349
    %3351 = vst.msk [vmem:[#allocation8 + $0x28] sm:$0xff] %vm158, %v3350
    %3353 = vrot.lane.b32.xlu0 %v3262, 64
    %v3354 = vpop.permute.xlu0 %3353
    %v3356 = vsel %vm158, %v230, %v3354
    %v3357 = vpack.c.bf16 %v3356, %v3356
    %v3358 = vld [vmem:[%s4] sm:$0xf]
    %v3359 = vld [vmem:[%s4 + $0x4] sm:$0xf]
    %v3360 = vld [vmem:[%s4 + $0x8] sm:$0xf]
    %v3361 = vld [vmem:[%s4 + $0xc] sm:$0xf]
    %v3362 = vld [vmem:[%s4 + $0x10] sm:$0xf]
    %v3363 = vld [vmem:[%s4 + $0x14] sm:$0xf]
    %v3364 = vld [vmem:[%s4 + $0x18] sm:$0xf]
    %v3365 = vld [vmem:[%s4 + $0x1c] sm:$0xf]
    %v3366 = vld [vmem:[%s4 + $0x20] sm:$0xf]
    %v3367 = vld [vmem:[%s4 + $0x24] sm:$0xf]
    %v3368 = vld [vmem:[%s4 + $0x28] sm:$0xf]
    %v3369 = vld [vmem:[%s4 + $0x2c] sm:$0xf]
    %v3370 = vld [vmem:[%s4 + $0x30] sm:$0xf]
    %v3371 = vld [vmem:[%s4 + $0x34] sm:$0xf]
    %v3372 = vld [vmem:[%s4 + $0x38] sm:$0xf]
    %v3373 = vld [vmem:[%s4 + $0x3c] sm:$0xf]
    %v3390 = vunpack.c.l.b16 %v3358
    %v3391 = vunpack.c.l.b16 %v3359
    %v3392 = vunpack.c.l.b16 %v3360
    %v3393 = vunpack.c.l.b16 %v3361
    %v3394 = vunpack.c.l.b16 %v3362
    %v3395 = vunpack.c.l.b16 %v3363
    %v3396 = vunpack.c.l.b16 %v3364
    %v3397 = vunpack.c.l.b16 %v3365
    %v3398 = vunpack.c.l.b16 %v3366
    %v3399 = vunpack.c.l.b16 %v3367
    %v3400 = vunpack.c.l.b16 %v3368
    %v3401 = vunpack.c.l.b16 %v3369
    %v3402 = vunpack.c.l.b16 %v3370
    %v3403 = vunpack.c.l.b16 %v3371
    %v3404 = vunpack.c.l.b16 %v3372
    %v3405 = vunpack.c.l.b16 %v3373
    %v3406 = vpack.c.b16 %v3391, %v3390
    %v3407 = vpack.c.b16 %v3393, %v3392
    %v3408 = vpack.c.b16 %v3395, %v3394
    %v3409 = vpack.c.b16 %v3397, %v3396
    %v3410 = vpack.c.b16 %v3399, %v3398
    %v3411 = vpack.c.b16 %v3401, %v3400
    %v3412 = vpack.c.b16 %v3403, %v3402
    %v3413 = vpack.c.b16 %v3405, %v3404
    %3422 = vmatprep.subr.bf16.mxu0 0
    %3423 = vmatpush1.bf16.msra.mxu0 %v3406
    %3424 = vmatprep.subr.bf16.mxu0 0
    %3425 = vmatpush1.bf16.msra.mxu0 %v3407
    %3426 = vmatprep.subr.bf16.mxu0 0
    %3427 = vmatpush1.bf16.msra.mxu0 %v3408
    %3428 = vmatprep.subr.bf16.mxu0 0
    %3429 = vmatpush1.bf16.msra.mxu0 %v3409
    %3430 = vmatprep.subr.bf16.mxu0 0
    %3431 = vmatpush1.bf16.msra.mxu0 %v3410
    %3432 = vmatprep.subr.bf16.mxu0 0
    %3433 = vmatpush1.bf16.msra.mxu0 %v3411
    %3434 = vmatprep.subr.bf16.mxu0 0
    %3435 = vmatpush1.bf16.msra.mxu0 %v3412
    %3436 = vmatprep.subr.bf16.mxu0 0
    %3437 = vmatpush1.bf16.msra.mxu0 %v3413
    %3438 = vmatprep.subr.bf16.mxu0 0
    %3439 = vmatpush1.bf16.msra.mxu0 0
    %3440 = vmatprep.subr.bf16.mxu0 0
    %3441 = vmatpush1.bf16.msra.mxu0 0
    %3442 = vmatprep.subr.bf16.mxu0 0
    %3443 = vmatpush1.bf16.msra.mxu0 0
    %3444 = vmatprep.subr.bf16.mxu0 0
    %3445 = vmatpush1.bf16.msra.mxu0 0
    %3446 = vmatprep.subr.bf16.mxu0 0
    %3447 = vmatpush1.bf16.msra.mxu0 0
    %3448 = vmatprep.subr.bf16.mxu0 0
    %3449 = vmatpush1.bf16.msra.mxu0 0
    %3450 = vmatprep.subr.bf16.mxu0 0
    %3451 = vmatpush1.bf16.msra.mxu0 0
    %3452 = vmatprep.subr.bf16.mxu0 0
    %3453 = vmatpush1.bf16.msra.mxu0 0
    %3454 = vmatprep.mubr.bf16.mxu0 0
    %3455 = vmatmul.mubr.bf16.gmra.mrb[0].mxu0 %v3357
    %v3456 = vpop.f32.mrb[0].mxu0
    %v3457 = vadd.f32 0.0, %v3456
    %v3458 = vpop.f32.mrb[0].mxu0
    %v3459 = vpop.f32.mrb[0].mxu0
    %v3460 = vpop.f32.mrb[0].mxu0
    %3461 = vdwg.mxu0
    %v3462 = vxor.u32 %v3457, 2147483648
    %v3463 = vmul.f32 %v3462, 1.442695
    %v3464 = vpow.pop %v3463
    %v3465 = vadd.f32 %v3464, 1.0
    %v3466 = vrcp.pop %v3465
    %v3467 = vmul.f32 1.0, %v3466
    %v3468 = vtanh.pop %v3457
    %v3469 = vsub.f32 %v3468, %v3354
    %3471 = vrot.lane.b32.xlu0 %v3469, 64
    %v3472 = vpop.permute.xlu0 %3471
    %v3474 = vmul.f32 %v3467, %v3472
    %v3475 = vadd.f32 %v3262, %v3474
    %v3476 = vld [vmem:[#allocation7] sm:$0xff]
    %v3477 = vld [vmem:[#allocation7 + $0x10] sm:$0xff]
    %v3478 = vld [vmem:[#allocation7 + $0x20] sm:$0xff]
    %v3479 = vld [vmem:[#allocation7 + $0x30] sm:$0xff]
    %v3480 = vld [vmem:[#allocation7 + $0x40] sm:$0xff]
    %v3481 = vld [vmem:[#allocation7 + $0x50] sm:$0xff]
    %v3482 = vld [vmem:[#allocation7 + $0x60] sm:$0xff]
    %v3483 = vld [vmem:[#allocation7 + $0x70] sm:$0xff]
    %v3484 = vpack.c.bf16 %v3475, %v3475
    %v3493 = vunpack.c.l.b16 %v3476
    %v3494 = vunpack.c.h.b16 %v3476
    %v3495 = vunpack.c.l.b16 %v3477
    %v3496 = vunpack.c.h.b16 %v3477
    %v3497 = vunpack.c.l.b16 %v3478
    %v3498 = vunpack.c.h.b16 %v3478
    %v3499 = vunpack.c.l.b16 %v3479
    %v3500 = vunpack.c.h.b16 %v3479
    %v3501 = vunpack.c.l.b16 %v3480
    %v3502 = vunpack.c.h.b16 %v3480
    %v3503 = vunpack.c.l.b16 %v3481
    %v3504 = vunpack.c.h.b16 %v3481
    %v3505 = vunpack.c.l.b16 %v3482
    %v3506 = vunpack.c.h.b16 %v3482
    %v3507 = vunpack.c.l.b16 %v3483
    %v3508 = vunpack.c.h.b16 %v3483
    %v3509 = vpack.c.b16 %v3495, %v3493
    %v3510 = vpack.c.b16 %v3496, %v3494
    %v3511 = vpack.c.b16 %v3499, %v3497
    %v3512 = vpack.c.b16 %v3500, %v3498
    %v3513 = vpack.c.b16 %v3503, %v3501
    %v3514 = vpack.c.b16 %v3504, %v3502
    %v3515 = vpack.c.b16 %v3507, %v3505
    %v3516 = vpack.c.b16 %v3508, %v3506
    %v3526 = vsel %vm158, %v3484, 0
    %3528 = vmatprep.subr.bf16.mxu0 %v3510
    %3529 = vmatpush1.bf16.msra.mxu0 %v3509
    %3530 = vmatprep.subr.bf16.mxu0 %v3512
    %3531 = vmatpush1.bf16.msra.mxu0 %v3511
    %3532 = vmatprep.subr.bf16.mxu0 %v3514
    %3533 = vmatpush1.bf16.msra.mxu0 %v3513
    %3534 = vmatprep.subr.bf16.mxu0 %v3516
    %3535 = vmatpush1.bf16.msra.mxu0 %v3515
    %3536 = vmatprep.subr.bf16.mxu0 0
    %3537 = vmatpush1.bf16.msra.mxu0 0
    %3538 = vmatprep.subr.bf16.mxu0 0
    %3539 = vmatpush1.bf16.msra.mxu0 0
    %3540 = vmatprep.subr.bf16.mxu0 0
    %3541 = vmatpush1.bf16.msra.mxu0 0
    %3542 = vmatprep.subr.bf16.mxu0 0
    %3543 = vmatpush1.bf16.msra.mxu0 0
    %3544 = vmatprep.subr.bf16.mxu0 0
    %3545 = vmatpush1.bf16.msra.mxu0 0
    %3546 = vmatprep.subr.bf16.mxu0 0
    %3547 = vmatpush1.bf16.msra.mxu0 0
    %3548 = vmatprep.subr.bf16.mxu0 0
    %3549 = vmatpush1.bf16.msra.mxu0 0
    %3550 = vmatprep.subr.bf16.mxu0 0
    %3551 = vmatpush1.bf16.msra.mxu0 0
    %3552 = vmatprep.subr.bf16.mxu0 0
    %3553 = vmatpush1.bf16.msra.mxu0 0
    %3554 = vmatprep.subr.bf16.mxu0 0
    %3555 = vmatpush1.bf16.msra.mxu0 0
    %3556 = vmatprep.subr.bf16.mxu0 0
    %3557 = vmatpush1.bf16.msra.mxu0 0
    %3558 = vmatprep.subr.bf16.mxu0 0
    %3559 = vmatpush1.bf16.msra.mxu0 0
    %3560 = vmatprep.mubr.bf16.mxu0 0
    %3561 = vmatmul.mubr.bf16.gmra.mrb[0].mxu0 %v3526
    %v3562 = vpop.f32.mrb[0].mxu0
    %v3563 = vadd.f32 0.0, %v3562
    %v3564 = vpop.f32.mrb[0].mxu0
    %v3565 = vadd.f32 0.0, %v3564
    %v3566 = vpop.f32.mrb[0].mxu0
    %v3567 = vpop.f32.mrb[0].mxu0
    %3568 = vdwg.mxu0
    %v3569 = vxor.u32 %v3563, 2147483648
    %v3570 = vmul.f32 %v3569, 1.442695
    %v3571 = vpow.pop %v3570
    %v3572 = vadd.f32 %v3571, 1.0
    %v3573 = vrcp.pop %v3572
    %v3574 = vmul.f32 1.0, %v3573
    %v3575 = vtanh.pop %v3565
    %v3576 = vsub.f32 %v3575, %v3475
    %v3577 = vmul.f32 %v3574, %v3576
    %v3578 = vadd.f32 %v3475, %v3577
    %v3579 = vmax.f32 %v3565, 0.0
    %3581 = vrot.lane.b32.xlu0 %v3475, 64
    %v3582 = vpop.permute.xlu0 %3581
    %v3584 = vsub.f32 %v3579, %v3582
    %v3585 = vmul.f32 %v3574, %v3584
    %3587 = vrot.lane.b32.xlu0 %v3585, 64
    %v3588 = vpop.permute.xlu0 %3587
    %v3590 = vadd.f32 %v3475, %v3588
    %v3591 = vld [vmem:[#allocation7 + $0x8] sm:$0xf]
    %v3592 = vld [vmem:[#allocation7 + $0x18] sm:$0xf]
    %v3593 = vld [vmem:[#allocation7 + $0x28] sm:$0xf]
    %v3594 = vld [vmem:[#allocation7 + $0x38] sm:$0xf]
    %v3595 = vld [vmem:[#allocation7 + $0x48] sm:$0xf]
    %v3596 = vld [vmem:[#allocation7 + $0x58] sm:$0xf]
    %v3597 = vld [vmem:[#allocation7 + $0x68] sm:$0xf]
    %v3598 = vld [vmem:[#allocation7 + $0x78] sm:$0xf]
    %v3599 = vpack.c.bf16 %v3578, %v3578
    %v3608 = vunpack.c.l.b16 %v3591
    %v3609 = vunpack.c.l.b16 %v3592
    %v3610 = vunpack.c.l.b16 %v3593
    %v3611 = vunpack.c.l.b16 %v3594
    %v3612 = vunpack.c.l.b16 %v3595
    %v3613 = vunpack.c.l.b16 %v3596
    %v3614 = vunpack.c.l.b16 %v3597
    %v3615 = vunpack.c.l.b16 %v3598
    %v3616 = vpack.c.b16 %v3609, %v3608
    %v3617 = vpack.c.b16 %v3611, %v3610
    %v3618 = vpack.c.b16 %v3613, %v3612
    %v3619 = vpack.c.b16 %v3615, %v3614
    %v3625 = vsel %vm158, %v3599, 0
    %3627 = vmatprep.subr.bf16.mxu0 0
    %3628 = vmatpush1.bf16.msra.mxu0 %v3616
    %3629 = vmatprep.subr.bf16.mxu0 0
    %3630 = vmatpush1.bf16.msra.mxu0 %v3617
    %3631 = vmatprep.subr.bf16.mxu0 0
    %3632 = vmatpush1.bf16.msra.mxu0 %v3618
    %3633 = vmatprep.subr.bf16.mxu0 0
    %3634 = vmatpush1.bf16.msra.mxu0 %v3619
    %3635 = vmatprep.subr.bf16.mxu0 0
    %3636 = vmatpush1.bf16.msra.mxu0 0
    %3637 = vmatprep.subr.bf16.mxu0 0
    %3638 = vmatpush1.bf16.msra.mxu0 0
    %3639 = vmatprep.subr.bf16.mxu0 0
    %3640 = vmatpush1.bf16.msra.mxu0 0
    %3641 = vmatprep.subr.bf16.mxu0 0
    %3642 = vmatpush1.bf16.msra.mxu0 0
    %3643 = vmatprep.subr.bf16.mxu0 0
    %3644 = vmatpush1.bf16.msra.mxu0 0
    %3645 = vmatprep.subr.bf16.mxu0 0
    %3646 = vmatpush1.bf16.msra.mxu0 0
    %3647 = vmatprep.subr.bf16.mxu0 0
    %3648 = vmatpush1.bf16.msra.mxu0 0
    %3649 = vmatprep.subr.bf16.mxu0 0
    %3650 = vmatpush1.bf16.msra.mxu0 0
    %3651 = vmatprep.subr.bf16.mxu0 0
    %3652 = vmatpush1.bf16.msra.mxu0 0
    %3653 = vmatprep.subr.bf16.mxu0 0
    %3654 = vmatpush1.bf16.msra.mxu0 0
    %3655 = vmatprep.subr.bf16.mxu0 0
    %3656 = vmatpush1.bf16.msra.mxu0 0
    %3657 = vmatprep.subr.bf16.mxu0 0
    %3658 = vmatpush1.bf16.msra.mxu0 0
    %3659 = vmatprep.mubr.bf16.mxu0 0
    %3660 = vmatmul.mubr.bf16.gmra.mrb[0].mxu0 %v3625
    %v3661 = vpop.f32.mrb[0].mxu0
    %v3662 = vadd.f32 0.0, %v3661
    %v3663 = vpop.f32.mrb[0].mxu0
    %v3664 = vpop.f32.mrb[0].mxu0
    %v3665 = vpop.f32.mrb[0].mxu0
    %3666 = vdwg.mxu0
    %v3667 = vxor.u32 %v3662, 2147483648
    %v3668 = vmul.f32 %v3667, 1.442695
    %v3669 = vpow.pop %v3668
    %v3670 = vadd.f32 %v3669, 1.0
    %v3671 = vrcp.pop %v3670
    %v3672 = vmul.f32 1.0, %v3671
    %3674 = vrot.lane.b32.xlu0 %v3578, 64
    %v3675 = vpop.permute.xlu0 %3674
    %v3677 = vsub.f32 %v3672, %v3675
    %3679 = vrot.lane.b32.xlu0 %v3677, 64
    %v3680 = vpop.permute.xlu0 %3679
    %v3682 = vmul.f32 %v3672, %v3680
    %v3683 = vadd.f32 %v3578, %v3682
    %v3684 = vld [vmem:[#allocation7 + $0xc] sm:$0xf]
    %v3685 = vld [vmem:[#allocation7 + $0x1c] sm:$0xf]
    %v3686 = vld [vmem:[#allocation7 + $0x2c] sm:$0xf]
    %v3687 = vld [vmem:[#allocation7 + $0x3c] sm:$0xf]
    %v3688 = vld [vmem:[#allocation7 + $0x4c] sm:$0xf]
    %v3689 = vld [vmem:[#allocation7 + $0x5c] sm:$0xf]
    %v3690 = vld [vmem:[#allocation7 + $0x6c] sm:$0xf]
    %v3691 = vld [vmem:[#allocation7 + $0x7c] sm:$0xf]
    %v3692 = vpack.c.bf16 %v3590, %v3590
    %v3701 = vunpack.c.l.b16 %v3684
    %v3702 = vunpack.c.l.b16 %v3685
    %v3703 = vunpack.c.l.b16 %v3686
    %v3704 = vunpack.c.l.b16 %v3687
    %v3705 = vunpack.c.l.b16 %v3688
    %v3706 = vunpack.c.l.b16 %v3689
    %v3707 = vunpack.c.l.b16 %v3690
    %v3708 = vunpack.c.l.b16 %v3691
    %v3709 = vpack.c.b16 %v3702, %v3701
    %v3710 = vpack.c.b16 %v3704, %v3703
    %v3711 = vpack.c.b16 %v3706, %v3705
    %v3712 = vpack.c.b16 %v3708, %v3707
    %v3718 = vsel %vm158, %v3692, 0
    %3720 = vmatprep.subr.bf16.mxu0 0
    %3721 = vmatpush1.bf16.msra.mxu0 %v3709
    %3722 = vmatprep.subr.bf16.mxu0 0
    %3723 = vmatpush1.bf16.msra.mxu0 %v3710
    %3724 = vmatprep.subr.bf16.mxu0 0
    %3725 = vmatpush1.bf16.msra.mxu0 %v3711
    %3726 = vmatprep.subr.bf16.mxu0 0
    %3727 = vmatpush1.bf16.msra.mxu0 %v3712
    %3728 = vmatprep.subr.bf16.mxu0 0
    %3729 = vmatpush1.bf16.msra.mxu0 0
    %3730 = vmatprep.subr.bf16.mxu0 0
    %3731 = vmatpush1.bf16.msra.mxu0 0
    %3732 = vmatprep.subr.bf16.mxu0 0
    %3733 = vmatpush1.bf16.msra.mxu0 0
    %3734 = vmatprep.subr.bf16.mxu0 0
    %3735 = vmatpush1.bf16.msra.mxu0 0
    %3736 = vmatprep.subr.bf16.mxu0 0
    %3737 = vmatpush1.bf16.msra.mxu0 0
    %3738 = vmatprep.subr.bf16.mxu0 0
    %3739 = vmatpush1.bf16.msra.mxu0 0
    %3740 = vmatprep.subr.bf16.mxu0 0
    %3741 = vmatpush1.bf16.msra.mxu0 0
    %3742 = vmatprep.subr.bf16.mxu0 0
    %3743 = vmatpush1.bf16.msra.mxu0 0
    %3744 = vmatprep.subr.bf16.mxu0 0
    %3745 = vmatpush1.bf16.msra.mxu0 0
    %3746 = vmatprep.subr.bf16.mxu0 0
    %3747 = vmatpush1.bf16.msra.mxu0 0
    %3748 = vmatprep.subr.bf16.mxu0 0
    %3749 = vmatpush1.bf16.msra.mxu0 0
    %3750 = vmatprep.subr.bf16.mxu0 0
    %3751 = vmatpush1.bf16.msra.mxu0 0
    %3752 = vmatprep.mubr.bf16.mxu0 0
    %3753 = vmatmul.mubr.bf16.gmra.mrb[0].mxu0 %v3718
    %v3754 = vpop.f32.mrb[0].mxu0
    %v3755 = vadd.f32 0.0, %v3754
    %v3756 = vpop.f32.mrb[0].mxu0
    %v3757 = vpop.f32.mrb[0].mxu0
    %v3758 = vpop.f32.mrb[0].mxu0
    %3759 = vdwg.mxu0
    %v3760 = vxor.u32 %v3755, 2147483648
    %v3761 = vmul.f32 %v3760, 1.442695
    %v3762 = vpow.pop %v3761
    %v3763 = vadd.f32 %v3762, 1.0
    %v3764 = vrcp.pop %v3763
    %v3765 = vmul.f32 1.0, %v3764
    %3767 = vrot.lane.b32.xlu0 %v3590, 64
    %v3768 = vpop.permute.xlu0 %3767
    %v3770 = vsub.f32 %v3755, %v3768
    %3772 = vrot.lane.b32.xlu0 %v3770, 64
    %v3773 = vpop.permute.xlu0 %3772
    %v3775 = vmul.f32 %v3765, %v3773
    %v3776 = vadd.f32 %v3590, %v3775
    %v3777 = vadd.f32 %v3578, %v3590
    %v3778 = vadd.f32 %v3777, %v3683
    %v3779 = vadd.f32 %v3778, %v3776
    %v3780 = vmul.f32 %v3779, 0.25
    %v3781 = vpack.c.bf16 %v3780, %v3780
    %v3782 = vld [vmem:[#allocation5] sm:$0xf]
    %v3783 = vld [vmem:[#allocation5 + $0x4] sm:$0xf]
    %v3784 = vld [vmem:[#allocation5 + $0x8] sm:$0xf]
    %v3785 = vld [vmem:[#allocation5 + $0xc] sm:$0xf]
    %v3786 = vld [vmem:[#allocation5 + $0x10] sm:$0xf]
    %v3787 = vld [vmem:[#allocation5 + $0x14] sm:$0xf]
    %v3788 = vld [vmem:[#allocation5 + $0x18] sm:$0xf]
    %v3789 = vld [vmem:[#allocation5 + $0x1c] sm:$0xf]
    %v3798 = vunpack.c.l.b16 %v3782
    %v3799 = vunpack.c.l.b16 %v3783
    %v3800 = vunpack.c.l.b16 %v3784
    %v3801 = vunpack.c.l.b16 %v3785
    %v3802 = vunpack.c.l.b16 %v3786
    %v3803 = vunpack.c.l.b16 %v3787
    %v3804 = vunpack.c.l.b16 %v3788
    %v3805 = vunpack.c.l.b16 %v3789
    %v3806 = vpack.c.b16 %v3799, %v3798
    %v3807 = vpack.c.b16 %v3801, %v3800
    %v3808 = vpack.c.b16 %v3803, %v3802
    %v3809 = vpack.c.b16 %v3805, %v3804
    %v3815 = vsel %vm158, %v3781, 0
    %3817 = vmatprep.subr.bf16.mxu0 0
    %3818 = vmatpush1.bf16.msra.mxu0 %v3806
    %3819 = vmatprep.subr.bf16.mxu0 0
    %3820 = vmatpush1.bf16.msra.mxu0 %v3807
    %3821 = vmatprep.subr.bf16.mxu0 0
    %3822 = vmatpush1.bf16.msra.mxu0 %v3808
    %3823 = vmatprep.subr.bf16.mxu0 0
    %3824 = vmatpush1.bf16.msra.mxu0 %v3809
    %3825 = vmatprep.subr.bf16.mxu0 0
    %3826 = vmatpush1.bf16.msra.mxu0 0
    %3827 = vmatprep.subr.bf16.mxu0 0
    %3828 = vmatpush1.bf16.msra.mxu0 0
    %3829 = vmatprep.subr.bf16.mxu0 0
    %3830 = vmatpush1.bf16.msra.mxu0 0
    %3831 = vmatprep.subr.bf16.mxu0 0
    %3832 = vmatpush1.bf16.msra.mxu0 0
    %3833 = vmatprep.subr.bf16.mxu0 0
    %3834 = vmatpush1.bf16.msra.mxu0 0
    %3835 = vmatprep.subr.bf16.mxu0 0
    %3836 = vmatpush1.bf16.msra.mxu0 0
    %3837 = vmatprep.subr.bf16.mxu0 0
    %3838 = vmatpush1.bf16.msra.mxu0 0
    %3839 = vmatprep.subr.bf16.mxu0 0
    %3840 = vmatpush1.bf16.msra.mxu0 0
    %3841 = vmatprep.subr.bf16.mxu0 0
    %3842 = vmatpush1.bf16.msra.mxu0 0
    %3843 = vmatprep.subr.bf16.mxu0 0
    %3844 = vmatpush1.bf16.msra.mxu0 0
    %3845 = vmatprep.subr.bf16.mxu0 0
    %3846 = vmatpush1.bf16.msra.mxu0 0
    %3847 = vmatprep.subr.bf16.mxu0 0
    %3848 = vmatpush1.bf16.msra.mxu0 0
    %3849 = vmatprep.mubr.bf16.mxu0 0
    %3850 = vmatmul.mubr.bf16.gmra.mrb[0].mxu0 %v3815
    %v3851 = vpop.f32.mrb[0].mxu0
    %v3852 = vadd.f32 %v680, %v3851
    %v3853 = vpop.f32.mrb[0].mxu0
    %v3854 = vpop.f32.mrb[0].mxu0
    %v3855 = vpop.f32.mrb[0].mxu0
    %3856 = vdwg.mxu0
    %v3857 = vsel %vm158, %v3852, -inf
    %3858 = vmax.xlane.f32.xlu0 %v3857
    %v3859 = vpop.xlane.xlu0 %3858
    %v3860 = vsub.f32 %v3852, %v3859
    %v3861 = vmul.f32 %v3860, 1.442695
    %v3862 = vpow.pop %v3861
    %v3863 = vsel %vm158, %v3862, 0.0
    %3864 = vadd.xlane.f32.xlu0 %v3863
    %v3865 = vpop.xlane.xlu0 %3864
    %v3866 = vlog2.pop %v3865
    %v3867 = vmul.f32 %v3866, 0.6931472
    %v3868 = vsub.f32 %v3860, %v3867
    %3869 = vst.msk [vmem:[#allocation8 + $0x30] sm:$0xff] %vm158, %v3868
    %3871 = vrot.lane.b32.xlu0 %v3780, 64
    %v3872 = vpop.permute.xlu0 %3871
    %v3874 = vsel %vm158, %v233, %v3872
    %v3875 = vpack.c.bf16 %v3874, %v3874
    %v3876 = vld [vmem:[%s4] sm:$0xf]
    %v3877 = vld [vmem:[%s4 + $0x4] sm:$0xf]
    %v3878 = vld [vmem:[%s4 + $0x8] sm:$0xf]
    %v3879 = vld [vmem:[%s4 + $0xc] sm:$0xf]
    %v3880 = vld [vmem:[%s4 + $0x10] sm:$0xf]
    %v3881 = vld [vmem:[%s4 + $0x14] sm:$0xf]
    %v3882 = vld [vmem:[%s4 + $0x18] sm:$0xf]
    %v3883 = vld [vmem:[%s4 + $0x1c] sm:$0xf]
    %v3884 = vld [vmem:[%s4 + $0x20] sm:$0xf]
    %v3885 = vld [vmem:[%s4 + $0x24] sm:$0xf]
    %v3886 = vld [vmem:[%s4 + $0x28] sm:$0xf]
    %v3887 = vld [vmem:[%s4 + $0x2c] sm:$0xf]
    %v3888 = vld [vmem:[%s4 + $0x30] sm:$0xf]
    %v3889 = vld [vmem:[%s4 + $0x34] sm:$0xf]
    %v3890 = vld [vmem:[%s4 + $0x38] sm:$0xf]
    %v3891 = vld [vmem:[%s4 + $0x3c] sm:$0xf]
    %v3908 = vunpack.c.l.b16 %v3876
    %v3909 = vunpack.c.l.b16 %v3877
    %v3910 = vunpack.c.l.b16 %v3878
    %v3911 = vunpack.c.l.b16 %v3879
    %v3912 = vunpack.c.l.b16 %v3880
    %v3913 = vunpack.c.l.b16 %v3881
    %v3914 = vunpack.c.l.b16 %v3882
    %v3915 = vunpack.c.l.b16 %v3883
    %v3916 = vunpack.c.l.b16 %v3884
    %v3917 = vunpack.c.l.b16 %v3885
    %v3918 = vunpack.c.l.b16 %v3886
    %v3919 = vunpack.c.l.b16 %v3887
    %v3920 = vunpack.c.l.b16 %v3888
    %v3921 = vunpack.c.l.b16 %v3889
    %v3922 = vunpack.c.l.b16 %v3890
    %v3923 = vunpack.c.l.b16 %v3891
    %v3924 = vpack.c.b16 %v3909, %v3908
    %v3925 = vpack.c.b16 %v3911, %v3910
    %v3926 = vpack.c.b16 %v3913, %v3912
    %v3927 = vpack.c.b16 %v3915, %v3914
    %v3928 = vpack.c.b16 %v3917, %v3916
    %v3929 = vpack.c.b16 %v3919, %v3918
    %v3930 = vpack.c.b16 %v3921, %v3920
    %v3931 = vpack.c.b16 %v3923, %v3922
    %3940 = vmatprep.subr.bf16.mxu0 0
    %3941 = vmatpush1.bf16.msra.mxu0 %v3924
    %3942 = vmatprep.subr.bf16.mxu0 0
    %3943 = vmatpush1.bf16.msra.mxu0 %v3925
    %3944 = vmatprep.subr.bf16.mxu0 0
    %3945 = vmatpush1.bf16.msra.mxu0 %v3926
    %3946 = vmatprep.subr.bf16.mxu0 0
    %3947 = vmatpush1.bf16.msra.mxu0 %v3927
    %3948 = vmatprep.subr.bf16.mxu0 0
    %3949 = vmatpush1.bf16.msra.mxu0 %v3928
    %3950 = vmatprep.subr.bf16.mxu0 0
    %3951 = vmatpush1.bf16.msra.mxu0 %v3929
    %3952 = vmatprep.subr.bf16.mxu0 0
    %3953 = vmatpush1.bf16.msra.mxu0 %v3930
    %3954 = vmatprep.subr.bf16.mxu0 0
    %3955 = vmatpush1.bf16.msra.mxu0 %v3931
    %3956 = vmatprep.subr.bf16.mxu0 0
    %3957 = vmatpush1.bf16.msra.mxu0 0
    %3958 = vmatprep.subr.bf16.mxu0 0
    %3959 = vmatpush1.bf16.msra.mxu0 0
    %3960 = vmatprep.subr.bf16.mxu0 0
    %3961 = vmatpush1.bf16.msra.mxu0 0
    %3962 = vmatprep.subr.bf16.mxu0 0
    %3963 = vmatpush1.bf16.msra.mxu0 0
    %3964 = vmatprep.subr.bf16.mxu0 0
    %3965 = vmatpush1.bf16.msra.mxu0 0
    %3966 = vmatprep.subr.bf16.mxu0 0
    %3967 = vmatpush1.bf16.msra.mxu0 0
    %3968 = vmatprep.subr.bf16.mxu0 0
    %3969 = vmatpush1.bf16.msra.mxu0 0
    %3970 = vmatprep.subr.bf16.mxu0 0
    %3971 = vmatpush1.bf16.msra.mxu0 0
    %3972 = vmatprep.mubr.bf16.mxu0 0
    %3973 = vmatmul.mubr.bf16.gmra.mrb[0].mxu0 %v3875
    %v3974 = vpop.f32.mrb[0].mxu0
    %v3975 = vadd.f32 0.0, %v3974
    %v3976 = vpop.f32.mrb[0].mxu0
    %v3977 = vpop.f32.mrb[0].mxu0
    %v3978 = vpop.f32.mrb[0].mxu0
    %3979 = vdwg.mxu0
    %v3980 = vxor.u32 %v3975, 2147483648
    %v3981 = vmul.f32 %v3980, 1.442695
    %v3982 = vpow.pop %v3981
    %v3983 = vadd.f32 %v3982, 1.0
    %v3984 = vrcp.pop %v3983
    %v3985 = vmul.f32 1.0, %v3984
    %v3986 = vtanh.pop %v3975
    %v3987 = vsub.f32 %v3986, %v3872
    %3989 = vrot.lane.b32.xlu0 %v3987, 64
    %v3990 = vpop.permute.xlu0 %3989
    %v3992 = vmul.f32 %v3985, %v3990
    %v3993 = vadd.f32 %v3780, %v3992
    %v3994 = vld [vmem:[#allocation7] sm:$0xff]
    %v3995 = vld [vmem:[#allocation7 + $0x10] sm:$0xff]
    %v3996 = vld [vmem:[#allocation7 + $0x20] sm:$0xff]
    %v3997 = vld [vmem:[#allocation7 + $0x30] sm:$0xff]
    %v3998 = vld [vmem:[#allocation7 + $0x40] sm:$0xff]
    %v3999 = vld [vmem:[#allocation7 + $0x50] sm:$0xff]
    %v4000 = vld [vmem:[#allocation7 + $0x60] sm:$0xff]
    %v4001 = vld [vmem:[#allocation7 + $0x70] sm:$0xff]
    %v4002 = vpack.c.bf16 %v3993, %v3993
    %v4011 = vunpack.c.l.b16 %v3994
    %v4012 = vunpack.c.h.b16 %v3994
    %v4013 = vunpack.c.l.b16 %v3995
    %v4014 = vunpack.c.h.b16 %v3995
    %v4015 = vunpack.c.l.b16 %v3996
    %v4016 = vunpack.c.h.b16 %v3996
    %v4017 = vunpack.c.l.b16 %v3997
    %v4018 = vunpack.c.h.b16 %v3997
    %v4019 = vunpack.c.l.b16 %v3998
    %v4020 = vunpack.c.h.b16 %v3998
    %v4021 = vunpack.c.l.b16 %v3999
    %v4022 = vunpack.c.h.b16 %v3999
    %v4023 = vunpack.c.l.b16 %v4000
    %v4024 = vunpack.c.h.b16 %v4000
    %v4025 = vunpack.c.l.b16 %v4001
    %v4026 = vunpack.c.h.b16 %v4001
    %v4027 = vpack.c.b16 %v4013, %v4011
    %v4028 = vpack.c.b16 %v4014, %v4012
    %v4029 = vpack.c.b16 %v4017, %v4015
    %v4030 = vpack.c.b16 %v4018, %v4016
    %v4031 = vpack.c.b16 %v4021, %v4019
    %v4032 = vpack.c.b16 %v4022, %v4020
    %v4033 = vpack.c.b16 %v4025, %v4023
    %v4034 = vpack.c.b16 %v4026, %v4024
    %v4044 = vsel %vm158, %v4002, 0
    %4046 = vmatprep.subr.bf16.mxu0 %v4028
    %4047 = vmatpush1.bf16.msra.mxu0 %v4027
    %4048 = vmatprep.subr.bf16.mxu0 %v4030
    %4049 = vmatpush1.bf16.msra.mxu0 %v4029
    %4050 = vmatprep.subr.bf16.mxu0 %v4032
    %4051 = vmatpush1.bf16.msra.mxu0 %v4031
    %4052 = vmatprep.subr.bf16.mxu0 %v4034
    %4053 = vmatpush1.bf16.msra.mxu0 %v4033
    %4054 = vmatprep.subr.bf16.mxu0 0
    %4055 = vmatpush1.bf16.msra.mxu0 0
    %4056 = vmatprep.subr.bf16.mxu0 0
    %4057 = vmatpush1.bf16.msra.mxu0 0
    %4058 = vmatprep.subr.bf16.mxu0 0
    %4059 = vmatpush1.bf16.msra.mxu0 0
    %4060 = vmatprep.subr.bf16.mxu0 0
    %4061 = vmatpush1.bf16.msra.mxu0 0
    %4062 = vmatprep.subr.bf16.mxu0 0
    %4063 = vmatpush1.bf16.msra.mxu0 0
    %4064 = vmatprep.subr.bf16.mxu0 0
    %4065 = vmatpush1.bf16.msra.mxu0 0
    %4066 = vmatprep.subr.bf16.mxu0 0
    %4067 = vmatpush1.bf16.msra.mxu0 0
    %4068 = vmatprep.subr.bf16.mxu0 0
    %4069 = vmatpush1.bf16.msra.mxu0 0
    %4070 = vmatprep.subr.bf16.mxu0 0
    %4071 = vmatpush1.bf16.msra.mxu0 0
    %4072 = vmatprep.subr.bf16.mxu0 0
    %4073 = vmatpush1.bf16.msra.mxu0 0
    %4074 = vmatprep.subr.bf16.mxu0 0
    %4075 = vmatpush1.bf16.msra.mxu0 0
    %4076 = vmatprep.subr.bf16.mxu0 0
    %4077 = vmatpush1.bf16.msra.mxu0 0
    %4078 = vmatprep.mubr.bf16.mxu0 0
    %4079 = vmatmul.mubr.bf16.gmra.mrb[0].mxu0 %v4044
    %v4080 = vpop.f32.mrb[0].mxu0
    %v4081 = vadd.f32 0.0, %v4080
    %v4082 = vpop.f32.mrb[0].mxu0
    %v4083 = vadd.f32 0.0, %v4082
    %v4084 = vpop.f32.mrb[0].mxu0
    %v4085 = vpop.f32.mrb[0].mxu0
    %4086 = vdwg.mxu0
    %v4087 = vxor.u32 %v4081, 2147483648
    %v4088 = vmul.f32 %v4087, 1.442695
    %v4089 = vpow.pop %v4088
    %v4090 = vadd.f32 %v4089, 1.0
    %v4091 = vrcp.pop %v4090
    %v4092 = vmul.f32 1.0, %v4091
    %v4093 = vtanh.pop %v4083
    %v4094 = vsub.f32 %v4093, %v3993
    %v4095 = vmul.f32 %v4092, %v4094
    %v4096 = vadd.f32 %v3993, %v4095
    %v4097 = vmax.f32 %v4083, 0.0
    %4099 = vrot.lane.b32.xlu0 %v3993, 64
    %v4100 = vpop.permute.xlu0 %4099
    %v4102 = vsub.f32 %v4097, %v4100
    %v4103 = vmul.f32 %v4092, %v4102
    %4105 = vrot.lane.b32.xlu0 %v4103, 64
    %v4106 = vpop.permute.xlu0 %4105
    %v4108 = vadd.f32 %v3993, %v4106
    %v4109 = vld [vmem:[#allocation7 + $0x8] sm:$0xf]
    %v4110 = vld [vmem:[#allocation7 + $0x18] sm:$0xf]
    %v4111 = vld [vmem:[#allocation7 + $0x28] sm:$0xf]
    %v4112 = vld [vmem:[#allocation7 + $0x38] sm:$0xf]
    %v4113 = vld [vmem:[#allocation7 + $0x48] sm:$0xf]
    %v4114 = vld [vmem:[#allocation7 + $0x58] sm:$0xf]
    %v4115 = vld [vmem:[#allocation7 + $0x68] sm:$0xf]
    %v4116 = vld [vmem:[#allocation7 + $0x78] sm:$0xf]
    %v4117 = vpack.c.bf16 %v4096, %v4096
    %v4126 = vunpack.c.l.b16 %v4109
    %v4127 = vunpack.c.l.b16 %v4110
    %v4128 = vunpack.c.l.b16 %v4111
    %v4129 = vunpack.c.l.b16 %v4112
    %v4130 = vunpack.c.l.b16 %v4113
    %v4131 = vunpack.c.l.b16 %v4114
    %v4132 = vunpack.c.l.b16 %v4115
    %v4133 = vunpack.c.l.b16 %v4116
    %v4134 = vpack.c.b16 %v4127, %v4126
    %v4135 = vpack.c.b16 %v4129, %v4128
    %v4136 = vpack.c.b16 %v4131, %v4130
    %v4137 = vpack.c.b16 %v4133, %v4132
    %v4143 = vsel %vm158, %v4117, 0
    %4145 = vmatprep.subr.bf16.mxu0 0
    %4146 = vmatpush1.bf16.msra.mxu0 %v4134
    %4147 = vmatprep.subr.bf16.mxu0 0
    %4148 = vmatpush1.bf16.msra.mxu0 %v4135
    %4149 = vmatprep.subr.bf16.mxu0 0
    %4150 = vmatpush1.bf16.msra.mxu0 %v4136
    %4151 = vmatprep.subr.bf16.mxu0 0
    %4152 = vmatpush1.bf16.msra.mxu0 %v4137
    %4153 = vmatprep.subr.bf16.mxu0 0
    %4154 = vmatpush1.bf16.msra.mxu0 0
    %4155 = vmatprep.subr.bf16.mxu0 0
    %4156 = vmatpush1.bf16.msra.mxu0 0
    %4157 = vmatprep.subr.bf16.mxu0 0
    %4158 = vmatpush1.bf16.msra.mxu0 0
    %4159 = vmatprep.subr.bf16.mxu0 0
    %4160 = vmatpush1.bf16.msra.mxu0 0
    %4161 = vmatprep.subr.bf16.mxu0 0
    %4162 = vmatpush1.bf16.msra.mxu0 0
    %4163 = vmatprep.subr.bf16.mxu0 0
    %4164 = vmatpush1.bf16.msra.mxu0 0
    %4165 = vmatprep.subr.bf16.mxu0 0
    %4166 = vmatpush1.bf16.msra.mxu0 0
    %4167 = vmatprep.subr.bf16.mxu0 0
    %4168 = vmatpush1.bf16.msra.mxu0 0
    %4169 = vmatprep.subr.bf16.mxu0 0
    %4170 = vmatpush1.bf16.msra.mxu0 0
    %4171 = vmatprep.subr.bf16.mxu0 0
    %4172 = vmatpush1.bf16.msra.mxu0 0
    %4173 = vmatprep.subr.bf16.mxu0 0
    %4174 = vmatpush1.bf16.msra.mxu0 0
    %4175 = vmatprep.subr.bf16.mxu0 0
    %4176 = vmatpush1.bf16.msra.mxu0 0
    %4177 = vmatprep.mubr.bf16.mxu0 0
    %4178 = vmatmul.mubr.bf16.gmra.mrb[0].mxu0 %v4143
    %v4179 = vpop.f32.mrb[0].mxu0
    %v4180 = vadd.f32 0.0, %v4179
    %v4181 = vpop.f32.mrb[0].mxu0
    %v4182 = vpop.f32.mrb[0].mxu0
    %v4183 = vpop.f32.mrb[0].mxu0
    %4184 = vdwg.mxu0
    %v4185 = vxor.u32 %v4180, 2147483648
    %v4186 = vmul.f32 %v4185, 1.442695
    %v4187 = vpow.pop %v4186
    %v4188 = vadd.f32 %v4187, 1.0
    %v4189 = vrcp.pop %v4188
    %v4190 = vmul.f32 1.0, %v4189
    %4192 = vrot.lane.b32.xlu0 %v4096, 64
    %v4193 = vpop.permute.xlu0 %4192
    %v4195 = vsub.f32 %v4190, %v4193
    %4197 = vrot.lane.b32.xlu0 %v4195, 64
    %v4198 = vpop.permute.xlu0 %4197
    %v4200 = vmul.f32 %v4190, %v4198
    %v4201 = vadd.f32 %v4096, %v4200
    %v4202 = vld [vmem:[#allocation7 + $0xc] sm:$0xf]
    %v4203 = vld [vmem:[#allocation7 + $0x1c] sm:$0xf]
    %v4204 = vld [vmem:[#allocation7 + $0x2c] sm:$0xf]
    %v4205 = vld [vmem:[#allocation7 + $0x3c] sm:$0xf]
    %v4206 = vld [vmem:[#allocation7 + $0x4c] sm:$0xf]
    %v4207 = vld [vmem:[#allocation7 + $0x5c] sm:$0xf]
    %v4208 = vld [vmem:[#allocation7 + $0x6c] sm:$0xf]
    %v4209 = vld [vmem:[#allocation7 + $0x7c] sm:$0xf]
    %v4210 = vpack.c.bf16 %v4108, %v4108
    %v4219 = vunpack.c.l.b16 %v4202
    %v4220 = vunpack.c.l.b16 %v4203
    %v4221 = vunpack.c.l.b16 %v4204
    %v4222 = vunpack.c.l.b16 %v4205
    %v4223 = vunpack.c.l.b16 %v4206
    %v4224 = vunpack.c.l.b16 %v4207
    %v4225 = vunpack.c.l.b16 %v4208
    %v4226 = vunpack.c.l.b16 %v4209
    %v4227 = vpack.c.b16 %v4220, %v4219
    %v4228 = vpack.c.b16 %v4222, %v4221
    %v4229 = vpack.c.b16 %v4224, %v4223
    %v4230 = vpack.c.b16 %v4226, %v4225
    %v4236 = vsel %vm158, %v4210, 0
    %4238 = vmatprep.subr.bf16.mxu0 0
    %4239 = vmatpush1.bf16.msra.mxu0 %v4227
    %4240 = vmatprep.subr.bf16.mxu0 0
    %4241 = vmatpush1.bf16.msra.mxu0 %v4228
    %4242 = vmatprep.subr.bf16.mxu0 0
    %4243 = vmatpush1.bf16.msra.mxu0 %v4229
    %4244 = vmatprep.subr.bf16.mxu0 0
    %4245 = vmatpush1.bf16.msra.mxu0 %v4230
    %4246 = vmatprep.subr.bf16.mxu0 0
    %4247 = vmatpush1.bf16.msra.mxu0 0
    %4248 = vmatprep.subr.bf16.mxu0 0
    %4249 = vmatpush1.bf16.msra.mxu0 0
    %4250 = vmatprep.subr.bf16.mxu0 0
    %4251 = vmatpush1.bf16.msra.mxu0 0
    %4252 = vmatprep.subr.bf16.mxu0 0
    %4253 = vmatpush1.bf16.msra.mxu0 0
    %4254 = vmatprep.subr.bf16.mxu0 0
    %4255 = vmatpush1.bf16.msra.mxu0 0
    %4256 = vmatprep.subr.bf16.mxu0 0
    %4257 = vmatpush1.bf16.msra.mxu0 0
    %4258 = vmatprep.subr.bf16.mxu0 0
    %4259 = vmatpush1.bf16.msra.mxu0 0
    %4260 = vmatprep.subr.bf16.mxu0 0
    %4261 = vmatpush1.bf16.msra.mxu0 0
    %4262 = vmatprep.subr.bf16.mxu0 0
    %4263 = vmatpush1.bf16.msra.mxu0 0
    %4264 = vmatprep.subr.bf16.mxu0 0
    %4265 = vmatpush1.bf16.msra.mxu0 0
    %4266 = vmatprep.subr.bf16.mxu0 0
    %4267 = vmatpush1.bf16.msra.mxu0 0
    %4268 = vmatprep.subr.bf16.mxu0 0
    %4269 = vmatpush1.bf16.msra.mxu0 0
    %4270 = vmatprep.mubr.bf16.mxu0 0
    %4271 = vmatmul.mubr.bf16.gmra.mrb[0].mxu0 %v4236
    %v4272 = vpop.f32.mrb[0].mxu0
    %v4273 = vadd.f32 0.0, %v4272
    %v4274 = vpop.f32.mrb[0].mxu0
    %v4275 = vpop.f32.mrb[0].mxu0
    %v4276 = vpop.f32.mrb[0].mxu0
    %4277 = vdwg.mxu0
    %v4278 = vxor.u32 %v4273, 2147483648
    %v4279 = vmul.f32 %v4278, 1.442695
    %v4280 = vpow.pop %v4279
    %v4281 = vadd.f32 %v4280, 1.0
    %v4282 = vrcp.pop %v4281
    %v4283 = vmul.f32 1.0, %v4282
    %4285 = vrot.lane.b32.xlu0 %v4108, 64
    %v4286 = vpop.permute.xlu0 %4285
    %v4288 = vsub.f32 %v4273, %v4286
    %4290 = vrot.lane.b32.xlu0 %v4288, 64
    %v4291 = vpop.permute.xlu0 %4290
    %v4293 = vmul.f32 %v4283, %v4291
    %v4294 = vadd.f32 %v4108, %v4293
    %v4295 = vadd.f32 %v4096, %v4108
    %v4296 = vadd.f32 %v4295, %v4201
    %v4297 = vadd.f32 %v4296, %v4294
    %v4298 = vmul.f32 %v4297, 0.25
    %v4299 = vpack.c.bf16 %v4298, %v4298
    %v4300 = vld [vmem:[#allocation5] sm:$0xf]
    %v4301 = vld [vmem:[#allocation5 + $0x4] sm:$0xf]
    %v4302 = vld [vmem:[#allocation5 + $0x8] sm:$0xf]
    %v4303 = vld [vmem:[#allocation5 + $0xc] sm:$0xf]
    %v4304 = vld [vmem:[#allocation5 + $0x10] sm:$0xf]
    %v4305 = vld [vmem:[#allocation5 + $0x14] sm:$0xf]
    %v4306 = vld [vmem:[#allocation5 + $0x18] sm:$0xf]
    %v4307 = vld [vmem:[#allocation5 + $0x1c] sm:$0xf]
    %v4316 = vunpack.c.l.b16 %v4300
    %v4317 = vunpack.c.l.b16 %v4301
    %v4318 = vunpack.c.l.b16 %v4302
    %v4319 = vunpack.c.l.b16 %v4303
    %v4320 = vunpack.c.l.b16 %v4304
    %v4321 = vunpack.c.l.b16 %v4305
    %v4322 = vunpack.c.l.b16 %v4306
    %v4323 = vunpack.c.l.b16 %v4307
    %v4324 = vpack.c.b16 %v4317, %v4316
    %v4325 = vpack.c.b16 %v4319, %v4318
    %v4326 = vpack.c.b16 %v4321, %v4320
    %v4327 = vpack.c.b16 %v4323, %v4322
    %v4333 = vsel %vm158, %v4299, 0
    %4335 = vmatprep.subr.bf16.mxu0 0
    %4336 = vmatpush1.bf16.msra.mxu0 %v4324
    %4337 = vmatprep.subr.bf16.mxu0 0
    %4338 = vmatpush1.bf16.msra.mxu0 %v4325
    %4339 = vmatprep.subr.bf16.mxu0 0
    %4340 = vmatpush1.bf16.msra.mxu0 %v4326
    %4341 = vmatprep.subr.bf16.mxu0 0
    %4342 = vmatpush1.bf16.msra.mxu0 %v4327
    %4343 = vmatprep.subr.bf16.mxu0 0
    %4344 = vmatpush1.bf16.msra.mxu0 0
    %4345 = vmatprep.subr.bf16.mxu0 0
    %4346 = vmatpush1.bf16.msra.mxu0 0
    %4347 = vmatprep.subr.bf16.mxu0 0
    %4348 = vmatpush1.bf16.msra.mxu0 0
    %4349 = vmatprep.subr.bf16.mxu0 0
    %4350 = vmatpush1.bf16.msra.mxu0 0
    %4351 = vmatprep.subr.bf16.mxu0 0
    %4352 = vmatpush1.bf16.msra.mxu0 0
    %4353 = vmatprep.subr.bf16.mxu0 0
    %4354 = vmatpush1.bf16.msra.mxu0 0
    %4355 = vmatprep.subr.bf16.mxu0 0
    %4356 = vmatpush1.bf16.msra.mxu0 0
    %4357 = vmatprep.subr.bf16.mxu0 0
    %4358 = vmatpush1.bf16.msra.mxu0 0
    %4359 = vmatprep.subr.bf16.mxu0 0
    %4360 = vmatpush1.bf16.msra.mxu0 0
    %4361 = vmatprep.subr.bf16.mxu0 0
    %4362 = vmatpush1.bf16.msra.mxu0 0
    %4363 = vmatprep.subr.bf16.mxu0 0
    %4364 = vmatpush1.bf16.msra.mxu0 0
    %4365 = vmatprep.subr.bf16.mxu0 0
    %4366 = vmatpush1.bf16.msra.mxu0 0
    %4367 = vmatprep.mubr.bf16.mxu0 0
    %4368 = vmatmul.mubr.bf16.gmra.mrb[0].mxu0 %v4333
    %v4369 = vpop.f32.mrb[0].mxu0
    %v4370 = vadd.f32 %v680, %v4369
    %v4371 = vpop.f32.mrb[0].mxu0
    %v4372 = vpop.f32.mrb[0].mxu0
    %v4373 = vpop.f32.mrb[0].mxu0
    %4374 = vdwg.mxu0
    %v4375 = vsel %vm158, %v4370, -inf
    %4376 = vmax.xlane.f32.xlu0 %v4375
    %v4377 = vpop.xlane.xlu0 %4376
    %v4378 = vsub.f32 %v4370, %v4377
    %v4379 = vmul.f32 %v4378, 1.442695
    %v4380 = vpow.pop %v4379
    %v4381 = vsel %vm158, %v4380, 0.0
    %4382 = vadd.xlane.f32.xlu0 %v4381
    %v4383 = vpop.xlane.xlu0 %4382
    %v4384 = vlog2.pop %v4383
    %v4385 = vmul.f32 %v4384, 0.6931472
    %v4386 = vsub.f32 %v4378, %v4385
    %4387 = vst.msk [vmem:[#allocation8 + $0x38] sm:$0xff] %vm158, %v4386
    %4388 = vst.msk [vmem:[#allocation9] sm:$0xff] %vm158, %v4298
    // Predicated region
    $region42: #{rnn_model_forward.1} parent=1 // pred_check
      _
    $region43: #{rnn_model_forward.1} parent=1 // pred_check_branch
      %4390 = sbr.rel (0) target = $region45
    $region44: #{rnn_model_forward.1} parent=1 // pred_region
      %s4392 = ssub.s32 1024, 1024
      %4393 = vsyncadd [#allocation4], %s4392
      %s4394 = sshll.u32 [#allocation8], 4
      %s4395 = int_to_ptr.vmem [resolvable:$true] %s4394
      %4400 = dma.vmem_to_hbm [thread:$0]  %s4395, 1024, %s7, [#allocation4], 128, 128, 8
    $region45: #{rnn_model_forward.1} parent=1 // pred_fallthru
      _
    // Predicated region
    $region46: #{rnn_model_forward.1} parent=1 // pred_check
      _
    $region47: #{rnn_model_forward.1} parent=1 // pred_check_branch
      %4402 = sbr.rel (0) target = $region49
    $region48: #{rnn_model_forward.1} parent=1 // pred_region
      %s4404 = ssub.s32 128, 128
      %4405 = vsyncadd [#allocation10], %s4404
      %s4407 = sshll.u32 [#allocation9], 4
      %s4408 = int_to_ptr.vmem [resolvable:$true] %s4407
      %4410 = dma.vmem_to_hbm [thread:$0]  %s4408, 128, %s8, [#allocation10]
    $region49: #{rnn_model_forward.1} parent=1 // pred_fallthru
      _
    // Predicated region
    $region50: #{rnn_model_forward.1} parent=1 // pred_check
      _
    $region51: #{rnn_model_forward.1} parent=1 // pred_check_branch
      %4412 = sbr.rel (0) target = $region53
    $region52: #{rnn_model_forward.1} parent=1 // pred_region
      %4413 = dma.done [#allocation4], 1024
    $region53: #{rnn_model_forward.1} parent=1 // pred_fallthru
      _
    // Predicated region
    $region54: #{rnn_model_forward.1} parent=1 // pred_check
      _
    $region55: #{rnn_model_forward.1} parent=1 // pred_check_branch
      %4415 = sbr.rel (0) target = $region57
    $region56: #{rnn_model_forward.1} parent=1 // pred_region
      %4416 = dma.done [#allocation10], 128
    $region57: #{rnn_model_forward.1} parent=1 // pred_fallthru
      _
    %4417 = vsyncpa [#allocation3], 1
    %4418 = vsyncpa [#allocation6], 1
    %4419 = vsyncpa [#allocation4], 1
    %4420 = vsyncpa [#allocation10], 1

</llo_original>
